<compile_context>
chip_gen: v7x
topology: tpu7x:2x2x1
jax: 0.10.0
libtpu: 0.0.40
codegen_flags: <defaults>
</compile_context>

<pallas_src>
import functools
import math

import jax
import jax.numpy as jnp
from jax.experimental import pallas as pl
from jax.experimental.pallas import tpu as pltpu


# ----------------------------------------------------------------------------
# Fused kernel: per-scale (maxpool -> dilated 3x3 conv -> ReLU) + fused
# (proj + all 1x1 convs) matmul + residual add + final ReLU, for B batch
# elements per grid step.
# ----------------------------------------------------------------------------
def _resid_ms_block_kernel(x_ref, colid_ref, w1_ref, b1_ref, wcat_ref,
                           b2_ref, o_ref,
                           fpad_ref, hbuf_ref, src_ref, col_ref, cat_ref,
                           *, scales, has_proj, H, W, B):
    nin = x_ref.shape[1]
    HW = H * W
    S = max(scales)
    P = S - 1
    Ho = H - 2 * S
    HoW = Ho * W
    nsc = len(scales)
    ng = w1_ref.shape[1]
    neg_inf = jnp.float32(-jnp.inf)

    # Largest single pooling increment (pools are composed across scales).
    max_delta, prev_p = 0, 0
    for s in scales:
        p = s - 1
        if p > prev_p:
            max_delta = max(max_delta, p - prev_p)
            prev_p = p
    need_pool = prev_p > 0

    # ---- hoisted row-edge masks for the horizontal max (built once, reused
    # for every scale / batch element / dx occurrence). -----------------------
    col_id = colid_ref[...]                               # (1, H*W) int32
    mask_r = {dx: jnp.broadcast_to(col_id < (W - dx), (nin, HW))
              for dx in range(1, max_delta + 1)}
    mask_l = {dx: jnp.broadcast_to(col_id >= dx, (nin, HW))
              for dx in range(1, max_delta + 1)}

    # ---- per-step (re)init of the tiny static regions only ------------------
    if need_pool:
        fpad_ref[:, :P * W] = jnp.full((nin, P * W), neg_inf, jnp.float32)
        fpad_ref[:, P * W + HW:] = jnp.full((nin, P * W), neg_inf, jnp.float32)
        # hbuf_ref slack needs no init: every read of it is masked out below.
    # zero tail: only the largest scale's last taps read it, and only for
    # lanes that end up in cropped garbage columns -- just keep it finite.
    src_ref[:, HW:] = jnp.zeros((nin, 2 * S), src_ref.dtype)

    # ------------------------------------------------------------------------
    # Pooling chains (composed across scales) + im2col, per batch element.
    # ------------------------------------------------------------------------
    for b in range(B):
        if has_proj:
            # center-cropped input, staged bf16 for the fused proj matmul.
            cat_ref[nsc * ng:nsc * ng + nin, b * HoW:(b + 1) * HoW] = (
                x_ref[b, :, S * W + S:S * W + S + HoW].astype(cat_ref.dtype))

        if need_pool:
            fpad_ref[:, P * W:P * W + HW] = x_ref[b]

        cur_p = 0
        pooled = None
        for si, s in enumerate(scales):
            p = s - 1
            if p > cur_p:
                delta = p - cur_p
                if cur_p > 0:
                    # compose: stage previous pooled map, widen its window.
                    fpad_ref[:, P * W:P * W + HW] = pooled
                # vertical max over +-delta rows: whole-row flat shifts.
                vmax = fpad_ref[:, (P - delta) * W:(P - delta) * W + HW]
                for dy in range(1, 2 * delta + 1):
                    lo = (P - delta + dy) * W
                    vmax = jnp.maximum(vmax, fpad_ref[:, lo:lo + HW])
                # horizontal max over +-delta cols, masked at row edges.
                hbuf_ref[:, P:P + HW] = vmax
                pooled = vmax
                for dx in range(1, delta + 1):
                    rgt = jnp.where(mask_r[dx],
                                    hbuf_ref[:, P + dx:P + dx + HW], neg_inf)
                    lft = jnp.where(mask_l[dx],
                                    hbuf_ref[:, P - dx:P - dx + HW], neg_inf)
                    pooled = jnp.maximum(pooled, jnp.maximum(rgt, lft))
                cur_p = p

            # ---- im2col: 9 contiguous lane slices per scale (bf16) ----------
            off = S - s                   # folds the residual center-crop
            direct = (p == 0 and s < S)   # unpooled taps stay inside H*W
            if not direct:
                src_ref[:, :HW] = (x_ref[b] if p == 0 else pooled
                                   ).astype(src_ref.dtype)
            for ky in range(3):
                for kx in range(3):
                    tap = ky * 3 + kx
                    st = (off + ky * s) * W + (off + kx * s)
                    if direct:
                        col_ref[si, tap * nin:(tap + 1) * nin,
                                b * HoW:(b + 1) * HoW] = (
                            x_ref[b, :, st:st + HoW].astype(col_ref.dtype))
                    else:
                        col_ref[si, tap * nin:(tap + 1) * nin,
                                b * HoW:(b + 1) * HoW] = src_ref[:, st:st + HoW]

    # ------------------------------------------------------------------------
    # MXU: one K=9*nin matmul per scale (dilated 3x3 conv), bias+ReLU, staged
    # bf16; then ONE fused matmul for all 1x1 convs (+ the projection).
    # ------------------------------------------------------------------------
    for si in range(nsc):
        a = jnp.dot(w1_ref[si], col_ref[si],
                    preferred_element_type=jnp.float32)        # (ng, B*HoW)
        a = jnp.maximum(a + b1_ref[si], 0.0)                   # bias + ReLU f32
        cat_ref[si * ng:(si + 1) * ng, :] = a.astype(cat_ref.dtype)

    z = jnp.dot(wcat_ref[...], cat_ref[...],
                preferred_element_type=jnp.float32) + b2_ref[...]

    for b in range(B):
        zb = z[:, b * HoW:(b + 1) * HoW]
        if not has_proj:                                       # identity resid
            zb = zb + x_ref[b, :, S * W + S:S * W + S + HoW]
        o_ref[b] = jnp.maximum(zb, 0.0)                        # final ReLU


# ----------------------------------------------------------------------------
# Wrapper
# ----------------------------------------------------------------------------
def resid_multiscale_block(params, x, *, scales=(1, 2, 4), padding=False,
                           batch_block=None):
    """ResidMultiScaleBlock forward.  x: (N, nin, H, W) NCHW -> NCHW."""
    assert not padding  # TODO(synk): padding=True (same-size output) variant.
    scales = tuple(int(s) for s in scales)
    assert scales[0] >= 1
    assert all(b > a for a, b in zip(scales, scales[1:]))
    n, nin, H, W = x.shape
    S = max(scales)
    P = S - 1
    Ho, Wo = H - 2 * S, W - 2 * S
    assert Ho > 0 and Wo > 0
    HoW = Ho * W
    # Static in-bounds guarantee: for s < max(scales) the folded-crop im2col
    # tap slices must stay inside the H*W source (real data, not the tail).
    for s in scales[:-1]:
        assert S + s <= (S - s) * W, (s, S, W)

    nsc = len(scales)
    ng = params['w1'][0].shape[0]
    nout = params['w2'][0].shape[0]
    has_proj = params['proj_w'] is not None
    assert has_proj or nout == nin

    # Batch elements per grid step: widen the matmul N dim toward >=256 lanes
    # while keeping >=2 grid steps (both v7x TensorCores busy) when possible.
    if batch_block is None:
        batch_block = 1
        while (n % (2 * batch_block) == 0 and n // (2 * batch_block) >= 2
               and batch_block * HoW < 256):
            batch_block *= 2
    B = int(batch_block)
    assert n % B == 0

    # Dense 2-D weights, bf16 for the MXU.  conv1 (ng,nin,3,3) -> (ng, 9*nin)
    # with rows in (ky, kx, cin) order to match the im2col rows.
    w1 = jnp.stack([w.transpose(0, 2, 3, 1).reshape(ng, 9 * nin)
                    for w in params['w1']]).astype(jnp.bfloat16)
    b1 = jnp.stack([b.reshape(ng, 1) for b in params['b1']]).astype(jnp.float32)
    # Fused 1x1 stage: concat(w2_0 | ... | w2_last [| w_proj]), summed biases.
    wcat_parts = [w.reshape(nout, ng) for w in params['w2']]
    if has_proj:
        wcat_parts.append(params['proj_w'].reshape(nout, nin))
    wcat = jnp.concatenate(wcat_parts, axis=1).astype(jnp.bfloat16)
    kcat = nsc * ng + (nin if has_proj else 0)
    b2sum = jnp.sum(jnp.stack([b.reshape(nout, 1) for b in params['b2']]),
                    axis=0).astype(jnp.float32)

    x_flat = x.reshape(n, nin, H * W).astype(jnp.float32)
    col_id = (jnp.arange(H * W, dtype=jnp.int32) % W).reshape(1, H * W)

    kernel = functools.partial(_resid_ms_block_kernel, scales=scales,
                               has_proj=has_proj, H=H, W=W, B=B)

    out = pl.pallas_call(
        kernel,
        out_shape=jax.ShapeDtypeStruct((n, nout, HoW), jnp.float32),
        grid=(n // B,),
        in_specs=[
            pl.BlockSpec((B, nin, H * W), lambda g: (g, 0, 0)),     # x
            pl.BlockSpec((1, H * W), lambda g: (0, 0)),             # col ids
            pl.BlockSpec((nsc, ng, 9 * nin), lambda g: (0, 0, 0)),  # conv1 W
            pl.BlockSpec((nsc, ng, 1), lambda g: (0, 0, 0)),        # conv1 b
            pl.BlockSpec((nout, kcat), lambda g: (0, 0)),           # fused 1x1 W
            pl.BlockSpec((nout, 1), lambda g: (0, 0)),              # summed b2
        ],
        out_specs=pl.BlockSpec((B, nout, HoW), lambda g: (g, 0, 0)),
        scratch_shapes=[
            pltpu.VMEM((nin, (H + 2 * P) * W), jnp.float32),    # -inf row pad
            pltpu.VMEM((nin, H * W + 2 * P), jnp.float32),      # horiz shifts
            pltpu.VMEM((nin, H * W + 2 * S), jnp.bfloat16),     # branch source
            pltpu.VMEM((nsc, 9 * nin, B * HoW), jnp.bfloat16),  # im2col
            pltpu.VMEM((kcat, B * HoW), jnp.bfloat16),          # fused-K stage
        ],
        compiler_params=pltpu.CompilerParams(
            dimension_semantics=("parallel",)),
    )(x_flat, col_id, w1, b1, wcat, b2sum)

    # Drop the 2*S garbage columns per output row (the kernel computes W
    # columns per row so each im2col tap is one contiguous lane slice).
    # TODO(synk): for large images fuse this crop into the consumer instead.
    return out.reshape(n, nout, Ho, W)[:, :, :, :Wo]


# ----------------------------------------------------------------------------
# Parameters (PyTorch layout) and pure-JAX reference
# ----------------------------------------------------------------------------
def init_params(key, nin, ng, nout, scales=(1, 2, 4)):
    def conv_init(k, cout, cin, kh, kw, bias=True):
        kw_, kb_ = jax.random.split(k)
        bound = 1.0 / math.sqrt(cin * kh * kw)
        w = jax.random.uniform(kw_, (cout, cin, kh, kw), jnp.float32,
                               -bound, bound)
        b = (jax.random.uniform(kb_, (cout,), jnp.float32, -bound, bound)
             if bias else None)
        return w, b

    keys = iter(jax.random.split(key, 2 * len(scales) + 1))
    w1, b1, w2, b2 = [], [], [], []
    for _ in scales:
        w, b = conv_init(next(keys), ng, nin, 3, 3)
        w1.append(w); b1.append(b)
        w, b = conv_init(next(keys), nout, ng, 1, 1)
        w2.append(w); b2.append(b)
    proj_w = None
    if nout != nin:
        proj_w, _ = conv_init(next(keys), nout, nin, 1, 1, bias=False)
    return {'w1': w1, 'b1': b1, 'w2': w2, 'b2': b2, 'proj_w': proj_w}


def ref_forward(params, x, scales=(1, 2, 4)):
    """Pure-JAX (XLA, f32) reference of ResidMultiScaleBlock.forward."""
    def conv(v, w, b, dil):
        y = jax.lax.conv_general_dilated(
            v, w, window_strides=(1, 1), padding='VALID',
            rhs_dilation=(dil, dil),
            dimension_numbers=('NCHW', 'OIHW', 'NCHW'))
        return y if b is None else y + b[None, :, None, None]

    def maxpool(v, k, p):
        return jax.lax.reduce_window(
            v, -jnp.inf, jax.lax.max, (1, 1, k, k), (1, 1, 1, 1),
            ((0, 0), (0, 0), (p, p), (p, p)))

    h = x if params['proj_w'] is None else conv(x, params['proj_w'], None, 1)
    for si, s in enumerate(scales):
        z = x
        if s > 1:
            z = maxpool(z, 2 * (s - 1) + 1, s - 1)
        z = jnp.maximum(conv(z, params['w1'][si], params['b1'][si], s), 0.0)
        z = conv(z, params['w2'][si], params['b2'][si], 1)
        if h.shape[2] > z.shape[2]:
            c = (h.shape[2] - z.shape[2]) // 2
            h = h[:, :, c:-c]
        if h.shape[3] > z.shape[3]:
            c = (h.shape[3] - z.shape[3]) // 2
            h = h[:, :, :, c:-c]
        h = h + z
    return jnp.maximum(h, 0.0)


# ----------------------------------------------------------------------------
if __name__ == "__main__":
    nin, ng, nout = 4, 8, 8
    scales = (1, 2, 4)
    N, H, W = 4, 16, 16

    key = jax.random.PRNGKey(0)
    pkey, xkey = jax.random.split(key)
    params = init_params(pkey, nin, ng, nout, scales)
    x = jax.random.normal(xkey, (N, nin, H, W), jnp.float32)

    fwd = jax.jit(functools.partial(resid_multiscale_block, scales=scales))
    out = jax.block_until_ready(fwd(params, x))

    S = max(scales)
    assert out.shape == (N, nout, H - 2 * S, W - 2 * S), out.shape
    assert out.dtype == jnp.float32
    assert bool(jnp.all(jnp.isfinite(out)))
    assert bool(jnp.all(out >= 0.0))          # final ReLU

    ref = ref_forward(params, x, scales)
    err = float(jnp.max(jnp.abs(out - ref) / (1.0 + jnp.abs(ref))))
    assert err < 1e-1, f"mismatch vs f32 reference: {err}"  # bf16 MXU inputs
    print("KERNEL_OK")
</pallas_src>

<mosaic_0001>
module attributes {stable_mosaic.version = 11 : i64} {
  func.func @_resid_ms_block_kernel(%arg0: i32, %arg1: memref<2x4x256xf32, #tpu.memory_space<vmem>>, %arg2: memref<1x256xi32, #tpu.memory_space<vmem>>, %arg3: memref<3x8x36xbf16, #tpu.memory_space<vmem>>, %arg4: memref<3x8x1xf32, #tpu.memory_space<vmem>>, %arg5: memref<8x28xbf16, #tpu.memory_space<vmem>>, %arg6: memref<8x1xf32, #tpu.memory_space<vmem>>, %arg7: memref<2x8x128xf32, #tpu.memory_space<vmem>>, %arg8: memref<4x352xf32, #tpu.memory_space<vmem>>, %arg9: memref<4x262xf32, #tpu.memory_space<vmem>>, %arg10: memref<4x264xbf16, #tpu.memory_space<vmem>>, %arg11: memref<3x36x256xbf16, #tpu.memory_space<vmem>>, %arg12: memref<28x256xbf16, #tpu.memory_space<vmem>>) attributes {dimension_semantics = [#tpu.dimension_semantics<parallel>], iteration_bounds = array<i64: 2>, scalar_prefetch = 0 : i64, scratch_operands = 5 : i64, tpu.core_type = #tpu.core_type<tc>, window_params = [{transform_indices = @transform_0, window_bounds = array<i64: 2, 4, 256>}, {pipeline_mode = #tpu.pipeline_mode<synchronous>, transform_indices = @transform_1, window_bounds = array<i64: 1, 256>}, {pipeline_mode = #tpu.pipeline_mode<synchronous>, transform_indices = @transform_2, window_bounds = array<i64: 3, 8, 36>}, {pipeline_mode = #tpu.pipeline_mode<synchronous>, transform_indices = @transform_3, window_bounds = array<i64: 3, 8, 1>}, {pipeline_mode = #tpu.pipeline_mode<synchronous>, transform_indices = @transform_4, window_bounds = array<i64: 8, 28>}, {pipeline_mode = #tpu.pipeline_mode<synchronous>, transform_indices = @transform_5, window_bounds = array<i64: 8, 1>}, {transform_indices = @transform_6, window_bounds = array<i64: 2, 8, 128>}]} {
    %c0 = arith.constant 0 : index
    %c0_0 = arith.constant 0 : index
    %0 = vector.load %arg2[%c0, %c0_0] : memref<1x256xi32, #tpu.memory_space<vmem>>, vector<1x256xi32>
    %c15_i32 = arith.constant 15 : i32
    %1 = vector.broadcast %c15_i32 : i32 to vector<1x256xi32>
    %2 = arith.cmpi slt, %0, %1 : vector<1x256xi32>
    %3 = vector.shape_cast %2 : vector<1x256xi1> to vector<1x256xi1>
    %4 = vector.broadcast %3 : vector<1x256xi1> to vector<4x256xi1>
    %c14_i32 = arith.constant 14 : i32
    %5 = vector.broadcast %c14_i32 : i32 to vector<1x256xi32>
    %6 = arith.cmpi slt, %0, %5 : vector<1x256xi32>
    %7 = vector.shape_cast %6 : vector<1x256xi1> to vector<1x256xi1>
    %8 = vector.broadcast %7 : vector<1x256xi1> to vector<4x256xi1>
    %c1_i32 = arith.constant 1 : i32
    %9 = vector.broadcast %c1_i32 : i32 to vector<1x256xi32>
    %10 = arith.cmpi sge, %0, %9 : vector<1x256xi32>
    %11 = vector.shape_cast %10 : vector<1x256xi1> to vector<1x256xi1>
    %12 = vector.broadcast %11 : vector<1x256xi1> to vector<4x256xi1>
    %c2_i32 = arith.constant 2 : i32
    %13 = vector.broadcast %c2_i32 : i32 to vector<1x256xi32>
    %14 = arith.cmpi sge, %0, %13 : vector<1x256xi32>
    %15 = vector.shape_cast %14 : vector<1x256xi1> to vector<1x256xi1>
    %16 = vector.broadcast %15 : vector<1x256xi1> to vector<4x256xi1>
    %cst = arith.constant 0xFF800000 : f32
    %17 = vector.broadcast %cst : f32 to vector<4x48xf32>
    %c0_1 = arith.constant 0 : index
    %c0_2 = arith.constant 0 : index
    %18 = vector.load %arg8[%c0_1, %c0_2] : memref<4x352xf32, #tpu.memory_space<vmem>>, vector<4x48xf32>
    tpu.vector_store %arg8[%c0_1, %c0_2], %17 {strides = array<i32>} : memref<4x352xf32, #tpu.memory_space<vmem>>, vector<4x48xf32>,
    %cst_3 = arith.constant 0xFF800000 : f32
    %19 = vector.broadcast %cst_3 : f32 to vector<4x48xf32>
    %c0_4 = arith.constant 0 : index
    %c304 = arith.constant 304 : index
    %20 = vector.load %arg8[%c0_4, %c304] : memref<4x352xf32, #tpu.memory_space<vmem>>, vector<4x48xf32>
    tpu.vector_store %arg8[%c0_4, %c304], %19 {strides = array<i32>} : memref<4x352xf32, #tpu.memory_space<vmem>>, vector<4x48xf32>,
    %cst_5 = arith.constant 0.000000e+00 : bf16
    %21 = vector.broadcast %cst_5 : bf16 to vector<4x8xbf16>
    %c0_6 = arith.constant 0 : index
    %c256 = arith.constant 256 : index
    %22 = vector.load %arg10[%c0_6, %c256] : memref<4x264xbf16, #tpu.memory_space<vmem>>, vector<4x8xbf16>
    tpu.vector_store %arg10[%c0_6, %c256], %21 {strides = array<i32>} : memref<4x264xbf16, #tpu.memory_space<vmem>>, vector<4x8xbf16>,
    %c0_7 = arith.constant 0 : index
    %c0_8 = arith.constant 0 : index
    %c68 = arith.constant 68 : index
    %23 = vector.load %arg1[%c0_7, %c0_8, %c68] : memref<2x4x256xf32, #tpu.memory_space<vmem>>, vector<1x4x128xf32>
    %24 = vector.shape_cast %23 : vector<1x4x128xf32> to vector<4x128xf32>
    %25 = arith.truncf %24 : vector<4x128xf32> to vector<4x128xbf16>
    %c24 = arith.constant 24 : index
    %c0_9 = arith.constant 0 : index
    %26 = vector.load %arg12[%c24, %c0_9] : memref<28x256xbf16, #tpu.memory_space<vmem>>, vector<4x128xbf16>
    tpu.vector_store %arg12[%c24, %c0_9], %25 {strides = array<i32>} : memref<28x256xbf16, #tpu.memory_space<vmem>>, vector<4x128xbf16>,
    %c0_10 = arith.constant 0 : index
    %c0_11 = arith.constant 0 : index
    %c0_12 = arith.constant 0 : index
    %27 = vector.load %arg1[%c0_10, %c0_11, %c0_12] : memref<2x4x256xf32, #tpu.memory_space<vmem>>, vector<1x4x256xf32>
    %28 = vector.shape_cast %27 : vector<1x4x256xf32> to vector<4x256xf32>
    %c0_13 = arith.constant 0 : index
    %c48 = arith.constant 48 : index
    %29 = vector.load %arg8[%c0_13, %c48] : memref<4x352xf32, #tpu.memory_space<vmem>>, vector<4x256xf32>
    tpu.vector_store %arg8[%c0_13, %c48], %28 {strides = array<i32>} : memref<4x352xf32, #tpu.memory_space<vmem>>, vector<4x256xf32>,
    %c0_14 = arith.constant 0 : index
    %c0_15 = arith.constant 0 : index
    %c51 = arith.constant 51 : index
    %30 = vector.load %arg1[%c0_14, %c0_15, %c51] : memref<2x4x256xf32, #tpu.memory_space<vmem>>, vector<1x4x128xf32>
    %31 = vector.shape_cast %30 : vector<1x4x128xf32> to vector<4x128xf32>
    %32 = arith.truncf %31 : vector<4x128xf32> to vector<4x128xbf16>
    %c0_16 = arith.constant 0 : index
    %c0_17 = arith.constant 0 : index
    %c0_18 = arith.constant 0 : index
    %33 = vector.load %arg11[%c0_16, %c0_17, %c0_18] : memref<3x36x256xbf16, #tpu.memory_space<vmem>>, vector<1x4x128xbf16>
    %34 = vector.shape_cast %33 : vector<1x4x128xbf16> to vector<4x128xbf16>
    %35 = vector.shape_cast %32 : vector<4x128xbf16> to vector<1x4x128xbf16>
    tpu.vector_store %arg11[%c0_16, %c0_17, %c0_18], %35 {strides = array<i32>} : memref<3x36x256xbf16, #tpu.memory_space<vmem>>, vector<1x4x128xbf16>,
    %c0_19 = arith.constant 0 : index
    %c0_20 = arith.constant 0 : index
    %c52 = arith.constant 52 : index
    %36 = vector.load %arg1[%c0_19, %c0_20, %c52] : memref<2x4x256xf32, #tpu.memory_space<vmem>>, vector<1x4x128xf32>
    %37 = vector.shape_cast %36 : vector<1x4x128xf32> to vector<4x128xf32>
    %38 = arith.truncf %37 : vector<4x128xf32> to vector<4x128xbf16>
    %c0_21 = arith.constant 0 : index
    %c4 = arith.constant 4 : index
    %c0_22 = arith.constant 0 : index
    %39 = vector.load %arg11[%c0_21, %c4, %c0_22] : memref<3x36x256xbf16, #tpu.memory_space<vmem>>, vector<1x4x128xbf16>
    %40 = vector.shape_cast %39 : vector<1x4x128xbf16> to vector<4x128xbf16>
    %41 = vector.shape_cast %38 : vector<4x128xbf16> to vector<1x4x128xbf16>
    tpu.vector_store %arg11[%c0_21, %c4, %c0_22], %41 {strides = array<i32>} : memref<3x36x256xbf16, #tpu.memory_space<vmem>>, vector<1x4x128xbf16>,
    %c0_23 = arith.constant 0 : index
    %c0_24 = arith.constant 0 : index
    %c53 = arith.constant 53 : index
    %42 = vector.load %arg1[%c0_23, %c0_24, %c53] : memref<2x4x256xf32, #tpu.memory_space<vmem>>, vector<1x4x128xf32>
    %43 = vector.shape_cast %42 : vector<1x4x128xf32> to vector<4x128xf32>
    %44 = arith.truncf %43 : vector<4x128xf32> to vector<4x128xbf16>
    %c0_25 = arith.constant 0 : index
    %c8 = arith.constant 8 : index
    %c0_26 = arith.constant 0 : index
    %45 = vector.load %arg11[%c0_25, %c8, %c0_26] : memref<3x36x256xbf16, #tpu.memory_space<vmem>>, vector<1x4x128xbf16>
    %46 = vector.shape_cast %45 : vector<1x4x128xbf16> to vector<4x128xbf16>
    %47 = vector.shape_cast %44 : vector<4x128xbf16> to vector<1x4x128xbf16>
    tpu.vector_store %arg11[%c0_25, %c8, %c0_26], %47 {strides = array<i32>} : memref<3x36x256xbf16, #tpu.memory_space<vmem>>, vector<1x4x128xbf16>,
    %c0_27 = arith.constant 0 : index
    %c0_28 = arith.constant 0 : index
    %c67 = arith.constant 67 : index
    %48 = vector.load %arg1[%c0_27, %c0_28, %c67] : memref<2x4x256xf32, #tpu.memory_space<vmem>>, vector<1x4x128xf32>
    %49 = vector.shape_cast %48 : vector<1x4x128xf32> to vector<4x128xf32>
    %50 = arith.truncf %49 : vector<4x128xf32> to vector<4x128xbf16>
    %c0_29 = arith.constant 0 : index
    %c12 = arith.constant 12 : index
    %c0_30 = arith.constant 0 : index
    %51 = vector.load %arg11[%c0_29, %c12, %c0_30] : memref<3x36x256xbf16, #tpu.memory_space<vmem>>, vector<1x4x128xbf16>
    %52 = vector.shape_cast %51 : vector<1x4x128xbf16> to vector<4x128xbf16>
    %53 = vector.shape_cast %50 : vector<4x128xbf16> to vector<1x4x128xbf16>
    tpu.vector_store %arg11[%c0_29, %c12, %c0_30], %53 {strides = array<i32>} : memref<3x36x256xbf16, #tpu.memory_space<vmem>>, vector<1x4x128xbf16>,
    %c0_31 = arith.constant 0 : index
    %c0_32 = arith.constant 0 : index
    %c68_33 = arith.constant 68 : index
    %54 = vector.load %arg1[%c0_31, %c0_32, %c68_33] : memref<2x4x256xf32, #tpu.memory_space<vmem>>, vector<1x4x128xf32>
    %55 = vector.shape_cast %54 : vector<1x4x128xf32> to vector<4x128xf32>
    %56 = arith.truncf %55 : vector<4x128xf32> to vector<4x128xbf16>
    %c0_34 = arith.constant 0 : index
    %c16 = arith.constant 16 : index
    %c0_35 = arith.constant 0 : index
    %57 = vector.load %arg11[%c0_34, %c16, %c0_35] : memref<3x36x256xbf16, #tpu.memory_space<vmem>>, vector<1x4x128xbf16>
    %58 = vector.shape_cast %57 : vector<1x4x128xbf16> to vector<4x128xbf16>
    %59 = vector.shape_cast %56 : vector<4x128xbf16> to vector<1x4x128xbf16>
    tpu.vector_store %arg11[%c0_34, %c16, %c0_35], %59 {strides = array<i32>} : memref<3x36x256xbf16, #tpu.memory_space<vmem>>, vector<1x4x128xbf16>,
    %c0_36 = arith.constant 0 : index
    %c0_37 = arith.constant 0 : index
    %c69 = arith.constant 69 : index
    %60 = vector.load %arg1[%c0_36, %c0_37, %c69] : memref<2x4x256xf32, #tpu.memory_space<vmem>>, vector<1x4x128xf32>
    %61 = vector.shape_cast %60 : vector<1x4x128xf32> to vector<4x128xf32>
    %62 = arith.truncf %61 : vector<4x128xf32> to vector<4x128xbf16>
    %c0_38 = arith.constant 0 : index
    %c20 = arith.constant 20 : index
    %c0_39 = arith.constant 0 : index
    %63 = vector.load %arg11[%c0_38, %c20, %c0_39] : memref<3x36x256xbf16, #tpu.memory_space<vmem>>, vector<1x4x128xbf16>
    %64 = vector.shape_cast %63 : vector<1x4x128xbf16> to vector<4x128xbf16>
    %65 = vector.shape_cast %62 : vector<4x128xbf16> to vector<1x4x128xbf16>
    tpu.vector_store %arg11[%c0_38, %c20, %c0_39], %65 {strides = array<i32>} : memref<3x36x256xbf16, #tpu.memory_space<vmem>>, vector<1x4x128xbf16>,
    %c0_40 = arith.constant 0 : index
    %c0_41 = arith.constant 0 : index
    %c83 = arith.constant 83 : index
    %66 = vector.load %arg1[%c0_40, %c0_41, %c83] : memref<2x4x256xf32, #tpu.memory_space<vmem>>, vector<1x4x128xf32>
    %67 = vector.shape_cast %66 : vector<1x4x128xf32> to vector<4x128xf32>
    %68 = arith.truncf %67 : vector<4x128xf32> to vector<4x128xbf16>
    %c0_42 = arith.constant 0 : index
    %c24_43 = arith.constant 24 : index
    %c0_44 = arith.constant 0 : index
    %69 = vector.load %arg11[%c0_42, %c24_43, %c0_44] : memref<3x36x256xbf16, #tpu.memory_space<vmem>>, vector<1x4x128xbf16>
    %70 = vector.shape_cast %69 : vector<1x4x128xbf16> to vector<4x128xbf16>
    %71 = vector.shape_cast %68 : vector<4x128xbf16> to vector<1x4x128xbf16>
    tpu.vector_store %arg11[%c0_42, %c24_43, %c0_44], %71 {strides = array<i32>} : memref<3x36x256xbf16, #tpu.memory_space<vmem>>, vector<1x4x128xbf16>,
    %c0_45 = arith.constant 0 : index
    %c0_46 = arith.constant 0 : index
    %c84 = arith.constant 84 : index
    %72 = vector.load %arg1[%c0_45, %c0_46, %c84] : memref<2x4x256xf32, #tpu.memory_space<vmem>>, vector<1x4x128xf32>
    %73 = vector.shape_cast %72 : vector<1x4x128xf32> to vector<4x128xf32>
    %74 = arith.truncf %73 : vector<4x128xf32> to vector<4x128xbf16>
    %c0_47 = arith.constant 0 : index
    %c28 = arith.constant 28 : index
    %c0_48 = arith.constant 0 : index
    %75 = vector.load %arg11[%c0_47, %c28, %c0_48] : memref<3x36x256xbf16, #tpu.memory_space<vmem>>, vector<1x4x128xbf16>
    %76 = vector.shape_cast %75 : vector<1x4x128xbf16> to vector<4x128xbf16>
    %77 = vector.shape_cast %74 : vector<4x128xbf16> to vector<1x4x128xbf16>
    tpu.vector_store %arg11[%c0_47, %c28, %c0_48], %77 {strides = array<i32>} : memref<3x36x256xbf16, #tpu.memory_space<vmem>>, vector<1x4x128xbf16>,
    %c0_49 = arith.constant 0 : index
    %c0_50 = arith.constant 0 : index
    %c85 = arith.constant 85 : index
    %78 = vector.load %arg1[%c0_49, %c0_50, %c85] : memref<2x4x256xf32, #tpu.memory_space<vmem>>, vector<1x4x128xf32>
    %79 = vector.shape_cast %78 : vector<1x4x128xf32> to vector<4x128xf32>
    %80 = arith.truncf %79 : vector<4x128xf32> to vector<4x128xbf16>
    %c0_51 = arith.constant 0 : index
    %c32 = arith.constant 32 : index
    %c0_52 = arith.constant 0 : index
    %81 = vector.load %arg11[%c0_51, %c32, %c0_52] : memref<3x36x256xbf16, #tpu.memory_space<vmem>>, vector<1x4x128xbf16>
    %82 = vector.shape_cast %81 : vector<1x4x128xbf16> to vector<4x128xbf16>
    %83 = vector.shape_cast %80 : vector<4x128xbf16> to vector<1x4x128xbf16>
    tpu.vector_store %arg11[%c0_51, %c32, %c0_52], %83 {strides = array<i32>} : memref<3x36x256xbf16, #tpu.memory_space<vmem>>, vector<1x4x128xbf16>,
    %c0_53 = arith.constant 0 : index
    %c32_54 = arith.constant 32 : index
    %84 = vector.load %arg8[%c0_53, %c32_54] : memref<4x352xf32, #tpu.memory_space<vmem>>, vector<4x256xf32>
    %c0_55 = arith.constant 0 : index
    %c48_56 = arith.constant 48 : index
    %85 = vector.load %arg8[%c0_55, %c48_56] : memref<4x352xf32, #tpu.memory_space<vmem>>, vector<4x256xf32>
    %86 = arith.maximumf %84, %85 : vector<4x256xf32>
    %c0_57 = arith.constant 0 : index
    %c64 = arith.constant 64 : index
    %87 = vector.load %arg8[%c0_57, %c64] : memref<4x352xf32, #tpu.memory_space<vmem>>, vector<4x256xf32>
    %88 = arith.maximumf %86, %87 : vector<4x256xf32>
    %c0_58 = arith.constant 0 : index
    %c3 = arith.constant 3 : index
    %89 = vector.load %arg9[%c0_58, %c3] : memref<4x262xf32, #tpu.memory_space<vmem>>, vector<4x256xf32>
    tpu.vector_store %arg9[%c0_58, %c3], %88 {strides = array<i32>} : memref<4x262xf32, #tpu.memory_space<vmem>>, vector<4x256xf32>,
    %c0_59 = arith.constant 0 : index
    %c4_60 = arith.constant 4 : index
    %90 = vector.load %arg9[%c0_59, %c4_60] : memref<4x262xf32, #tpu.memory_space<vmem>>, vector<4x256xf32>
    %cst_61 = arith.constant 0xFF800000 : f32
    %91 = vector.broadcast %cst_61 : f32 to vector<4x256xf32>
    %92 = arith.select %4, %90, %91 : vector<4x256xi1>, vector<4x256xf32>
    %c0_62 = arith.constant 0 : index
    %c2 = arith.constant 2 : index
    %93 = vector.load %arg9[%c0_62, %c2] : memref<4x262xf32, #tpu.memory_space<vmem>>, vector<4x256xf32>
    %cst_63 = arith.constant 0xFF800000 : f32
    %94 = vector.broadcast %cst_63 : f32 to vector<4x256xf32>
    %95 = arith.select %12, %93, %94 : vector<4x256xi1>, vector<4x256xf32>
    %96 = arith.maximumf %92, %95 : vector<4x256xf32>
    %97 = arith.maximumf %88, %96 : vector<4x256xf32>
    %98 = arith.truncf %97 : vector<4x256xf32> to vector<4x256xbf16>
    %c0_64 = arith.constant 0 : index
    %c0_65 = arith.constant 0 : index
    %99 = vector.load %arg10[%c0_64, %c0_65] : memref<4x264xbf16, #tpu.memory_space<vmem>>, vector<4x256xbf16>
    tpu.vector_store %arg10[%c0_64, %c0_65], %98 {strides = array<i32>} : memref<4x264xbf16, #tpu.memory_space<vmem>>, vector<4x256xbf16>,
    %c0_66 = arith.constant 0 : index
    %c34 = arith.constant 34 : index
    %100 = vector.load %arg10[%c0_66, %c34] : memref<4x264xbf16, #tpu.memory_space<vmem>>, vector<4x128xbf16>
    %c1 = arith.constant 1 : index
    %c0_67 = arith.constant 0 : index
    %c0_68 = arith.constant 0 : index
    %101 = vector.load %arg11[%c1, %c0_67, %c0_68] : memref<3x36x256xbf16, #tpu.memory_space<vmem>>, vector<1x4x128xbf16>
    %102 = vector.shape_cast %101 : vector<1x4x128xbf16> to vector<4x128xbf16>
    %103 = vector.shape_cast %100 : vector<4x128xbf16> to vector<1x4x128xbf16>
    tpu.vector_store %arg11[%c1, %c0_67, %c0_68], %103 {strides = array<i32>} : memref<3x36x256xbf16, #tpu.memory_space<vmem>>, vector<1x4x128xbf16>,
    %c0_69 = arith.constant 0 : index
    %c36 = arith.constant 36 : index
    %104 = vector.load %arg10[%c0_69, %c36] : memref<4x264xbf16, #tpu.memory_space<vmem>>, vector<4x128xbf16>
    %c1_70 = arith.constant 1 : index
    %c4_71 = arith.constant 4 : index
    %c0_72 = arith.constant 0 : index
    %105 = vector.load %arg11[%c1_70, %c4_71, %c0_72] : memref<3x36x256xbf16, #tpu.memory_space<vmem>>, vector<1x4x128xbf16>
    %106 = vector.shape_cast %105 : vector<1x4x128xbf16> to vector<4x128xbf16>
    %107 = vector.shape_cast %104 : vector<4x128xbf16> to vector<1x4x128xbf16>
    tpu.vector_store %arg11[%c1_70, %c4_71, %c0_72], %107 {strides = array<i32>} : memref<3x36x256xbf16, #tpu.memory_space<vmem>>, vector<1x4x128xbf16>,
    %c0_73 = arith.constant 0 : index
    %c38 = arith.constant 38 : index
    %108 = vector.load %arg10[%c0_73, %c38] : memref<4x264xbf16, #tpu.memory_space<vmem>>, vector<4x128xbf16>
    %c1_74 = arith.constant 1 : index
    %c8_75 = arith.constant 8 : index
    %c0_76 = arith.constant 0 : index
    %109 = vector.load %arg11[%c1_74, %c8_75, %c0_76] : memref<3x36x256xbf16, #tpu.memory_space<vmem>>, vector<1x4x128xbf16>
    %110 = vector.shape_cast %109 : vector<1x4x128xbf16> to vector<4x128xbf16>
    %111 = vector.shape_cast %108 : vector<4x128xbf16> to vector<1x4x128xbf16>
    tpu.vector_store %arg11[%c1_74, %c8_75, %c0_76], %111 {strides = array<i32>} : memref<3x36x256xbf16, #tpu.memory_space<vmem>>, vector<1x4x128xbf16>,
    %c0_77 = arith.constant 0 : index
    %c66 = arith.constant 66 : index
    %112 = vector.load %arg10[%c0_77, %c66] : memref<4x264xbf16, #tpu.memory_space<vmem>>, vector<4x128xbf16>
    %c1_78 = arith.constant 1 : index
    %c12_79 = arith.constant 12 : index
    %c0_80 = arith.constant 0 : index
    %113 = vector.load %arg11[%c1_78, %c12_79, %c0_80] : memref<3x36x256xbf16, #tpu.memory_space<vmem>>, vector<1x4x128xbf16>
    %114 = vector.shape_cast %113 : vector<1x4x128xbf16> to vector<4x128xbf16>
    %115 = vector.shape_cast %112 : vector<4x128xbf16> to vector<1x4x128xbf16>
    tpu.vector_store %arg11[%c1_78, %c12_79, %c0_80], %115 {strides = array<i32>} : memref<3x36x256xbf16, #tpu.memory_space<vmem>>, vector<1x4x128xbf16>,
    %c0_81 = arith.constant 0 : index
    %c68_82 = arith.constant 68 : index
    %116 = vector.load %arg10[%c0_81, %c68_82] : memref<4x264xbf16, #tpu.memory_space<vmem>>, vector<4x128xbf16>
    %c1_83 = arith.constant 1 : index
    %c16_84 = arith.constant 16 : index
    %c0_85 = arith.constant 0 : index
    %117 = vector.load %arg11[%c1_83, %c16_84, %c0_85] : memref<3x36x256xbf16, #tpu.memory_space<vmem>>, vector<1x4x128xbf16>
    %118 = vector.shape_cast %117 : vector<1x4x128xbf16> to vector<4x128xbf16>
    %119 = vector.shape_cast %116 : vector<4x128xbf16> to vector<1x4x128xbf16>
    tpu.vector_store %arg11[%c1_83, %c16_84, %c0_85], %119 {strides = array<i32>} : memref<3x36x256xbf16, #tpu.memory_space<vmem>>, vector<1x4x128xbf16>,
    %c0_86 = arith.constant 0 : index
    %c70 = arith.constant 70 : index
    %120 = vector.load %arg10[%c0_86, %c70] : memref<4x264xbf16, #tpu.memory_space<vmem>>, vector<4x128xbf16>
    %c1_87 = arith.constant 1 : index
    %c20_88 = arith.constant 20 : index
    %c0_89 = arith.constant 0 : index
    %121 = vector.load %arg11[%c1_87, %c20_88, %c0_89] : memref<3x36x256xbf16, #tpu.memory_space<vmem>>, vector<1x4x128xbf16>
    %122 = vector.shape_cast %121 : vector<1x4x128xbf16> to vector<4x128xbf16>
    %123 = vector.shape_cast %120 : vector<4x128xbf16> to vector<1x4x128xbf16>
    tpu.vector_store %arg11[%c1_87, %c20_88, %c0_89], %123 {strides = array<i32>} : memref<3x36x256xbf16, #tpu.memory_space<vmem>>, vector<1x4x128xbf16>,
    %c0_90 = arith.constant 0 : index
    %c98 = arith.constant 98 : index
    %124 = vector.load %arg10[%c0_90, %c98] : memref<4x264xbf16, #tpu.memory_space<vmem>>, vector<4x128xbf16>
    %c1_91 = arith.constant 1 : index
    %c24_92 = arith.constant 24 : index
    %c0_93 = arith.constant 0 : index
    %125 = vector.load %arg11[%c1_91, %c24_92, %c0_93] : memref<3x36x256xbf16, #tpu.memory_space<vmem>>, vector<1x4x128xbf16>
    %126 = vector.shape_cast %125 : vector<1x4x128xbf16> to vector<4x128xbf16>
    %127 = vector.shape_cast %124 : vector<4x128xbf16> to vector<1x4x128xbf16>
    tpu.vector_store %arg11[%c1_91, %c24_92, %c0_93], %127 {strides = array<i32>} : memref<3x36x256xbf16, #tpu.memory_space<vmem>>, vector<1x4x128xbf16>,
    %c0_94 = arith.constant 0 : index
    %c100 = arith.constant 100 : index
    %128 = vector.load %arg10[%c0_94, %c100] : memref<4x264xbf16, #tpu.memory_space<vmem>>, vector<4x128xbf16>
    %c1_95 = arith.constant 1 : index
    %c28_96 = arith.constant 28 : index
    %c0_97 = arith.constant 0 : index
    %129 = vector.load %arg11[%c1_95, %c28_96, %c0_97] : memref<3x36x256xbf16, #tpu.memory_space<vmem>>, vector<1x4x128xbf16>
    %130 = vector.shape_cast %129 : vector<1x4x128xbf16> to vector<4x128xbf16>
    %131 = vector.shape_cast %128 : vector<4x128xbf16> to vector<1x4x128xbf16>
    tpu.vector_store %arg11[%c1_95, %c28_96, %c0_97], %131 {strides = array<i32>} : memref<3x36x256xbf16, #tpu.memory_space<vmem>>, vector<1x4x128xbf16>,
    %c0_98 = arith.constant 0 : index
    %c102 = arith.constant 102 : index
    %132 = vector.load %arg10[%c0_98, %c102] : memref<4x264xbf16, #tpu.memory_space<vmem>>, vector<4x128xbf16>
    %c1_99 = arith.constant 1 : index
    %c32_100 = arith.constant 32 : index
    %c0_101 = arith.constant 0 : index
    %133 = vector.load %arg11[%c1_99, %c32_100, %c0_101] : memref<3x36x256xbf16, #tpu.memory_space<vmem>>, vector<1x4x128xbf16>
    %134 = vector.shape_cast %133 : vector<1x4x128xbf16> to vector<4x128xbf16>
    %135 = vector.shape_cast %132 : vector<4x128xbf16> to vector<1x4x128xbf16>
    tpu.vector_store %arg11[%c1_99, %c32_100, %c0_101], %135 {strides = array<i32>} : memref<3x36x256xbf16, #tpu.memory_space<vmem>>, vector<1x4x128xbf16>,
    %c0_102 = arith.constant 0 : index
    %c48_103 = arith.constant 48 : index
    %136 = vector.load %arg8[%c0_102, %c48_103] : memref<4x352xf32, #tpu.memory_space<vmem>>, vector<4x256xf32>
    tpu.vector_store %arg8[%c0_102, %c48_103], %97 {strides = array<i32>} : memref<4x352xf32, #tpu.memory_space<vmem>>, vector<4x256xf32>,
    %c0_104 = arith.constant 0 : index
    %c16_105 = arith.constant 16 : index
    %137 = vector.load %arg8[%c0_104, %c16_105] : memref<4x352xf32, #tpu.memory_space<vmem>>, vector<4x256xf32>
    %c0_106 = arith.constant 0 : index
    %c32_107 = arith.constant 32 : index
    %138 = vector.load %arg8[%c0_106, %c32_107] : memref<4x352xf32, #tpu.memory_space<vmem>>, vector<4x256xf32>
    %139 = arith.maximumf %137, %138 : vector<4x256xf32>
    %c0_108 = arith.constant 0 : index
    %c48_109 = arith.constant 48 : index
    %140 = vector.load %arg8[%c0_108, %c48_109] : memref<4x352xf32, #tpu.memory_space<vmem>>, vector<4x256xf32>
    %141 = arith.maximumf %139, %140 : vector<4x256xf32>
    %c0_110 = arith.constant 0 : index
    %c64_111 = arith.constant 64 : index
    %142 = vector.load %arg8[%c0_110, %c64_111] : memref<4x352xf32, #tpu.memory_space<vmem>>, vector<4x256xf32>
    %143 = arith.maximumf %141, %142 : vector<4x256xf32>
    %c0_112 = arith.constant 0 : index
    %c80 = arith.constant 80 : index
    %144 = vector.load %arg8[%c0_112, %c80] : memref<4x352xf32, #tpu.memory_space<vmem>>, vector<4x256xf32>
    %145 = arith.maximumf %143, %144 : vector<4x256xf32>
    %c0_113 = arith.constant 0 : index
    %c3_114 = arith.constant 3 : index
    %146 = vector.load %arg9[%c0_113, %c3_114] : memref<4x262xf32, #tpu.memory_space<vmem>>, vector<4x256xf32>
    tpu.vector_store %arg9[%c0_113, %c3_114], %145 {strides = array<i32>} : memref<4x262xf32, #tpu.memory_space<vmem>>, vector<4x256xf32>,
    %c0_115 = arith.constant 0 : index
    %c4_116 = arith.constant 4 : index
    %147 = vector.load %arg9[%c0_115, %c4_116] : memref<4x262xf32, #tpu.memory_space<vmem>>, vector<4x256xf32>
    %cst_117 = arith.constant 0xFF800000 : f32
    %148 = vector.broadcast %cst_117 : f32 to vector<4x256xf32>
    %149 = arith.select %4, %147, %148 : vector<4x256xi1>, vector<4x256xf32>
    %c0_118 = arith.constant 0 : index
    %c2_119 = arith.constant 2 : index
    %150 = vector.load %arg9[%c0_118, %c2_119] : memref<4x262xf32, #tpu.memory_space<vmem>>, vector<4x256xf32>
    %cst_120 = arith.constant 0xFF800000 : f32
    %151 = vector.broadcast %cst_120 : f32 to vector<4x256xf32>
    %152 = arith.select %12, %150, %151 : vector<4x256xi1>, vector<4x256xf32>
    %153 = arith.maximumf %149, %152 : vector<4x256xf32>
    %154 = arith.maximumf %145, %153 : vector<4x256xf32>
    %c0_121 = arith.constant 0 : index
    %c5 = arith.constant 5 : index
    %155 = vector.load %arg9[%c0_121, %c5] : memref<4x262xf32, #tpu.memory_space<vmem>>, vector<4x256xf32>
    %cst_122 = arith.constant 0xFF800000 : f32
    %156 = vector.broadcast %cst_122 : f32 to vector<4x256xf32>
    %157 = arith.select %8, %155, %156 : vector<4x256xi1>, vector<4x256xf32>
    %c0_123 = arith.constant 0 : index
    %c1_124 = arith.constant 1 : index
    %158 = vector.load %arg9[%c0_123, %c1_124] : memref<4x262xf32, #tpu.memory_space<vmem>>, vector<4x256xf32>
    %cst_125 = arith.constant 0xFF800000 : f32
    %159 = vector.broadcast %cst_125 : f32 to vector<4x256xf32>
    %160 = arith.select %16, %158, %159 : vector<4x256xi1>, vector<4x256xf32>
    %161 = arith.maximumf %157, %160 : vector<4x256xf32>
    %162 = arith.maximumf %154, %161 : vector<4x256xf32>
    %163 = arith.truncf %162 : vector<4x256xf32> to vector<4x256xbf16>
    %c0_126 = arith.constant 0 : index
    %c0_127 = arith.constant 0 : index
    %164 = vector.load %arg10[%c0_126, %c0_127] : memref<4x264xbf16, #tpu.memory_space<vmem>>, vector<4x256xbf16>
    tpu.vector_store %arg10[%c0_126, %c0_127], %163 {strides = array<i32>} : memref<4x264xbf16, #tpu.memory_space<vmem>>, vector<4x256xbf16>,
    %c0_128 = arith.constant 0 : index
    %c0_129 = arith.constant 0 : index
    %165 = vector.load %arg10[%c0_128, %c0_129] : memref<4x264xbf16, #tpu.memory_space<vmem>>, vector<4x128xbf16>
    %c2_130 = arith.constant 2 : index
    %c0_131 = arith.constant 0 : index
    %c0_132 = arith.constant 0 : index
    %166 = vector.load %arg11[%c2_130, %c0_131, %c0_132] : memref<3x36x256xbf16, #tpu.memory_space<vmem>>, vector<1x4x128xbf16>
    %167 = vector.shape_cast %166 : vector<1x4x128xbf16> to vector<4x128xbf16>
    %168 = vector.shape_cast %165 : vector<4x128xbf16> to vector<1x4x128xbf16>
    tpu.vector_store %arg11[%c2_130, %c0_131, %c0_132], %168 {strides = array<i32>} : memref<3x36x256xbf16, #tpu.memory_space<vmem>>, vector<1x4x128xbf16>,
    %c0_133 = arith.constant 0 : index
    %c4_134 = arith.constant 4 : index
    %169 = vector.load %arg10[%c0_133, %c4_134] : memref<4x264xbf16, #tpu.memory_space<vmem>>, vector<4x128xbf16>
    %c2_135 = arith.constant 2 : index
    %c4_136 = arith.constant 4 : index
    %c0_137 = arith.constant 0 : index
    %170 = vector.load %arg11[%c2_135, %c4_136, %c0_137] : memref<3x36x256xbf16, #tpu.memory_space<vmem>>, vector<1x4x128xbf16>
    %171 = vector.shape_cast %170 : vector<1x4x128xbf16> to vector<4x128xbf16>
    %172 = vector.shape_cast %169 : vector<4x128xbf16> to vector<1x4x128xbf16>
    tpu.vector_store %arg11[%c2_135, %c4_136, %c0_137], %172 {strides = array<i32>} : memref<3x36x256xbf16, #tpu.memory_space<vmem>>, vector<1x4x128xbf16>,
    %c0_138 = arith.constant 0 : index
    %c8_139 = arith.constant 8 : index
    %173 = vector.load %arg10[%c0_138, %c8_139] : memref<4x264xbf16, #tpu.memory_space<vmem>>, vector<4x128xbf16>
    %c2_140 = arith.constant 2 : index
    %c8_141 = arith.constant 8 : index
    %c0_142 = arith.constant 0 : index
    %174 = vector.load %arg11[%c2_140, %c8_141, %c0_142] : memref<3x36x256xbf16, #tpu.memory_space<vmem>>, vector<1x4x128xbf16>
    %175 = vector.shape_cast %174 : vector<1x4x128xbf16> to vector<4x128xbf16>
    %176 = vector.shape_cast %173 : vector<4x128xbf16> to vector<1x4x128xbf16>
    tpu.vector_store %arg11[%c2_140, %c8_141, %c0_142], %176 {strides = array<i32>} : memref<3x36x256xbf16, #tpu.memory_space<vmem>>, vector<1x4x128xbf16>,
    %c0_143 = arith.constant 0 : index
    %c64_144 = arith.constant 64 : index
    %177 = vector.load %arg10[%c0_143, %c64_144] : memref<4x264xbf16, #tpu.memory_space<vmem>>, vector<4x128xbf16>
    %c2_145 = arith.constant 2 : index
    %c12_146 = arith.constant 12 : index
    %c0_147 = arith.constant 0 : index
    %178 = vector.load %arg11[%c2_145, %c12_146, %c0_147] : memref<3x36x256xbf16, #tpu.memory_space<vmem>>, vector<1x4x128xbf16>
    %179 = vector.shape_cast %178 : vector<1x4x128xbf16> to vector<4x128xbf16>
    %180 = vector.shape_cast %177 : vector<4x128xbf16> to vector<1x4x128xbf16>
    tpu.vector_store %arg11[%c2_145, %c12_146, %c0_147], %180 {strides = array<i32>} : memref<3x36x256xbf16, #tpu.memory_space<vmem>>, vector<1x4x128xbf16>,
    %c0_148 = arith.constant 0 : index
    %c68_149 = arith.constant 68 : index
    %181 = vector.load %arg10[%c0_148, %c68_149] : memref<4x264xbf16, #tpu.memory_space<vmem>>, vector<4x128xbf16>
    %c2_150 = arith.constant 2 : index
    %c16_151 = arith.constant 16 : index
    %c0_152 = arith.constant 0 : index
    %182 = vector.load %arg11[%c2_150, %c16_151, %c0_152] : memref<3x36x256xbf16, #tpu.memory_space<vmem>>, vector<1x4x128xbf16>
    %183 = vector.shape_cast %182 : vector<1x4x128xbf16> to vector<4x128xbf16>
    %184 = vector.shape_cast %181 : vector<4x128xbf16> to vector<1x4x128xbf16>
    tpu.vector_store %arg11[%c2_150, %c16_151, %c0_152], %184 {strides = array<i32>} : memref<3x36x256xbf16, #tpu.memory_space<vmem>>, vector<1x4x128xbf16>,
    %c0_153 = arith.constant 0 : index
    %c72 = arith.constant 72 : index
    %185 = vector.load %arg10[%c0_153, %c72] : memref<4x264xbf16, #tpu.memory_space<vmem>>, vector<4x128xbf16>
    %c2_154 = arith.constant 2 : index
    %c20_155 = arith.constant 20 : index
    %c0_156 = arith.constant 0 : index
    %186 = vector.load %arg11[%c2_154, %c20_155, %c0_156] : memref<3x36x256xbf16, #tpu.memory_space<vmem>>, vector<1x4x128xbf16>
    %187 = vector.shape_cast %186 : vector<1x4x128xbf16> to vector<4x128xbf16>
    %188 = vector.shape_cast %185 : vector<4x128xbf16> to vector<1x4x128xbf16>
    tpu.vector_store %arg11[%c2_154, %c20_155, %c0_156], %188 {strides = array<i32>} : memref<3x36x256xbf16, #tpu.memory_space<vmem>>, vector<1x4x128xbf16>,
    %c0_157 = arith.constant 0 : index
    %c128 = arith.constant 128 : index
    %189 = vector.load %arg10[%c0_157, %c128] : memref<4x264xbf16, #tpu.memory_space<vmem>>, vector<4x128xbf16>
    %c2_158 = arith.constant 2 : index
    %c24_159 = arith.constant 24 : index
    %c0_160 = arith.constant 0 : index
    %190 = vector.load %arg11[%c2_158, %c24_159, %c0_160] : memref<3x36x256xbf16, #tpu.memory_space<vmem>>, vector<1x4x128xbf16>
    %191 = vector.shape_cast %190 : vector<1x4x128xbf16> to vector<4x128xbf16>
    %192 = vector.shape_cast %189 : vector<4x128xbf16> to vector<1x4x128xbf16>
    tpu.vector_store %arg11[%c2_158, %c24_159, %c0_160], %192 {strides = array<i32>} : memref<3x36x256xbf16, #tpu.memory_space<vmem>>, vector<1x4x128xbf16>,
    %c0_161 = arith.constant 0 : index
    %c132 = arith.constant 132 : index
    %193 = vector.load %arg10[%c0_161, %c132] : memref<4x264xbf16, #tpu.memory_space<vmem>>, vector<4x128xbf16>
    %c2_162 = arith.constant 2 : index
    %c28_163 = arith.constant 28 : index
    %c0_164 = arith.constant 0 : index
    %194 = vector.load %arg11[%c2_162, %c28_163, %c0_164] : memref<3x36x256xbf16, #tpu.memory_space<vmem>>, vector<1x4x128xbf16>
    %195 = vector.shape_cast %194 : vector<1x4x128xbf16> to vector<4x128xbf16>
    %196 = vector.shape_cast %193 : vector<4x128xbf16> to vector<1x4x128xbf16>
    tpu.vector_store %arg11[%c2_162, %c28_163, %c0_164], %196 {strides = array<i32>} : memref<3x36x256xbf16, #tpu.memory_space<vmem>>, vector<1x4x128xbf16>,
    %c0_165 = arith.constant 0 : index
    %c136 = arith.constant 136 : index
    %197 = vector.load %arg10[%c0_165, %c136] : memref<4x264xbf16, #tpu.memory_space<vmem>>, vector<4x128xbf16>
    %c2_166 = arith.constant 2 : index
    %c32_167 = arith.constant 32 : index
    %c0_168 = arith.constant 0 : index
    %198 = vector.load %arg11[%c2_166, %c32_167, %c0_168] : memref<3x36x256xbf16, #tpu.memory_space<vmem>>, vector<1x4x128xbf16>
    %199 = vector.shape_cast %198 : vector<1x4x128xbf16> to vector<4x128xbf16>
    %200 = vector.shape_cast %197 : vector<4x128xbf16> to vector<1x4x128xbf16>
    tpu.vector_store %arg11[%c2_166, %c32_167, %c0_168], %200 {strides = array<i32>} : memref<3x36x256xbf16, #tpu.memory_space<vmem>>, vector<1x4x128xbf16>,
    %c1_169 = arith.constant 1 : index
    %c0_170 = arith.constant 0 : index
    %c68_171 = arith.constant 68 : index
    %201 = vector.load %arg1[%c1_169, %c0_170, %c68_171] : memref<2x4x256xf32, #tpu.memory_space<vmem>>, vector<1x4x128xf32>
    %202 = vector.shape_cast %201 : vector<1x4x128xf32> to vector<4x128xf32>
    %203 = arith.truncf %202 : vector<4x128xf32> to vector<4x128xbf16>
    %c24_172 = arith.constant 24 : index
    %c128_173 = arith.constant 128 : index
    %204 = vector.load %arg12[%c24_172, %c128_173] : memref<28x256xbf16, #tpu.memory_space<vmem>>, vector<4x128xbf16>
    tpu.vector_store %arg12[%c24_172, %c128_173], %203 {strides = array<i32>} : memref<28x256xbf16, #tpu.memory_space<vmem>>, vector<4x128xbf16>,
    %c1_174 = arith.constant 1 : index
    %c0_175 = arith.constant 0 : index
    %c0_176 = arith.constant 0 : index
    %205 = vector.load %arg1[%c1_174, %c0_175, %c0_176] : memref<2x4x256xf32, #tpu.memory_space<vmem>>, vector<1x4x256xf32>
    %206 = vector.shape_cast %205 : vector<1x4x256xf32> to vector<4x256xf32>
    %c0_177 = arith.constant 0 : index
    %c48_178 = arith.constant 48 : index
    %207 = vector.load %arg8[%c0_177, %c48_178] : memref<4x352xf32, #tpu.memory_space<vmem>>, vector<4x256xf32>
    tpu.vector_store %arg8[%c0_177, %c48_178], %206 {strides = array<i32>} : memref<4x352xf32, #tpu.memory_space<vmem>>, vector<4x256xf32>,
    %c1_179 = arith.constant 1 : index
    %c0_180 = arith.constant 0 : index
    %c51_181 = arith.constant 51 : index
    %208 = vector.load %arg1[%c1_179, %c0_180, %c51_181] : memref<2x4x256xf32, #tpu.memory_space<vmem>>, vector<1x4x128xf32>
    %209 = vector.shape_cast %208 : vector<1x4x128xf32> to vector<4x128xf32>
    %210 = arith.truncf %209 : vector<4x128xf32> to vector<4x128xbf16>
    %c0_182 = arith.constant 0 : index
    %c0_183 = arith.constant 0 : index
    %c128_184 = arith.constant 128 : index
    %211 = vector.load %arg11[%c0_182, %c0_183, %c128_184] : memref<3x36x256xbf16, #tpu.memory_space<vmem>>, vector<1x4x128xbf16>
    %212 = vector.shape_cast %211 : vector<1x4x128xbf16> to vector<4x128xbf16>
    %213 = vector.shape_cast %210 : vector<4x128xbf16> to vector<1x4x128xbf16>
    tpu.vector_store %arg11[%c0_182, %c0_183, %c128_184], %213 {strides = array<i32>} : memref<3x36x256xbf16, #tpu.memory_space<vmem>>, vector<1x4x128xbf16>,
    %c1_185 = arith.constant 1 : index
    %c0_186 = arith.constant 0 : index
    %c52_187 = arith.constant 52 : index
    %214 = vector.load %arg1[%c1_185, %c0_186, %c52_187] : memref<2x4x256xf32, #tpu.memory_space<vmem>>, vector<1x4x128xf32>
    %215 = vector.shape_cast %214 : vector<1x4x128xf32> to vector<4x128xf32>
    %216 = arith.truncf %215 : vector<4x128xf32> to vector<4x128xbf16>
    %c0_188 = arith.constant 0 : index
    %c4_189 = arith.constant 4 : index
    %c128_190 = arith.constant 128 : index
    %217 = vector.load %arg11[%c0_188, %c4_189, %c128_190] : memref<3x36x256xbf16, #tpu.memory_space<vmem>>, vector<1x4x128xbf16>
    %218 = vector.shape_cast %217 : vector<1x4x128xbf16> to vector<4x128xbf16>
    %219 = vector.shape_cast %216 : vector<4x128xbf16> to vector<1x4x128xbf16>
    tpu.vector_store %arg11[%c0_188, %c4_189, %c128_190], %219 {strides = array<i32>} : memref<3x36x256xbf16, #tpu.memory_space<vmem>>, vector<1x4x128xbf16>,
    %c1_191 = arith.constant 1 : index
    %c0_192 = arith.constant 0 : index
    %c53_193 = arith.constant 53 : index
    %220 = vector.load %arg1[%c1_191, %c0_192, %c53_193] : memref<2x4x256xf32, #tpu.memory_space<vmem>>, vector<1x4x128xf32>
    %221 = vector.shape_cast %220 : vector<1x4x128xf32> to vector<4x128xf32>
    %222 = arith.truncf %221 : vector<4x128xf32> to vector<4x128xbf16>
    %c0_194 = arith.constant 0 : index
    %c8_195 = arith.constant 8 : index
    %c128_196 = arith.constant 128 : index
    %223 = vector.load %arg11[%c0_194, %c8_195, %c128_196] : memref<3x36x256xbf16, #tpu.memory_space<vmem>>, vector<1x4x128xbf16>
    %224 = vector.shape_cast %223 : vector<1x4x128xbf16> to vector<4x128xbf16>
    %225 = vector.shape_cast %222 : vector<4x128xbf16> to vector<1x4x128xbf16>
    tpu.vector_store %arg11[%c0_194, %c8_195, %c128_196], %225 {strides = array<i32>} : memref<3x36x256xbf16, #tpu.memory_space<vmem>>, vector<1x4x128xbf16>,
    %c1_197 = arith.constant 1 : index
    %c0_198 = arith.constant 0 : index
    %c67_199 = arith.constant 67 : index
    %226 = vector.load %arg1[%c1_197, %c0_198, %c67_199] : memref<2x4x256xf32, #tpu.memory_space<vmem>>, vector<1x4x128xf32>
    %227 = vector.shape_cast %226 : vector<1x4x128xf32> to vector<4x128xf32>
    %228 = arith.truncf %227 : vector<4x128xf32> to vector<4x128xbf16>
    %c0_200 = arith.constant 0 : index
    %c12_201 = arith.constant 12 : index
    %c128_202 = arith.constant 128 : index
    %229 = vector.load %arg11[%c0_200, %c12_201, %c128_202] : memref<3x36x256xbf16, #tpu.memory_space<vmem>>, vector<1x4x128xbf16>
    %230 = vector.shape_cast %229 : vector<1x4x128xbf16> to vector<4x128xbf16>
    %231 = vector.shape_cast %228 : vector<4x128xbf16> to vector<1x4x128xbf16>
    tpu.vector_store %arg11[%c0_200, %c12_201, %c128_202], %231 {strides = array<i32>} : memref<3x36x256xbf16, #tpu.memory_space<vmem>>, vector<1x4x128xbf16>,
    %c1_203 = arith.constant 1 : index
    %c0_204 = arith.constant 0 : index
    %c68_205 = arith.constant 68 : index
    %232 = vector.load %arg1[%c1_203, %c0_204, %c68_205] : memref<2x4x256xf32, #tpu.memory_space<vmem>>, vector<1x4x128xf32>
    %233 = vector.shape_cast %232 : vector<1x4x128xf32> to vector<4x128xf32>
    %234 = arith.truncf %233 : vector<4x128xf32> to vector<4x128xbf16>
    %c0_206 = arith.constant 0 : index
    %c16_207 = arith.constant 16 : index
    %c128_208 = arith.constant 128 : index
    %235 = vector.load %arg11[%c0_206, %c16_207, %c128_208] : memref<3x36x256xbf16, #tpu.memory_space<vmem>>, vector<1x4x128xbf16>
    %236 = vector.shape_cast %235 : vector<1x4x128xbf16> to vector<4x128xbf16>
    %237 = vector.shape_cast %234 : vector<4x128xbf16> to vector<1x4x128xbf16>
    tpu.vector_store %arg11[%c0_206, %c16_207, %c128_208], %237 {strides = array<i32>} : memref<3x36x256xbf16, #tpu.memory_space<vmem>>, vector<1x4x128xbf16>,
    %c1_209 = arith.constant 1 : index
    %c0_210 = arith.constant 0 : index
    %c69_211 = arith.constant 69 : index
    %238 = vector.load %arg1[%c1_209, %c0_210, %c69_211] : memref<2x4x256xf32, #tpu.memory_space<vmem>>, vector<1x4x128xf32>
    %239 = vector.shape_cast %238 : vector<1x4x128xf32> to vector<4x128xf32>
    %240 = arith.truncf %239 : vector<4x128xf32> to vector<4x128xbf16>
    %c0_212 = arith.constant 0 : index
    %c20_213 = arith.constant 20 : index
    %c128_214 = arith.constant 128 : index
    %241 = vector.load %arg11[%c0_212, %c20_213, %c128_214] : memref<3x36x256xbf16, #tpu.memory_space<vmem>>, vector<1x4x128xbf16>
    %242 = vector.shape_cast %241 : vector<1x4x128xbf16> to vector<4x128xbf16>
    %243 = vector.shape_cast %240 : vector<4x128xbf16> to vector<1x4x128xbf16>
    tpu.vector_store %arg11[%c0_212, %c20_213, %c128_214], %243 {strides = array<i32>} : memref<3x36x256xbf16, #tpu.memory_space<vmem>>, vector<1x4x128xbf16>,
    %c1_215 = arith.constant 1 : index
    %c0_216 = arith.constant 0 : index
    %c83_217 = arith.constant 83 : index
    %244 = vector.load %arg1[%c1_215, %c0_216, %c83_217] : memref<2x4x256xf32, #tpu.memory_space<vmem>>, vector<1x4x128xf32>
    %245 = vector.shape_cast %244 : vector<1x4x128xf32> to vector<4x128xf32>
    %246 = arith.truncf %245 : vector<4x128xf32> to vector<4x128xbf16>
    %c0_218 = arith.constant 0 : index
    %c24_219 = arith.constant 24 : index
    %c128_220 = arith.constant 128 : index
    %247 = vector.load %arg11[%c0_218, %c24_219, %c128_220] : memref<3x36x256xbf16, #tpu.memory_space<vmem>>, vector<1x4x128xbf16>
    %248 = vector.shape_cast %247 : vector<1x4x128xbf16> to vector<4x128xbf16>
    %249 = vector.shape_cast %246 : vector<4x128xbf16> to vector<1x4x128xbf16>
    tpu.vector_store %arg11[%c0_218, %c24_219, %c128_220], %249 {strides = array<i32>} : memref<3x36x256xbf16, #tpu.memory_space<vmem>>, vector<1x4x128xbf16>,
    %c1_221 = arith.constant 1 : index
    %c0_222 = arith.constant 0 : index
    %c84_223 = arith.constant 84 : index
    %250 = vector.load %arg1[%c1_221, %c0_222, %c84_223] : memref<2x4x256xf32, #tpu.memory_space<vmem>>, vector<1x4x128xf32>
    %251 = vector.shape_cast %250 : vector<1x4x128xf32> to vector<4x128xf32>
    %252 = arith.truncf %251 : vector<4x128xf32> to vector<4x128xbf16>
    %c0_224 = arith.constant 0 : index
    %c28_225 = arith.constant 28 : index
    %c128_226 = arith.constant 128 : index
    %253 = vector.load %arg11[%c0_224, %c28_225, %c128_226] : memref<3x36x256xbf16, #tpu.memory_space<vmem>>, vector<1x4x128xbf16>
    %254 = vector.shape_cast %253 : vector<1x4x128xbf16> to vector<4x128xbf16>
    %255 = vector.shape_cast %252 : vector<4x128xbf16> to vector<1x4x128xbf16>
    tpu.vector_store %arg11[%c0_224, %c28_225, %c128_226], %255 {strides = array<i32>} : memref<3x36x256xbf16, #tpu.memory_space<vmem>>, vector<1x4x128xbf16>,
    %c1_227 = arith.constant 1 : index
    %c0_228 = arith.constant 0 : index
    %c85_229 = arith.constant 85 : index
    %256 = vector.load %arg1[%c1_227, %c0_228, %c85_229] : memref<2x4x256xf32, #tpu.memory_space<vmem>>, vector<1x4x128xf32>
    %257 = vector.shape_cast %256 : vector<1x4x128xf32> to vector<4x128xf32>
    %258 = arith.truncf %257 : vector<4x128xf32> to vector<4x128xbf16>
    %c0_230 = arith.constant 0 : index
    %c32_231 = arith.constant 32 : index
    %c128_232 = arith.constant 128 : index
    %259 = vector.load %arg11[%c0_230, %c32_231, %c128_232] : memref<3x36x256xbf16, #tpu.memory_space<vmem>>, vector<1x4x128xbf16>
    %260 = vector.shape_cast %259 : vector<1x4x128xbf16> to vector<4x128xbf16>
    %261 = vector.shape_cast %258 : vector<4x128xbf16> to vector<1x4x128xbf16>
    tpu.vector_store %arg11[%c0_230, %c32_231, %c128_232], %261 {strides = array<i32>} : memref<3x36x256xbf16, #tpu.memory_space<vmem>>, vector<1x4x128xbf16>,
    %c0_233 = arith.constant 0 : index
    %c32_234 = arith.constant 32 : index
    %262 = vector.load %arg8[%c0_233, %c32_234] : memref<4x352xf32, #tpu.memory_space<vmem>>, vector<4x256xf32>
    %c0_235 = arith.constant 0 : index
    %c48_236 = arith.constant 48 : index
    %263 = vector.load %arg8[%c0_235, %c48_236] : memref<4x352xf32, #tpu.memory_space<vmem>>, vector<4x256xf32>
    %264 = arith.maximumf %262, %263 : vector<4x256xf32>
    %c0_237 = arith.constant 0 : index
    %c64_238 = arith.constant 64 : index
    %265 = vector.load %arg8[%c0_237, %c64_238] : memref<4x352xf32, #tpu.memory_space<vmem>>, vector<4x256xf32>
    %266 = arith.maximumf %264, %265 : vector<4x256xf32>
    %c0_239 = arith.constant 0 : index
    %c3_240 = arith.constant 3 : index
    %267 = vector.load %arg9[%c0_239, %c3_240] : memref<4x262xf32, #tpu.memory_space<vmem>>, vector<4x256xf32>
    tpu.vector_store %arg9[%c0_239, %c3_240], %266 {strides = array<i32>} : memref<4x262xf32, #tpu.memory_space<vmem>>, vector<4x256xf32>,
    %c0_241 = arith.constant 0 : index
    %c4_242 = arith.constant 4 : index
    %268 = vector.load %arg9[%c0_241, %c4_242] : memref<4x262xf32, #tpu.memory_space<vmem>>, vector<4x256xf32>
    %cst_243 = arith.constant 0xFF800000 : f32
    %269 = vector.broadcast %cst_243 : f32 to vector<4x256xf32>
    %270 = arith.select %4, %268, %269 : vector<4x256xi1>, vector<4x256xf32>
    %c0_244 = arith.constant 0 : index
    %c2_245 = arith.constant 2 : index
    %271 = vector.load %arg9[%c0_244, %c2_245] : memref<4x262xf32, #tpu.memory_space<vmem>>, vector<4x256xf32>
    %cst_246 = arith.constant 0xFF800000 : f32
    %272 = vector.broadcast %cst_246 : f32 to vector<4x256xf32>
    %273 = arith.select %12, %271, %272 : vector<4x256xi1>, vector<4x256xf32>
    %274 = arith.maximumf %270, %273 : vector<4x256xf32>
    %275 = arith.maximumf %266, %274 : vector<4x256xf32>
    %276 = arith.truncf %275 : vector<4x256xf32> to vector<4x256xbf16>
    %c0_247 = arith.constant 0 : index
    %c0_248 = arith.constant 0 : index
    %277 = vector.load %arg10[%c0_247, %c0_248] : memref<4x264xbf16, #tpu.memory_space<vmem>>, vector<4x256xbf16>
    tpu.vector_store %arg10[%c0_247, %c0_248], %276 {strides = array<i32>} : memref<4x264xbf16, #tpu.memory_space<vmem>>, vector<4x256xbf16>,
    %c0_249 = arith.constant 0 : index
    %c34_250 = arith.constant 34 : index
    %278 = vector.load %arg10[%c0_249, %c34_250] : memref<4x264xbf16, #tpu.memory_space<vmem>>, vector<4x128xbf16>
    %c1_251 = arith.constant 1 : index
    %c0_252 = arith.constant 0 : index
    %c128_253 = arith.constant 128 : index
    %279 = vector.load %arg11[%c1_251, %c0_252, %c128_253] : memref<3x36x256xbf16, #tpu.memory_space<vmem>>, vector<1x4x128xbf16>
    %280 = vector.shape_cast %279 : vector<1x4x128xbf16> to vector<4x128xbf16>
    %281 = vector.shape_cast %278 : vector<4x128xbf16> to vector<1x4x128xbf16>
    tpu.vector_store %arg11[%c1_251, %c0_252, %c128_253], %281 {strides = array<i32>} : memref<3x36x256xbf16, #tpu.memory_space<vmem>>, vector<1x4x128xbf16>,
    %c0_254 = arith.constant 0 : index
    %c36_255 = arith.constant 36 : index
    %282 = vector.load %arg10[%c0_254, %c36_255] : memref<4x264xbf16, #tpu.memory_space<vmem>>, vector<4x128xbf16>
    %c1_256 = arith.constant 1 : index
    %c4_257 = arith.constant 4 : index
    %c128_258 = arith.constant 128 : index
    %283 = vector.load %arg11[%c1_256, %c4_257, %c128_258] : memref<3x36x256xbf16, #tpu.memory_space<vmem>>, vector<1x4x128xbf16>
    %284 = vector.shape_cast %283 : vector<1x4x128xbf16> to vector<4x128xbf16>
    %285 = vector.shape_cast %282 : vector<4x128xbf16> to vector<1x4x128xbf16>
    tpu.vector_store %arg11[%c1_256, %c4_257, %c128_258], %285 {strides = array<i32>} : memref<3x36x256xbf16, #tpu.memory_space<vmem>>, vector<1x4x128xbf16>,
    %c0_259 = arith.constant 0 : index
    %c38_260 = arith.constant 38 : index
    %286 = vector.load %arg10[%c0_259, %c38_260] : memref<4x264xbf16, #tpu.memory_space<vmem>>, vector<4x128xbf16>
    %c1_261 = arith.constant 1 : index
    %c8_262 = arith.constant 8 : index
    %c128_263 = arith.constant 128 : index
    %287 = vector.load %arg11[%c1_261, %c8_262, %c128_263] : memref<3x36x256xbf16, #tpu.memory_space<vmem>>, vector<1x4x128xbf16>
    %288 = vector.shape_cast %287 : vector<1x4x128xbf16> to vector<4x128xbf16>
    %289 = vector.shape_cast %286 : vector<4x128xbf16> to vector<1x4x128xbf16>
    tpu.vector_store %arg11[%c1_261, %c8_262, %c128_263], %289 {strides = array<i32>} : memref<3x36x256xbf16, #tpu.memory_space<vmem>>, vector<1x4x128xbf16>,
    %c0_264 = arith.constant 0 : index
    %c66_265 = arith.constant 66 : index
    %290 = vector.load %arg10[%c0_264, %c66_265] : memref<4x264xbf16, #tpu.memory_space<vmem>>, vector<4x128xbf16>
    %c1_266 = arith.constant 1 : index
    %c12_267 = arith.constant 12 : index
    %c128_268 = arith.constant 128 : index
    %291 = vector.load %arg11[%c1_266, %c12_267, %c128_268] : memref<3x36x256xbf16, #tpu.memory_space<vmem>>, vector<1x4x128xbf16>
    %292 = vector.shape_cast %291 : vector<1x4x128xbf16> to vector<4x128xbf16>
    %293 = vector.shape_cast %290 : vector<4x128xbf16> to vector<1x4x128xbf16>
    tpu.vector_store %arg11[%c1_266, %c12_267, %c128_268], %293 {strides = array<i32>} : memref<3x36x256xbf16, #tpu.memory_space<vmem>>, vector<1x4x128xbf16>,
    %c0_269 = arith.constant 0 : index
    %c68_270 = arith.constant 68 : index
    %294 = vector.load %arg10[%c0_269, %c68_270] : memref<4x264xbf16, #tpu.memory_space<vmem>>, vector<4x128xbf16>
    %c1_271 = arith.constant 1 : index
    %c16_272 = arith.constant 16 : index
    %c128_273 = arith.constant 128 : index
    %295 = vector.load %arg11[%c1_271, %c16_272, %c128_273] : memref<3x36x256xbf16, #tpu.memory_space<vmem>>, vector<1x4x128xbf16>
    %296 = vector.shape_cast %295 : vector<1x4x128xbf16> to vector<4x128xbf16>
    %297 = vector.shape_cast %294 : vector<4x128xbf16> to vector<1x4x128xbf16>
    tpu.vector_store %arg11[%c1_271, %c16_272, %c128_273], %297 {strides = array<i32>} : memref<3x36x256xbf16, #tpu.memory_space<vmem>>, vector<1x4x128xbf16>,
    %c0_274 = arith.constant 0 : index
    %c70_275 = arith.constant 70 : index
    %298 = vector.load %arg10[%c0_274, %c70_275] : memref<4x264xbf16, #tpu.memory_space<vmem>>, vector<4x128xbf16>
    %c1_276 = arith.constant 1 : index
    %c20_277 = arith.constant 20 : index
    %c128_278 = arith.constant 128 : index
    %299 = vector.load %arg11[%c1_276, %c20_277, %c128_278] : memref<3x36x256xbf16, #tpu.memory_space<vmem>>, vector<1x4x128xbf16>
    %300 = vector.shape_cast %299 : vector<1x4x128xbf16> to vector<4x128xbf16>
    %301 = vector.shape_cast %298 : vector<4x128xbf16> to vector<1x4x128xbf16>
    tpu.vector_store %arg11[%c1_276, %c20_277, %c128_278], %301 {strides = array<i32>} : memref<3x36x256xbf16, #tpu.memory_space<vmem>>, vector<1x4x128xbf16>,
    %c0_279 = arith.constant 0 : index
    %c98_280 = arith.constant 98 : index
    %302 = vector.load %arg10[%c0_279, %c98_280] : memref<4x264xbf16, #tpu.memory_space<vmem>>, vector<4x128xbf16>
    %c1_281 = arith.constant 1 : index
    %c24_282 = arith.constant 24 : index
    %c128_283 = arith.constant 128 : index
    %303 = vector.load %arg11[%c1_281, %c24_282, %c128_283] : memref<3x36x256xbf16, #tpu.memory_space<vmem>>, vector<1x4x128xbf16>
    %304 = vector.shape_cast %303 : vector<1x4x128xbf16> to vector<4x128xbf16>
    %305 = vector.shape_cast %302 : vector<4x128xbf16> to vector<1x4x128xbf16>
    tpu.vector_store %arg11[%c1_281, %c24_282, %c128_283], %305 {strides = array<i32>} : memref<3x36x256xbf16, #tpu.memory_space<vmem>>, vector<1x4x128xbf16>,
    %c0_284 = arith.constant 0 : index
    %c100_285 = arith.constant 100 : index
    %306 = vector.load %arg10[%c0_284, %c100_285] : memref<4x264xbf16, #tpu.memory_space<vmem>>, vector<4x128xbf16>
    %c1_286 = arith.constant 1 : index
    %c28_287 = arith.constant 28 : index
    %c128_288 = arith.constant 128 : index
    %307 = vector.load %arg11[%c1_286, %c28_287, %c128_288] : memref<3x36x256xbf16, #tpu.memory_space<vmem>>, vector<1x4x128xbf16>
    %308 = vector.shape_cast %307 : vector<1x4x128xbf16> to vector<4x128xbf16>
    %309 = vector.shape_cast %306 : vector<4x128xbf16> to vector<1x4x128xbf16>
    tpu.vector_store %arg11[%c1_286, %c28_287, %c128_288], %309 {strides = array<i32>} : memref<3x36x256xbf16, #tpu.memory_space<vmem>>, vector<1x4x128xbf16>,
    %c0_289 = arith.constant 0 : index
    %c102_290 = arith.constant 102 : index
    %310 = vector.load %arg10[%c0_289, %c102_290] : memref<4x264xbf16, #tpu.memory_space<vmem>>, vector<4x128xbf16>
    %c1_291 = arith.constant 1 : index
    %c32_292 = arith.constant 32 : index
    %c128_293 = arith.constant 128 : index
    %311 = vector.load %arg11[%c1_291, %c32_292, %c128_293] : memref<3x36x256xbf16, #tpu.memory_space<vmem>>, vector<1x4x128xbf16>
    %312 = vector.shape_cast %311 : vector<1x4x128xbf16> to vector<4x128xbf16>
    %313 = vector.shape_cast %310 : vector<4x128xbf16> to vector<1x4x128xbf16>
    tpu.vector_store %arg11[%c1_291, %c32_292, %c128_293], %313 {strides = array<i32>} : memref<3x36x256xbf16, #tpu.memory_space<vmem>>, vector<1x4x128xbf16>,
    %c0_294 = arith.constant 0 : index
    %c48_295 = arith.constant 48 : index
    %314 = vector.load %arg8[%c0_294, %c48_295] : memref<4x352xf32, #tpu.memory_space<vmem>>, vector<4x256xf32>
    tpu.vector_store %arg8[%c0_294, %c48_295], %275 {strides = array<i32>} : memref<4x352xf32, #tpu.memory_space<vmem>>, vector<4x256xf32>,
    %c0_296 = arith.constant 0 : index
    %c16_297 = arith.constant 16 : index
    %315 = vector.load %arg8[%c0_296, %c16_297] : memref<4x352xf32, #tpu.memory_space<vmem>>, vector<4x256xf32>
    %c0_298 = arith.constant 0 : index
    %c32_299 = arith.constant 32 : index
    %316 = vector.load %arg8[%c0_298, %c32_299] : memref<4x352xf32, #tpu.memory_space<vmem>>, vector<4x256xf32>
    %317 = arith.maximumf %315, %316 : vector<4x256xf32>
    %c0_300 = arith.constant 0 : index
    %c48_301 = arith.constant 48 : index
    %318 = vector.load %arg8[%c0_300, %c48_301] : memref<4x352xf32, #tpu.memory_space<vmem>>, vector<4x256xf32>
    %319 = arith.maximumf %317, %318 : vector<4x256xf32>
    %c0_302 = arith.constant 0 : index
    %c64_303 = arith.constant 64 : index
    %320 = vector.load %arg8[%c0_302, %c64_303] : memref<4x352xf32, #tpu.memory_space<vmem>>, vector<4x256xf32>
    %321 = arith.maximumf %319, %320 : vector<4x256xf32>
    %c0_304 = arith.constant 0 : index
    %c80_305 = arith.constant 80 : index
    %322 = vector.load %arg8[%c0_304, %c80_305] : memref<4x352xf32, #tpu.memory_space<vmem>>, vector<4x256xf32>
    %323 = arith.maximumf %321, %322 : vector<4x256xf32>
    %c0_306 = arith.constant 0 : index
    %c3_307 = arith.constant 3 : index
    %324 = vector.load %arg9[%c0_306, %c3_307] : memref<4x262xf32, #tpu.memory_space<vmem>>, vector<4x256xf32>
    tpu.vector_store %arg9[%c0_306, %c3_307], %323 {strides = array<i32>} : memref<4x262xf32, #tpu.memory_space<vmem>>, vector<4x256xf32>,
    %c0_308 = arith.constant 0 : index
    %c4_309 = arith.constant 4 : index
    %325 = vector.load %arg9[%c0_308, %c4_309] : memref<4x262xf32, #tpu.memory_space<vmem>>, vector<4x256xf32>
    %cst_310 = arith.constant 0xFF800000 : f32
    %326 = vector.broadcast %cst_310 : f32 to vector<4x256xf32>
    %327 = arith.select %4, %325, %326 : vector<4x256xi1>, vector<4x256xf32>
    %c0_311 = arith.constant 0 : index
    %c2_312 = arith.constant 2 : index
    %328 = vector.load %arg9[%c0_311, %c2_312] : memref<4x262xf32, #tpu.memory_space<vmem>>, vector<4x256xf32>
    %cst_313 = arith.constant 0xFF800000 : f32
    %329 = vector.broadcast %cst_313 : f32 to vector<4x256xf32>
    %330 = arith.select %12, %328, %329 : vector<4x256xi1>, vector<4x256xf32>
    %331 = arith.maximumf %327, %330 : vector<4x256xf32>
    %332 = arith.maximumf %323, %331 : vector<4x256xf32>
    %c0_314 = arith.constant 0 : index
    %c5_315 = arith.constant 5 : index
    %333 = vector.load %arg9[%c0_314, %c5_315] : memref<4x262xf32, #tpu.memory_space<vmem>>, vector<4x256xf32>
    %cst_316 = arith.constant 0xFF800000 : f32
    %334 = vector.broadcast %cst_316 : f32 to vector<4x256xf32>
    %335 = arith.select %8, %333, %334 : vector<4x256xi1>, vector<4x256xf32>
    %c0_317 = arith.constant 0 : index
    %c1_318 = arith.constant 1 : index
    %336 = vector.load %arg9[%c0_317, %c1_318] : memref<4x262xf32, #tpu.memory_space<vmem>>, vector<4x256xf32>
    %cst_319 = arith.constant 0xFF800000 : f32
    %337 = vector.broadcast %cst_319 : f32 to vector<4x256xf32>
    %338 = arith.select %16, %336, %337 : vector<4x256xi1>, vector<4x256xf32>
    %339 = arith.maximumf %335, %338 : vector<4x256xf32>
    %340 = arith.maximumf %332, %339 : vector<4x256xf32>
    %341 = arith.truncf %340 : vector<4x256xf32> to vector<4x256xbf16>
    %c0_320 = arith.constant 0 : index
    %c0_321 = arith.constant 0 : index
    %342 = vector.load %arg10[%c0_320, %c0_321] : memref<4x264xbf16, #tpu.memory_space<vmem>>, vector<4x256xbf16>
    tpu.vector_store %arg10[%c0_320, %c0_321], %341 {strides = array<i32>} : memref<4x264xbf16, #tpu.memory_space<vmem>>, vector<4x256xbf16>,
    %c0_322 = arith.constant 0 : index
    %c0_323 = arith.constant 0 : index
    %343 = vector.load %arg10[%c0_322, %c0_323] : memref<4x264xbf16, #tpu.memory_space<vmem>>, vector<4x128xbf16>
    %c2_324 = arith.constant 2 : index
    %c0_325 = arith.constant 0 : index
    %c128_326 = arith.constant 128 : index
    %344 = vector.load %arg11[%c2_324, %c0_325, %c128_326] : memref<3x36x256xbf16, #tpu.memory_space<vmem>>, vector<1x4x128xbf16>
    %345 = vector.shape_cast %344 : vector<1x4x128xbf16> to vector<4x128xbf16>
    %346 = vector.shape_cast %343 : vector<4x128xbf16> to vector<1x4x128xbf16>
    tpu.vector_store %arg11[%c2_324, %c0_325, %c128_326], %346 {strides = array<i32>} : memref<3x36x256xbf16, #tpu.memory_space<vmem>>, vector<1x4x128xbf16>,
    %c0_327 = arith.constant 0 : index
    %c4_328 = arith.constant 4 : index
    %347 = vector.load %arg10[%c0_327, %c4_328] : memref<4x264xbf16, #tpu.memory_space<vmem>>, vector<4x128xbf16>
    %c2_329 = arith.constant 2 : index
    %c4_330 = arith.constant 4 : index
    %c128_331 = arith.constant 128 : index
    %348 = vector.load %arg11[%c2_329, %c4_330, %c128_331] : memref<3x36x256xbf16, #tpu.memory_space<vmem>>, vector<1x4x128xbf16>
    %349 = vector.shape_cast %348 : vector<1x4x128xbf16> to vector<4x128xbf16>
    %350 = vector.shape_cast %347 : vector<4x128xbf16> to vector<1x4x128xbf16>
    tpu.vector_store %arg11[%c2_329, %c4_330, %c128_331], %350 {strides = array<i32>} : memref<3x36x256xbf16, #tpu.memory_space<vmem>>, vector<1x4x128xbf16>,
    %c0_332 = arith.constant 0 : index
    %c8_333 = arith.constant 8 : index
    %351 = vector.load %arg10[%c0_332, %c8_333] : memref<4x264xbf16, #tpu.memory_space<vmem>>, vector<4x128xbf16>
    %c2_334 = arith.constant 2 : index
    %c8_335 = arith.constant 8 : index
    %c128_336 = arith.constant 128 : index
    %352 = vector.load %arg11[%c2_334, %c8_335, %c128_336] : memref<3x36x256xbf16, #tpu.memory_space<vmem>>, vector<1x4x128xbf16>
    %353 = vector.shape_cast %352 : vector<1x4x128xbf16> to vector<4x128xbf16>
    %354 = vector.shape_cast %351 : vector<4x128xbf16> to vector<1x4x128xbf16>
    tpu.vector_store %arg11[%c2_334, %c8_335, %c128_336], %354 {strides = array<i32>} : memref<3x36x256xbf16, #tpu.memory_space<vmem>>, vector<1x4x128xbf16>,
    %c0_337 = arith.constant 0 : index
    %c64_338 = arith.constant 64 : index
    %355 = vector.load %arg10[%c0_337, %c64_338] : memref<4x264xbf16, #tpu.memory_space<vmem>>, vector<4x128xbf16>
    %c2_339 = arith.constant 2 : index
    %c12_340 = arith.constant 12 : index
    %c128_341 = arith.constant 128 : index
    %356 = vector.load %arg11[%c2_339, %c12_340, %c128_341] : memref<3x36x256xbf16, #tpu.memory_space<vmem>>, vector<1x4x128xbf16>
    %357 = vector.shape_cast %356 : vector<1x4x128xbf16> to vector<4x128xbf16>
    %358 = vector.shape_cast %355 : vector<4x128xbf16> to vector<1x4x128xbf16>
    tpu.vector_store %arg11[%c2_339, %c12_340, %c128_341], %358 {strides = array<i32>} : memref<3x36x256xbf16, #tpu.memory_space<vmem>>, vector<1x4x128xbf16>,
    %c0_342 = arith.constant 0 : index
    %c68_343 = arith.constant 68 : index
    %359 = vector.load %arg10[%c0_342, %c68_343] : memref<4x264xbf16, #tpu.memory_space<vmem>>, vector<4x128xbf16>
    %c2_344 = arith.constant 2 : index
    %c16_345 = arith.constant 16 : index
    %c128_346 = arith.constant 128 : index
    %360 = vector.load %arg11[%c2_344, %c16_345, %c128_346] : memref<3x36x256xbf16, #tpu.memory_space<vmem>>, vector<1x4x128xbf16>
    %361 = vector.shape_cast %360 : vector<1x4x128xbf16> to vector<4x128xbf16>
    %362 = vector.shape_cast %359 : vector<4x128xbf16> to vector<1x4x128xbf16>
    tpu.vector_store %arg11[%c2_344, %c16_345, %c128_346], %362 {strides = array<i32>} : memref<3x36x256xbf16, #tpu.memory_space<vmem>>, vector<1x4x128xbf16>,
    %c0_347 = arith.constant 0 : index
    %c72_348 = arith.constant 72 : index
    %363 = vector.load %arg10[%c0_347, %c72_348] : memref<4x264xbf16, #tpu.memory_space<vmem>>, vector<4x128xbf16>
    %c2_349 = arith.constant 2 : index
    %c20_350 = arith.constant 20 : index
    %c128_351 = arith.constant 128 : index
    %364 = vector.load %arg11[%c2_349, %c20_350, %c128_351] : memref<3x36x256xbf16, #tpu.memory_space<vmem>>, vector<1x4x128xbf16>
    %365 = vector.shape_cast %364 : vector<1x4x128xbf16> to vector<4x128xbf16>
    %366 = vector.shape_cast %363 : vector<4x128xbf16> to vector<1x4x128xbf16>
    tpu.vector_store %arg11[%c2_349, %c20_350, %c128_351], %366 {strides = array<i32>} : memref<3x36x256xbf16, #tpu.memory_space<vmem>>, vector<1x4x128xbf16>,
    %c0_352 = arith.constant 0 : index
    %c128_353 = arith.constant 128 : index
    %367 = vector.load %arg10[%c0_352, %c128_353] : memref<4x264xbf16, #tpu.memory_space<vmem>>, vector<4x128xbf16>
    %c2_354 = arith.constant 2 : index
    %c24_355 = arith.constant 24 : index
    %c128_356 = arith.constant 128 : index
    %368 = vector.load %arg11[%c2_354, %c24_355, %c128_356] : memref<3x36x256xbf16, #tpu.memory_space<vmem>>, vector<1x4x128xbf16>
    %369 = vector.shape_cast %368 : vector<1x4x128xbf16> to vector<4x128xbf16>
    %370 = vector.shape_cast %367 : vector<4x128xbf16> to vector<1x4x128xbf16>
    tpu.vector_store %arg11[%c2_354, %c24_355, %c128_356], %370 {strides = array<i32>} : memref<3x36x256xbf16, #tpu.memory_space<vmem>>, vector<1x4x128xbf16>,
    %c0_357 = arith.constant 0 : index
    %c132_358 = arith.constant 132 : index
    %371 = vector.load %arg10[%c0_357, %c132_358] : memref<4x264xbf16, #tpu.memory_space<vmem>>, vector<4x128xbf16>
    %c2_359 = arith.constant 2 : index
    %c28_360 = arith.constant 28 : index
    %c128_361 = arith.constant 128 : index
    %372 = vector.load %arg11[%c2_359, %c28_360, %c128_361] : memref<3x36x256xbf16, #tpu.memory_space<vmem>>, vector<1x4x128xbf16>
    %373 = vector.shape_cast %372 : vector<1x4x128xbf16> to vector<4x128xbf16>
    %374 = vector.shape_cast %371 : vector<4x128xbf16> to vector<1x4x128xbf16>
    tpu.vector_store %arg11[%c2_359, %c28_360, %c128_361], %374 {strides = array<i32>} : memref<3x36x256xbf16, #tpu.memory_space<vmem>>, vector<1x4x128xbf16>,
    %c0_362 = arith.constant 0 : index
    %c136_363 = arith.constant 136 : index
    %375 = vector.load %arg10[%c0_362, %c136_363] : memref<4x264xbf16, #tpu.memory_space<vmem>>, vector<4x128xbf16>
    %c2_364 = arith.constant 2 : index
    %c32_365 = arith.constant 32 : index
    %c128_366 = arith.constant 128 : index
    %376 = vector.load %arg11[%c2_364, %c32_365, %c128_366] : memref<3x36x256xbf16, #tpu.memory_space<vmem>>, vector<1x4x128xbf16>
    %377 = vector.shape_cast %376 : vector<1x4x128xbf16> to vector<4x128xbf16>
    %378 = vector.shape_cast %375 : vector<4x128xbf16> to vector<1x4x128xbf16>
    tpu.vector_store %arg11[%c2_364, %c32_365, %c128_366], %378 {strides = array<i32>} : memref<3x36x256xbf16, #tpu.memory_space<vmem>>, vector<1x4x128xbf16>,
    %c0_367 = arith.constant 0 : index
    %c0_368 = arith.constant 0 : index
    %c0_369 = arith.constant 0 : index
    %379 = vector.load %arg3[%c0_367, %c0_368, %c0_369] : memref<3x8x36xbf16, #tpu.memory_space<vmem>>, vector<1x8x36xbf16>
    %380 = vector.shape_cast %379 : vector<1x8x36xbf16> to vector<8x36xbf16>
    %c0_370 = arith.constant 0 : index
    %c0_371 = arith.constant 0 : index
    %c0_372 = arith.constant 0 : index
    %381 = vector.load %arg11[%c0_370, %c0_371, %c0_372] : memref<3x36x256xbf16, #tpu.memory_space<vmem>>, vector<1x36x256xbf16>
    %382 = vector.shape_cast %381 : vector<1x36x256xbf16> to vector<36x256xbf16>
    %cst_373 = arith.constant dense<0.000000e+00> : vector<8x256xf32>
    %383 = tpu.matmul %380, %382, %cst_373 {dimension_numbers = #tpu.dot_dimension_numbers<[1], [0], [0], [1], [0, 0, 1, 1], [], []>} : vector<8x36xbf16>, vector<36x256xbf16>, vector<8x256xf32> -> vector<8x256xf32>
    %c0_374 = arith.constant 0 : index
    %c0_375 = arith.constant 0 : index
    %c0_376 = arith.constant 0 : index
    %384 = vector.load %arg4[%c0_374, %c0_375, %c0_376] : memref<3x8x1xf32, #tpu.memory_space<vmem>>, vector<1x8x1xf32>
    %385 = vector.shape_cast %384 : vector<1x8x1xf32> to vector<8x1xf32>
    %386 = vector.broadcast %385 : vector<8x1xf32> to vector<8x256xf32>
    %387 = arith.addf %383, %386 : vector<8x256xf32>
    %cst_377 = arith.constant 0.000000e+00 : f32
    %388 = vector.broadcast %cst_377 : f32 to vector<8x256xf32>
    %389 = arith.maximumf %387, %388 : vector<8x256xf32>
    %390 = arith.truncf %389 : vector<8x256xf32> to vector<8x256xbf16>
    %c0_378 = arith.constant 0 : index
    %c0_379 = arith.constant 0 : index
    %391 = vector.load %arg12[%c0_378, %c0_379] : memref<28x256xbf16, #tpu.memory_space<vmem>>, vector<8x256xbf16>
    tpu.vector_store %arg12[%c0_378, %c0_379], %390 {strides = array<i32>} : memref<28x256xbf16, #tpu.memory_space<vmem>>, vector<8x256xbf16>,
    %c1_380 = arith.constant 1 : index
    %c0_381 = arith.constant 0 : index
    %c0_382 = arith.constant 0 : index
    %392 = vector.load %arg3[%c1_380, %c0_381, %c0_382] : memref<3x8x36xbf16, #tpu.memory_space<vmem>>, vector<1x8x36xbf16>
    %393 = vector.shape_cast %392 : vector<1x8x36xbf16> to vector<8x36xbf16>
    %c1_383 = arith.constant 1 : index
    %c0_384 = arith.constant 0 : index
    %c0_385 = arith.constant 0 : index
    %394 = vector.load %arg11[%c1_383, %c0_384, %c0_385] : memref<3x36x256xbf16, #tpu.memory_space<vmem>>, vector<1x36x256xbf16>
    %395 = vector.shape_cast %394 : vector<1x36x256xbf16> to vector<36x256xbf16>
    %cst_386 = arith.constant dense<0.000000e+00> : vector<8x256xf32>
    %396 = tpu.matmul %393, %395, %cst_386 {dimension_numbers = #tpu.dot_dimension_numbers<[1], [0], [0], [1], [0, 0, 1, 1], [], []>} : vector<8x36xbf16>, vector<36x256xbf16>, vector<8x256xf32> -> vector<8x256xf32>
    %c1_387 = arith.constant 1 : index
    %c0_388 = arith.constant 0 : index
    %c0_389 = arith.constant 0 : index
    %397 = vector.load %arg4[%c1_387, %c0_388, %c0_389] : memref<3x8x1xf32, #tpu.memory_space<vmem>>, vector<1x8x1xf32>
    %398 = vector.shape_cast %397 : vector<1x8x1xf32> to vector<8x1xf32>
    %399 = vector.broadcast %398 : vector<8x1xf32> to vector<8x256xf32>
    %400 = arith.addf %396, %399 : vector<8x256xf32>
    %cst_390 = arith.constant 0.000000e+00 : f32
    %401 = vector.broadcast %cst_390 : f32 to vector<8x256xf32>
    %402 = arith.maximumf %400, %401 : vector<8x256xf32>
    %403 = arith.truncf %402 : vector<8x256xf32> to vector<8x256xbf16>
    %c8_391 = arith.constant 8 : index
    %c0_392 = arith.constant 0 : index
    %404 = vector.load %arg12[%c8_391, %c0_392] : memref<28x256xbf16, #tpu.memory_space<vmem>>, vector<8x256xbf16>
    tpu.vector_store %arg12[%c8_391, %c0_392], %403 {strides = array<i32>} : memref<28x256xbf16, #tpu.memory_space<vmem>>, vector<8x256xbf16>,
    %c2_393 = arith.constant 2 : index
    %c0_394 = arith.constant 0 : index
    %c0_395 = arith.constant 0 : index
    %405 = vector.load %arg3[%c2_393, %c0_394, %c0_395] : memref<3x8x36xbf16, #tpu.memory_space<vmem>>, vector<1x8x36xbf16>
    %406 = vector.shape_cast %405 : vector<1x8x36xbf16> to vector<8x36xbf16>
    %c2_396 = arith.constant 2 : index
    %c0_397 = arith.constant 0 : index
    %c0_398 = arith.constant 0 : index
    %407 = vector.load %arg11[%c2_396, %c0_397, %c0_398] : memref<3x36x256xbf16, #tpu.memory_space<vmem>>, vector<1x36x256xbf16>
    %408 = vector.shape_cast %407 : vector<1x36x256xbf16> to vector<36x256xbf16>
    %cst_399 = arith.constant dense<0.000000e+00> : vector<8x256xf32>
    %409 = tpu.matmul %406, %408, %cst_399 {dimension_numbers = #tpu.dot_dimension_numbers<[1], [0], [0], [1], [0, 0, 1, 1], [], []>} : vector<8x36xbf16>, vector<36x256xbf16>, vector<8x256xf32> -> vector<8x256xf32>
    %c2_400 = arith.constant 2 : index
    %c0_401 = arith.constant 0 : index
    %c0_402 = arith.constant 0 : index
    %410 = vector.load %arg4[%c2_400, %c0_401, %c0_402] : memref<3x8x1xf32, #tpu.memory_space<vmem>>, vector<1x8x1xf32>
    %411 = vector.shape_cast %410 : vector<1x8x1xf32> to vector<8x1xf32>
    %412 = vector.broadcast %411 : vector<8x1xf32> to vector<8x256xf32>
    %413 = arith.addf %409, %412 : vector<8x256xf32>
    %cst_403 = arith.constant 0.000000e+00 : f32
    %414 = vector.broadcast %cst_403 : f32 to vector<8x256xf32>
    %415 = arith.maximumf %413, %414 : vector<8x256xf32>
    %416 = arith.truncf %415 : vector<8x256xf32> to vector<8x256xbf16>
    %c16_404 = arith.constant 16 : index
    %c0_405 = arith.constant 0 : index
    %417 = vector.load %arg12[%c16_404, %c0_405] : memref<28x256xbf16, #tpu.memory_space<vmem>>, vector<8x256xbf16>
    tpu.vector_store %arg12[%c16_404, %c0_405], %416 {strides = array<i32>} : memref<28x256xbf16, #tpu.memory_space<vmem>>, vector<8x256xbf16>,
    %c0_406 = arith.constant 0 : index
    %c0_407 = arith.constant 0 : index
    %418 = vector.load %arg5[%c0_406, %c0_407] : memref<8x28xbf16, #tpu.memory_space<vmem>>, vector<8x28xbf16>
    %c0_408 = arith.constant 0 : index
    %c0_409 = arith.constant 0 : index
    %419 = vector.load %arg12[%c0_408, %c0_409] : memref<28x256xbf16, #tpu.memory_space<vmem>>, vector<28x256xbf16>
    %cst_410 = arith.constant dense<0.000000e+00> : vector<8x256xf32>
    %420 = tpu.matmul %418, %419, %cst_410 {dimension_numbers = #tpu.dot_dimension_numbers<[1], [0], [0], [1], [0, 0, 1, 1], [], []>} : vector<8x28xbf16>, vector<28x256xbf16>, vector<8x256xf32> -> vector<8x256xf32>
    %c0_411 = arith.constant 0 : index
    %c0_412 = arith.constant 0 : index
    %421 = vector.load %arg6[%c0_411, %c0_412] : memref<8x1xf32, #tpu.memory_space<vmem>>, vector<8x1xf32>
    %422 = vector.broadcast %421 : vector<8x1xf32> to vector<8x256xf32>
    %423 = arith.addf %420, %422 : vector<8x256xf32>
    %424 = vector.extract_strided_slice %423 {offsets = [0, 0], sizes = [8, 128], strides = [1, 1]} : vector<8x256xf32> to vector<8x128xf32>
    %cst_413 = arith.constant 0.000000e+00 : f32
    %425 = vector.broadcast %cst_413 : f32 to vector<8x128xf32>
    %426 = arith.maximumf %424, %425 : vector<8x128xf32>
    %c0_414 = arith.constant 0 : index
    %c0_415 = arith.constant 0 : index
    %c0_416 = arith.constant 0 : index
    %427 = vector.load %arg7[%c0_414, %c0_415, %c0_416] : memref<2x8x128xf32, #tpu.memory_space<vmem>>, vector<1x8x128xf32>
    %428 = vector.shape_cast %427 : vector<1x8x128xf32> to vector<8x128xf32>
    %429 = vector.shape_cast %426 : vector<8x128xf32> to vector<1x8x128xf32>
    tpu.vector_store %arg7[%c0_414, %c0_415, %c0_416], %429 {strides = array<i32>} : memref<2x8x128xf32, #tpu.memory_space<vmem>>, vector<1x8x128xf32>,
    %430 = vector.extract_strided_slice %423 {offsets = [0, 128], sizes = [8, 128], strides = [1, 1]} : vector<8x256xf32> to vector<8x128xf32>
    %cst_417 = arith.constant 0.000000e+00 : f32
    %431 = vector.broadcast %cst_417 : f32 to vector<8x128xf32>
    %432 = arith.maximumf %430, %431 : vector<8x128xf32>
    %c1_418 = arith.constant 1 : index
    %c0_419 = arith.constant 0 : index
    %c0_420 = arith.constant 0 : index
    %433 = vector.load %arg7[%c1_418, %c0_419, %c0_420] : memref<2x8x128xf32, #tpu.memory_space<vmem>>, vector<1x8x128xf32>
    %434 = vector.shape_cast %433 : vector<1x8x128xf32> to vector<8x128xf32>
    %435 = vector.shape_cast %432 : vector<8x128xf32> to vector<1x8x128xf32>
    tpu.vector_store %arg7[%c1_418, %c0_419, %c0_420], %435 {strides = array<i32>} : memref<2x8x128xf32, #tpu.memory_space<vmem>>, vector<1x8x128xf32>,
    return
  }
  func.func @transform_0(%arg0: i32) -> (i32, i32, i32) {
    %c0_i32 = arith.constant 0 : i32
    %c0_i32_0 = arith.constant 0 : i32
    %c0_i32_1 = arith.constant 0 : i32
    return %arg0, %c0_i32, %c0_i32_0 : i32, i32, i32
  }
  func.func @transform_1(%arg0: i32) -> (i32, i32) {
    %c0_i32 = arith.constant 0 : i32
    %c0_i32_0 = arith.constant 0 : i32
    %c0_i32_1 = arith.constant 0 : i32
    return %c0_i32, %c0_i32_0 : i32, i32
  }
  func.func @transform_2(%arg0: i32) -> (i32, i32, i32) {
    %c0_i32 = arith.constant 0 : i32
    %c0_i32_0 = arith.constant 0 : i32
    %c0_i32_1 = arith.constant 0 : i32
    %c0_i32_2 = arith.constant 0 : i32
    return %c0_i32, %c0_i32_0, %c0_i32_1 : i32, i32, i32
  }
  func.func @transform_3(%arg0: i32) -> (i32, i32, i32) {
    %c0_i32 = arith.constant 0 : i32
    %c0_i32_0 = arith.constant 0 : i32
    %c0_i32_1 = arith.constant 0 : i32
    %c0_i32_2 = arith.constant 0 : i32
    return %c0_i32, %c0_i32_0, %c0_i32_1 : i32, i32, i32
  }
  func.func @transform_4(%arg0: i32) -> (i32, i32) {
    %c0_i32 = arith.constant 0 : i32
    %c0_i32_0 = arith.constant 0 : i32
    %c0_i32_1 = arith.constant 0 : i32
    return %c0_i32, %c0_i32_0 : i32, i32
  }
  func.func @transform_5(%arg0: i32) -> (i32, i32) {
    %c0_i32 = arith.constant 0 : i32
    %c0_i32_0 = arith.constant 0 : i32
    %c0_i32_1 = arith.constant 0 : i32
    return %c0_i32, %c0_i32_0 : i32, i32
  }
  func.func @transform_6(%arg0: i32) -> (i32, i32, i32) {
    %c0_i32 = arith.constant 0 : i32
    %c0_i32_0 = arith.constant 0 : i32
    %c0_i32_1 = arith.constant 0 : i32
    return %arg0, %c0_i32, %c0_i32_0 : i32, i32, i32
  }
}

</mosaic_0001>

<llo_original>
// kernel: resid_multiscale_block.1
$region0: #{resid_multiscale_block.1}
  #allocation0 [shape = 'u32[]', space=smem, size = 0x4, offset = 0x4, fixed_abs, tag = 'smem constant byte address 0x4 - core index']
  #allocation1 [shape = 'u32[144,128]{1,0:T(1,128)}', space=vmem, size = 0x12000, scoped, tag = 'internal scratch']
  #allocation2 [shape = 'f32[4,352]{1,0:T(4,128)}', space=vmem, size = 0x1800, scoped, tag = 'scratch operand']
  #allocation3 [shape = 'f32[4,262]{1,0:T(4,128)}', space=vmem, size = 0x1800, scoped, tag = 'scratch operand']
  #allocation4 [shape = 'bf16[4,264]{1,0:T(4,128)(2,1)}', space=vmem, size = 0xc00, scoped, tag = 'scratch operand']
  #allocation5 [shape = 'bf16[3,36,256]{2,1,0:T(8,128)(2,1)}', space=vmem, size = 0xf000, scoped, tag = 'scratch operand']
  #allocation6 [shape = 'bf16[28,256]{1,0:T(8,128)(2,1)}', space=vmem, size = 0x4000, scoped, tag = 'scratch operand']
  %s0 = inlined_call_operand.vmem [shape: f32[4,4,256], index: 0, kind: input, shape index: {}]
  %s1 = inlined_call_operand.vmem [shape: s32[1,256], index: 1, kind: input, shape index: {}]
  %s2 = inlined_call_operand.vmem [shape: bf16[3,8,36], index: 2, kind: input, shape index: {}]
  %s3 = inlined_call_operand.vmem [shape: f32[3,8,1], index: 3, kind: input, shape index: {}]
  %s4 = inlined_call_operand.vmem [shape: bf16[8,28], index: 4, kind: input, shape index: {}]
  %s5 = inlined_call_operand.vmem [shape: f32[8,1], index: 5, kind: input, shape index: {}]
  %s6 = inlined_call_operand.vmem [shape: f32[4,8,128], index: 6, kind: output, shape index: {}]
  %s7 = sld [smem:[#allocation0]]
  $region57: #{resid_multiscale_block.1} parent=0
    _
  %s9 = ssub.s32 1, %s7
  %s10 = scalar_select 0, %s9, %s7
  loop: start=0, step=1, limit=4
  $region2: #{resid_multiscale_block.1} parent=0 // loop_pre_header
    _
  $region3: #{resid_multiscale_block.1} parent=0 // loop_header
    %s12 = sphi 0, %s16
    %p13 = scmp.ge.s32.totalorder %s12, 4
    %s22 = sphi 0, %s24
    %s25 = sphi 0, %s22
    %s26 = sphi 0, %s25
    %s42 = sphi 0, %s26
    %s46 = sphi 0, %s46
    %s48 = sphi 0, %s46
    %s49 = sphi 0, %s48
    %s63 = sphi 0, %s49
    %s67 = sphi 0, %s67
    %s69 = sphi 0, %s67
    %s70 = sphi 0, %s69
    %s84 = sphi 0, %s70
    %s88 = sphi 0, %s88
    %s90 = sphi 0, %s88
    %s91 = sphi 0, %s90
    %s105 = sphi 0, %s91
    %s109 = sphi 0, %s109
    %s111 = sphi 0, %s109
    %s112 = sphi 0, %s111
    %s126 = sphi 0, %s112
    %s130 = sphi 0, %s130
    %s132 = sphi 0, %s130
    %s133 = sphi 0, %s132
    %s147 = sphi 0, %s133
    %s153 = sphi 0, %s155
    %s156 = sphi 0, %s153
    %s157 = sphi 0, %s156
    %s173 = sphi 0, %s157
  $region4: #{resid_multiscale_block.1} parent=0 // loop_header_branch
    %15 = sbr.rel (%p13) target = $region8
  $region5: #{resid_multiscale_block.1} parent=0 // loop_body
    %s17 = ssub.s32 %s12, 1
    %s18 = ssub.s32 %s12, 2
    %s19 = sadd.s32 %s12, 1
    %s20 = ssub.s32 %s12, %s19
    %p21 = scmp.eq.s32.totalorder %s20, 0
    %s23 = sadd.s32 %s22, 1
    %s24 = scalar_select %p21, %s22, %s23
    %p27 = pneg %p21
    %p28 = scmp.eq.s32.totalorder %s12, 1
    %p29 = por %p27, %p28
    %p30 = scmp.ne.s32.totalorder %s22, %s25
    %p31 = scmp.eq.s32.totalorder %s12, 0
    %p32 = por %p30, %p31
    %p33 = scmp.ne.s32.totalorder %s22, %s25
    %p34 = scmp.eq.s32.totalorder %s17, 1
    %p35 = por %p33, %p34
    %p36 = scmp.ne.s32.totalorder %s25, %s26
    %p37 = scmp.eq.s32.totalorder %s17, 0
    %p38 = por %p36, %p37
    %p39 = scmp.ne.s32.totalorder %s25, %s26
    %p40 = scmp.eq.s32.totalorder %s18, 1
    %p41 = por %p39, %p40
    %p43 = scmp.ne.s32.totalorder %s26, %s42
    %p44 = scmp.eq.s32.totalorder %s18, 0
    %p45 = por %p43, %p44
    %s47 = sadd.s32 %s46, 1
    %p50 = scmp.eq.s32.totalorder %s12, 1
    %p51 = scmp.ne.s32.totalorder %s46, %s48
    %p52 = scmp.eq.s32.totalorder %s12, 0
    %p53 = por %p51, %p52
    %p54 = scmp.ne.s32.totalorder %s46, %s48
    %p55 = scmp.eq.s32.totalorder %s17, 1
    %p56 = por %p54, %p55
    %p57 = scmp.ne.s32.totalorder %s48, %s49
    %p58 = scmp.eq.s32.totalorder %s17, 0
    %p59 = por %p57, %p58
    %p60 = scmp.ne.s32.totalorder %s48, %s49
    %p61 = scmp.eq.s32.totalorder %s18, 1
    %p62 = por %p60, %p61
    %p64 = scmp.ne.s32.totalorder %s49, %s63
    %p65 = scmp.eq.s32.totalorder %s18, 0
    %p66 = por %p64, %p65
    %s68 = sadd.s32 %s67, 1
    %p71 = scmp.eq.s32.totalorder %s12, 1
    %p72 = scmp.ne.s32.totalorder %s67, %s69
    %p73 = scmp.eq.s32.totalorder %s12, 0
    %p74 = por %p72, %p73
    %p75 = scmp.ne.s32.totalorder %s67, %s69
    %p76 = scmp.eq.s32.totalorder %s17, 1
    %p77 = por %p75, %p76
    %p78 = scmp.ne.s32.totalorder %s69, %s70
    %p79 = scmp.eq.s32.totalorder %s17, 0
    %p80 = por %p78, %p79
    %p81 = scmp.ne.s32.totalorder %s69, %s70
    %p82 = scmp.eq.s32.totalorder %s18, 1
    %p83 = por %p81, %p82
    %p85 = scmp.ne.s32.totalorder %s70, %s84
    %p86 = scmp.eq.s32.totalorder %s18, 0
    %p87 = por %p85, %p86
    %s89 = sadd.s32 %s88, 1
    %p92 = scmp.eq.s32.totalorder %s12, 1
    %p93 = scmp.ne.s32.totalorder %s88, %s90
    %p94 = scmp.eq.s32.totalorder %s12, 0
    %p95 = por %p93, %p94
    %p96 = scmp.ne.s32.totalorder %s88, %s90
    %p97 = scmp.eq.s32.totalorder %s17, 1
    %p98 = por %p96, %p97
    %p99 = scmp.ne.s32.totalorder %s90, %s91
    %p100 = scmp.eq.s32.totalorder %s17, 0
    %p101 = por %p99, %p100
    %p102 = scmp.ne.s32.totalorder %s90, %s91
    %p103 = scmp.eq.s32.totalorder %s18, 1
    %p104 = por %p102, %p103
    %p106 = scmp.ne.s32.totalorder %s91, %s105
    %p107 = scmp.eq.s32.totalorder %s18, 0
    %p108 = por %p106, %p107
    %s110 = sadd.s32 %s109, 1
    %p113 = scmp.eq.s32.totalorder %s12, 1
    %p114 = scmp.ne.s32.totalorder %s109, %s111
    %p115 = scmp.eq.s32.totalorder %s12, 0
    %p116 = por %p114, %p115
    %p117 = scmp.ne.s32.totalorder %s109, %s111
    %p118 = scmp.eq.s32.totalorder %s17, 1
    %p119 = por %p117, %p118
    %p120 = scmp.ne.s32.totalorder %s111, %s112
    %p121 = scmp.eq.s32.totalorder %s17, 0
    %p122 = por %p120, %p121
    %p123 = scmp.ne.s32.totalorder %s111, %s112
    %p124 = scmp.eq.s32.totalorder %s18, 1
    %p125 = por %p123, %p124
    %p127 = scmp.ne.s32.totalorder %s112, %s126
    %p128 = scmp.eq.s32.totalorder %s18, 0
    %p129 = por %p127, %p128
    %s131 = sadd.s32 %s130, 1
    %p134 = scmp.eq.s32.totalorder %s12, 1
    %p135 = scmp.ne.s32.totalorder %s130, %s132
    %p136 = scmp.eq.s32.totalorder %s12, 0
    %p137 = por %p135, %p136
    %p138 = scmp.ne.s32.totalorder %s130, %s132
    %p139 = scmp.eq.s32.totalorder %s17, 1
    %p140 = por %p138, %p139
    %p141 = scmp.ne.s32.totalorder %s132, %s133
    %p142 = scmp.eq.s32.totalorder %s17, 0
    %p143 = por %p141, %p142
    %p144 = scmp.ne.s32.totalorder %s132, %s133
    %p145 = scmp.eq.s32.totalorder %s18, 1
    %p146 = por %p144, %p145
    %p148 = scmp.ne.s32.totalorder %s133, %s147
    %p149 = scmp.eq.s32.totalorder %s18, 0
    %p150 = por %p148, %p149
    %s151 = ssub.s32 %s12, %s19
    %p152 = scmp.eq.s32.totalorder %s151, 0
    %s154 = sadd.s32 %s153, 1
    %s155 = scalar_select %p152, %s153, %s154
    %p158 = pneg %p152
    %p159 = scmp.eq.s32.totalorder %s12, 1
    %p160 = por %p158, %p159
    %p161 = scmp.ne.s32.totalorder %s153, %s156
    %p162 = scmp.eq.s32.totalorder %s12, 0
    %p163 = por %p161, %p162
    %p164 = scmp.ne.s32.totalorder %s153, %s156
    %p165 = scmp.eq.s32.totalorder %s17, 1
    %p166 = por %p164, %p165
    %p167 = scmp.ne.s32.totalorder %s156, %s157
    %p168 = scmp.eq.s32.totalorder %s17, 0
    %p169 = por %p167, %p168
    %p170 = scmp.ne.s32.totalorder %s156, %s157
    %p171 = scmp.eq.s32.totalorder %s18, 1
    %p172 = por %p170, %p171
    %p174 = scmp.ne.s32.totalorder %s157, %s173
    %p175 = scmp.eq.s32.totalorder %s18, 0
    %p176 = por %p174, %p175
    %p177 = scmp.le.s32.totalorder 1, %s12
    %p178 = scmp.lt.s32.totalorder %s12, 3
    %p179 = pnand %p177, %p178
    %p180 = pneg %p179
    // Predicated region
    $region9: #{resid_multiscale_block.1} parent=5 // pred_check
      _
    $region10: #{resid_multiscale_block.1} parent=5 // pred_check_branch
      %182 = sbr.rel (%p179) target = $region12
    $region11: #{resid_multiscale_block.1} parent=5 // pred_region
      %s183 = ssub.s32 %s12, 1
      // Predicated region
      $region13: #{resid_multiscale_block.1} parent=11 // pred_check
        %p184 = pneg %p59
      $region14: #{resid_multiscale_block.1} parent=11 // pred_check_branch
        %186 = sbr.rel (%p184) target = $region16
      $region15: #{resid_multiscale_block.1} parent=11 // pred_region
        _
      $region16: #{resid_multiscale_block.1} parent=11 // pred_fallthru
        _
      // Predicated region
      $region17: #{resid_multiscale_block.1} parent=11 // pred_check
        %p187 = pneg %p80
      $region18: #{resid_multiscale_block.1} parent=11 // pred_check_branch
        %189 = sbr.rel (%p187) target = $region20
      $region19: #{resid_multiscale_block.1} parent=11 // pred_region
        _
      $region20: #{resid_multiscale_block.1} parent=11 // pred_fallthru
        _
      // Predicated region
      $region21: #{resid_multiscale_block.1} parent=11 // pred_check
        %p190 = pneg %p101
      $region22: #{resid_multiscale_block.1} parent=11 // pred_check_branch
        %192 = sbr.rel (%p190) target = $region24
      $region23: #{resid_multiscale_block.1} parent=11 // pred_region
        _
      $region24: #{resid_multiscale_block.1} parent=11 // pred_fallthru
        _
      // Predicated region
      $region25: #{resid_multiscale_block.1} parent=11 // pred_check
        %p193 = pneg %p122
      $region26: #{resid_multiscale_block.1} parent=11 // pred_check_branch
        %195 = sbr.rel (%p193) target = $region28
      $region27: #{resid_multiscale_block.1} parent=11 // pred_region
        _
      $region28: #{resid_multiscale_block.1} parent=11 // pred_fallthru
        _
      // Predicated region
      $region29: #{resid_multiscale_block.1} parent=11 // pred_check
        %p196 = pneg %p143
      $region30: #{resid_multiscale_block.1} parent=11 // pred_check_branch
        %198 = sbr.rel (%p196) target = $region32
      $region31: #{resid_multiscale_block.1} parent=11 // pred_region
        _
      $region32: #{resid_multiscale_block.1} parent=11 // pred_fallthru
        _
    $region12: #{resid_multiscale_block.1} parent=5 // pred_fallthru
      _
    %p199 = scmp.lt.s32.totalorder %s12, 2
    // Predicated region
    $region33: #{resid_multiscale_block.1} parent=5 // pred_check
      %p200 = pneg %p199
    $region34: #{resid_multiscale_block.1} parent=5 // pred_check_branch
      %202 = sbr.rel (%p200) target = $region36
    $region35: #{resid_multiscale_block.1} parent=5 // pred_region
      // Predicated region
      $region37: #{resid_multiscale_block.1} parent=35 // pred_check
        %p203 = pneg %p32
      $region38: #{resid_multiscale_block.1} parent=35 // pred_check_branch
        %205 = sbr.rel (%p203) target = $region40
      $region39: #{resid_multiscale_block.1} parent=35 // pred_region
        %s206 = smul.u32 2, %s12
        %p207 = scmp.lt.s32.totalorder %s206, 3
        %s208 = scalar_select %p207, %s206, 3
        %s209 = smul.addr %s208, 2
        %s210 = smul.addr %s209, 4
        %s211 = scalar_lea.vmem %s0, %s210
        %s212 = smul.u32 2, %s12
      $region40: #{resid_multiscale_block.1} parent=35 // pred_fallthru
        _
    $region36: #{resid_multiscale_block.1} parent=5 // pred_fallthru
      _
    %p213 = scmp.le.s32.totalorder 1, %s12
    %p214 = scmp.lt.s32.totalorder %s12, 3
    %p215 = pnand %p213, %p214
    %p216 = pneg %p215
    // Predicated region
    $region41: #{resid_multiscale_block.1} parent=5 // pred_check
      _
    $region42: #{resid_multiscale_block.1} parent=5 // pred_check_branch
      %218 = sbr.rel (%p215) target = $region44
    $region43: #{resid_multiscale_block.1} parent=5 // pred_region
      %s219 = ssub.s32 %s12, 1
      %s220 = smul.u32 2, %s17
      %p221 = scmp.lt.s32.totalorder %s220, 3
      %s222 = scalar_select %p221, %s220, 3
      %s223 = smul.addr %s222, 2
      %s224 = smul.addr %s223, 4
      %s225 = scalar_lea.vmem %s0, %s224
      %p226 = pneg %p38
      %p227 = pneg %p35
      %p228 = pneg %p59
      %p229 = pneg %p56
      %p230 = pneg %p80
      %p231 = pneg %p77
      %p232 = pneg %p101
      %p233 = pneg %p98
      %p234 = pneg %p122
      %p235 = pneg %p119
      %p236 = pneg %p143
      %p237 = pneg %p140
      %p238 = pneg %p169
      %p239 = pneg %p166
      %s240 = smul.u32 2, %s17
      %p241 = scmp.lt.s32.totalorder %s240, 3
      %s242 = scalar_select %p241, %s240, 3
      %s243 = smul.addr %s242, 8
      %s244 = scalar_lea.vmem %s6, %s243
      %s245 = smul.u32 2, %s17
      %p246 = scmp.lt.s32.totalorder %s245, 3
      %s247 = scalar_select %p246, %s245, 3
      %s248 = smul.addr %s247, 2
      %s249 = smul.addr %s248, 4
      %s250 = scalar_lea.vmem %s0, %s249
      %s251 = smul.u32 2, %s17
      %s252 = smul.u32 2, %s17
      %p253 = scmp.lt.s32.totalorder %s252, 3
      %s254 = scalar_select %p253, %s252, 3
      %s255 = smul.addr %s254, 8
      %s256 = scalar_lea.vmem %s6, %s255
      %s257 = smul.u32 2, %s17
      %v259 = vld [vmem:[%s1] sm:$0x3]
      %vm260 = vcmp.lt.s32.totalorder %v259, 15
      %v261 = vsel %vm260, 1, 0
      %v262 = vlaneseq
      %v263 = vshrl.u32 %v262, 7
      %v264 = vsub.s32 0, %v263
      %v265 = vrot.slane %v261, %v264
      %v266 = vlaneseq
      %v267 = vshrl.u32 %v266, 7
      %v268 = vsub.s32 1, %v267
      %v269 = vrot.slane %v261, %v268
      %vm270 = vcmp.eq.s32.totalorder %v265, 1
      %vm271 = vcmp.eq.s32.totalorder %v269, 1
      %vm272 = vcmp.lt.s32.totalorder %v259, 14
      %v273 = vsel %vm272, 1, 0
      %v274 = vlaneseq
      %v275 = vshrl.u32 %v274, 7
      %v276 = vsub.s32 0, %v275
      %v277 = vrot.slane %v273, %v276
      %v278 = vlaneseq
      %v279 = vshrl.u32 %v278, 7
      %v280 = vsub.s32 1, %v279
      %v281 = vrot.slane %v273, %v280
      %vm282 = vcmp.eq.s32.totalorder %v277, 1
      %vm283 = vcmp.eq.s32.totalorder %v281, 1
      %vm284 = vcmp.ge.s32.totalorder %v259, 1
      %v285 = vsel %vm284, 1, 0
      %v286 = vlaneseq
      %v287 = vshrl.u32 %v286, 7
      %v288 = vsub.s32 0, %v287
      %v289 = vrot.slane %v285, %v288
      %v290 = vlaneseq
      %v291 = vshrl.u32 %v290, 7
      %v292 = vsub.s32 1, %v291
      %v293 = vrot.slane %v285, %v292
      %vm294 = vcmp.eq.s32.totalorder %v289, 1
      %vm295 = vcmp.eq.s32.totalorder %v293, 1
      %vm296 = vcmp.ge.s32.totalorder %v259, 2
      %v297 = vsel %vm296, 1, 0
      %v298 = vlaneseq
      %v299 = vshrl.u32 %v298, 7
      %v300 = vsub.s32 0, %v299
      %v301 = vrot.slane %v297, %v300
      %v302 = vlaneseq
      %v303 = vshrl.u32 %v302, 7
      %v304 = vsub.s32 1, %v303
      %v305 = vrot.slane %v297, %v304
      %vm306 = vcmp.eq.s32.totalorder %v301, 1
      %vm307 = vcmp.eq.s32.totalorder %v305, 1
      %vm308 = vcmask 388096
      %309 = vst.msk [vmem:[#allocation2] sm:$0xf] %vm308, -inf
      %vm310 = vcmask 781696
      %311 = vst.msk [vmem:[#allocation2 + $0x8] sm:$0xf] %vm310, -inf
      %vm312 = vcmask 58368
      %313 = vst.msk [vmem:[#allocation4 + $0x4] sm:$0x3] %vm312, 0
      %v314 = vld [vmem:[%s250] sm:$0xff]
      %v316 = vcombine.high %v314, %v314
      %v318 = vpack.c.bf16 %v314, %v314
      %v319 = vpack.c.bf16 %v316, %v316
      %v322 = vunpack.c.l.b16 %v318
      %v323 = vunpack.c.l.b16 %v319
      %v324 = vpack.c.b16 %v323, %v322
      %325 = vrot.lane.b32.xlu0 %v324, 60
      %v326 = vpop.permute.xlu0 %325
      %v327 = vrot.slane %v326, 4
      %vm328 = vcmask 490496
      %v329 = vsel %vm328, %v326, %v327
      %331 = vst [vmem:[#allocation6 + $0x18] sm:$0x3] %v329
      %v332 = vld [vmem:[%s250] sm:$0xff]
      %334 = vrot.lane.b32.xlu0 %v332, 48
      %v335 = vpop.permute.xlu0 %334
      %v336 = vrot.slane %v335, 4
      %vm337 = vcmask 392192
      %v338 = vsel %vm337, %v336, %v335
      %vm341 = vcmask 1043840
      %vm342 = vcmask 1047556
      %vm343 = vmor %vm342, %vm341
      %344 = vst.msk [vmem:[#allocation2] sm:$0xff] %vm343, %v338
      %345 = vst.msk [vmem:[#allocation2 + $0x8] sm:$0xf] %vm308, %v336
      %v346 = vld [vmem:[%s250] sm:$0xff]
      %v348 = vcombine.high %v346, %v346
      %v350 = vpack.c.bf16 %v346, %v346
      %v351 = vpack.c.bf16 %v348, %v348
      %v354 = vunpack.c.l.b16 %v350
      %v355 = vunpack.c.l.b16 %v351
      %v356 = vpack.c.b16 %v355, %v354
      %357 = vrot.lane.b32.xlu0 %v356, 77
      %v358 = vpop.permute.xlu0 %357
      %v359 = vrot.slane %v358, 4
      %vm360 = vcmask 629760
      %v361 = vsel %vm360, %v358, %v359
      %363 = vst [vmem:[#allocation5] sm:$0x3] %v361
      %v364 = vld [vmem:[%s250] sm:$0xff]
      %v366 = vcombine.high %v364, %v364
      %v368 = vpack.c.bf16 %v364, %v364
      %v369 = vpack.c.bf16 %v366, %v366
      %v372 = vunpack.c.l.b16 %v368
      %v373 = vunpack.c.l.b16 %v369
      %v374 = vpack.c.b16 %v373, %v372
      %v375 = vrot.slane %v374, 6
      %376 = vrot.lane.b32.xlu0 %v375, 76
      %v377 = vpop.permute.xlu0 %376
      %v378 = vrot.slane %v377, 4
      %vm379 = vcmask 621568
      %v380 = vsel %vm379, %v377, %v378
      %382 = vst [vmem:[#allocation5] sm:$0xc] %v380
      %v383 = vld [vmem:[%s250] sm:$0xff]
      %v385 = vcombine.high %v383, %v383
      %v387 = vpack.c.bf16 %v383, %v383
      %v388 = vpack.c.bf16 %v385, %v385
      %v391 = vunpack.c.l.b16 %v387
      %v392 = vunpack.c.l.b16 %v388
      %v393 = vpack.c.b16 %v392, %v391
      %394 = vrot.lane.b32.xlu0 %v393, 75
      %v395 = vpop.permute.xlu0 %394
      %v396 = vrot.slane %v395, 4
      %vm397 = vcmask 613376
      %v398 = vsel %vm397, %v395, %v396
      %400 = vst [vmem:[#allocation5 + $0x8] sm:$0x3] %v398
      %v401 = vld [vmem:[%s250] sm:$0xff]
      %v403 = vcombine.high %v401, %v401
      %v405 = vpack.c.bf16 %v401, %v401
      %v406 = vpack.c.bf16 %v403, %v403
      %v409 = vunpack.c.l.b16 %v405
      %v410 = vunpack.c.l.b16 %v406
      %v411 = vpack.c.b16 %v410, %v409
      %v412 = vrot.slane %v411, 6
      %413 = vrot.lane.b32.xlu0 %v412, 61
      %v414 = vpop.permute.xlu0 %413
      %v415 = vrot.slane %v414, 4
      %vm416 = vcmask 498688
      %v417 = vsel %vm416, %v414, %v415
      %419 = vst [vmem:[#allocation5 + $0x8] sm:$0xc] %v417
      %v420 = vld [vmem:[%s250] sm:$0xff]
      %v422 = vcombine.high %v420, %v420
      %v424 = vpack.c.bf16 %v420, %v420
      %v425 = vpack.c.bf16 %v422, %v422
      %v428 = vunpack.c.l.b16 %v424
      %v429 = vunpack.c.l.b16 %v425
      %v430 = vpack.c.b16 %v429, %v428
      %431 = vrot.lane.b32.xlu0 %v430, 60
      %v432 = vpop.permute.xlu0 %431
      %v433 = vrot.slane %v432, 4
      %v434 = vsel %vm328, %v432, %v433
      %436 = vst [vmem:[#allocation5 + $0x10] sm:$0x3] %v434
      %v437 = vld [vmem:[%s250] sm:$0xff]
      %v439 = vcombine.high %v437, %v437
      %v441 = vpack.c.bf16 %v437, %v437
      %v442 = vpack.c.bf16 %v439, %v439
      %v445 = vunpack.c.l.b16 %v441
      %v446 = vunpack.c.l.b16 %v442
      %v447 = vpack.c.b16 %v446, %v445
      %v448 = vrot.slane %v447, 6
      %449 = vrot.lane.b32.xlu0 %v448, 59
      %v450 = vpop.permute.xlu0 %449
      %v451 = vrot.slane %v450, 4
      %vm452 = vcmask 482304
      %v453 = vsel %vm452, %v450, %v451
      %455 = vst [vmem:[#allocation5 + $0x10] sm:$0xc] %v453
      %v456 = vld [vmem:[%s250] sm:$0xff]
      %v458 = vcombine.high %v456, %v456
      %v460 = vpack.c.bf16 %v456, %v456
      %v461 = vpack.c.bf16 %v458, %v458
      %v464 = vunpack.c.l.b16 %v460
      %v465 = vunpack.c.l.b16 %v461
      %v466 = vpack.c.b16 %v465, %v464
      %467 = vrot.lane.b32.xlu0 %v466, 45
      %v468 = vpop.permute.xlu0 %467
      %v469 = vrot.slane %v468, 4
      %vm470 = vcmask 367616
      %v471 = vsel %vm470, %v468, %v469
      %473 = vst [vmem:[#allocation5 + $0x18] sm:$0x3] %v471
      %v474 = vld [vmem:[%s250] sm:$0xff]
      %v476 = vcombine.high %v474, %v474
      %v478 = vpack.c.bf16 %v474, %v474
      %v479 = vpack.c.bf16 %v476, %v476
      %v482 = vunpack.c.l.b16 %v478
      %v483 = vunpack.c.l.b16 %v479
      %v484 = vpack.c.b16 %v483, %v482
      %v485 = vrot.slane %v484, 6
      %486 = vrot.lane.b32.xlu0 %v485, 44
      %v487 = vpop.permute.xlu0 %486
      %v488 = vrot.slane %v487, 4
      %vm489 = vcmask 359424
      %v490 = vsel %vm489, %v487, %v488
      %492 = vst [vmem:[#allocation5 + $0x18] sm:$0xc] %v490
      %v493 = vld [vmem:[%s250] sm:$0xff]
      %v495 = vcombine.high %v493, %v493
      %v497 = vpack.c.bf16 %v493, %v493
      %v498 = vpack.c.bf16 %v495, %v495
      %v501 = vunpack.c.l.b16 %v497
      %v502 = vunpack.c.l.b16 %v498
      %v503 = vpack.c.b16 %v502, %v501
      %504 = vrot.lane.b32.xlu0 %v503, 43
      %v505 = vpop.permute.xlu0 %504
      %v506 = vrot.slane %v505, 4
      %vm507 = vcmask 351232
      %v508 = vsel %vm507, %v505, %v506
      %510 = vst [vmem:[#allocation5 + $0x20] sm:$0x3] %v508
      %v511 = vld [vmem:[#allocation2] sm:$0xff]
      %v512 = vld [vmem:[#allocation2 + $0x8] sm:$0xf]
      %515 = vrot.lane.b32.xlu0 %v511, 112
      %v516 = vpop.permute.xlu0 %515
      %517 = vrot.lane.b32.xlu0 %v512, 112
      %v518 = vpop.permute.xlu0 %517
      %v519 = vrot.slane %v516, 4
      %v520 = vrot.slane %v518, 4
      %vm521 = vcmask 1043456
      %v522 = vsel %vm521, %v519, %v520
      %vm523 = vcmask 916480
      %v524 = vsel %vm523, %v516, %v522
      %v527 = vmax.f32 %v511, %v524
      %v528 = vmax.f32 %v512, %v518
      %529 = vrot.lane.b32.xlu0 %v511, 96
      %v530 = vpop.permute.xlu0 %529
      %531 = vrot.lane.b32.xlu0 %v512, 96
      %v532 = vpop.permute.xlu0 %531
      %v533 = vrot.slane %v530, 4
      %v534 = vrot.slane %v532, 4
      %v535 = vsel %vm521, %v533, %v534
      %vm536 = vcmask 785408
      %v537 = vsel %vm536, %v530, %v535
      %v540 = vmax.f32 %v527, %v537
      %v541 = vmax.f32 %v528, %v532
      %544 = vrot.lane.b32.xlu0 %v540, 99
      %v545 = vpop.permute.xlu0 %544
      %546 = vrot.lane.b32.xlu0 %v541, 99
      %v547 = vpop.permute.xlu0 %546
      %v548 = vrot.slane %v545, 4
      %v549 = vrot.slane %v547, 4
      %v550 = vsel %vm521, %v548, %v549
      %vm551 = vcmask 809984
      %v552 = vsel %vm551, %v545, %v550
      %vm555 = vcmask 1043480
      %vm556 = vmor %vm342, %vm555
      %557 = vst.msk [vmem:[#allocation3] sm:$0xff] %vm556, %v552
      %vm558 = vcmask 19456
      %559 = vst.msk [vmem:[#allocation3 + $0x8] sm:$0xf] %vm558, %v547
      %v560 = vld [vmem:[#allocation3] sm:$0xff]
      %v561 = vld [vmem:[#allocation3 + $0x8] sm:$0xf]
      %v564 = vcombine.high %v560, %v560
      %565 = vrot.lane.b32.xlu0 %v560, 124
      %v566 = vpop.permute.xlu0 %565
      %567 = vrot.lane.b32.xlu0 %v564, 124
      %v568 = vpop.permute.xlu0 %567
      %569 = vrot.lane.b32.xlu0 %v561, 124
      %v570 = vpop.permute.xlu0 %569
      %vm571 = vcmask 1014784
      %v572 = vsel %vm571, %v566, %v568
      %v573 = vsel %vm571, %v568, %v570
      %v576 = vsel %vm270, %v572, -inf
      %v577 = vsel %vm271, %v573, -inf
      %578 = vrot.lane.b32.xlu0 %v560, 126
      %v579 = vpop.permute.xlu0 %578
      %580 = vrot.lane.b32.xlu0 %v564, 126
      %v581 = vpop.permute.xlu0 %580
      %582 = vrot.lane.b32.xlu0 %v561, 126
      %v583 = vpop.permute.xlu0 %582
      %vm584 = vcmask 1031168
      %v585 = vsel %vm584, %v579, %v581
      %v586 = vsel %vm584, %v581, %v583
      %v589 = vsel %vm294, %v585, -inf
      %v590 = vsel %vm295, %v586, -inf
      %v591 = vmax.f32 %v576, %v589
      %v592 = vmax.f32 %v577, %v590
      %v595 = vcombine.low %v591, %v592
      %596 = vrot.lane.b32.xlu0 %v595, 32
      %v597 = vpop.permute.xlu0 %596
      %v598 = vrot.slane %v597, 4
      %vm599 = vcmask 261120
      %v600 = vsel %vm599, %v598, %v597
      %v603 = vmax.f32 %v540, %v600
      %v604 = vmax.f32 %v541, %v598
      %v607 = vcombine.high %v603, %v603
      %v609 = vpack.c.bf16 %v603, %v603
      %v610 = vpack.c.bf16 %v607, %v607
      %v611 = vpack.c.bf16 %v604, %v604
      %v615 = vcombine.low %v609, %v610
      %v617 = vunpack.c.l.s4 1983009808
      %v618 = vunpack.c.0.s8 %v617
      %v619 = vlaneseq
      %v620 = vshrl.u32 %v619, 7
      %v621 = vsub.s32 %v618, %v620
      %v622 = vrot.slane %v615, %v621
      %v624 = vunpack.c.l.s4 1983009808
      %v625 = vunpack.c.0.s8 %v624
      %v626 = vlaneseq
      %v627 = vshrl.u32 %v626, 7
      %v628 = vsub.s32 %v625, %v627
      %v629 = vrot.slane %v611, %v628
      %v630 = vcombine.low %v622, %v629
      %631 = vrot.lane.b32.xlu0 %v630, 96
      %v632 = vpop.permute.xlu0 %631
      %v633 = vrot.slane %v632, 2
      %vm634 = vcmask 785408
      %v635 = vsel %vm634, %v632, %v633
      %637 = vst [vmem:[#allocation4] sm:$0xf] %v635
      %v638 = vld [vmem:[#allocation4] sm:$0xf]
      %v641 = vunpack.c.l.s4 1983009808
      %v642 = vunpack.c.0.s8 %v641
      %v643 = vlaneseq
      %v644 = vshrl.u32 %v643, 7
      %v645 = vsub.s32 %v642, %v644
      %v646 = vrot.slane %v638, %v645
      %647 = vrot.lane.b32.xlu0 %v646, 94
      %v648 = vpop.permute.xlu0 %647
      %v649 = vrot.slane %v648, 4
      %vm650 = vcmask 769024
      %v651 = vsel %vm650, %v648, %v649
      %s653 = scalar_lea.vmem [#allocation5], 40
      %654 = vst [vmem:[%s653] sm:$0x3] %v651
      %v655 = vld [vmem:[#allocation4] sm:$0xf]
      %v657 = vcombine.low %v655, %v655
      %v659 = vunpack.c.l.s4 1983009808
      %v660 = vunpack.c.0.s8 %v659
      %v661 = vlaneseq
      %v662 = vshrl.u32 %v661, 7
      %v663 = vsub.s32 %v660, %v662
      %v664 = vrot.slane %v657, %v663
      %665 = vrot.lane.b32.xlu0 %v664, 92
      %v666 = vpop.permute.xlu0 %665
      %v667 = vrot.slane %v666, 4
      %vm668 = vcmask 752640
      %v669 = vsel %vm668, %v666, %v667
      %671 = vst [vmem:[%s653] sm:$0xc] %v669
      %v672 = vld [vmem:[#allocation4] sm:$0xf]
      %v675 = vunpack.c.l.s4 1983009808
      %v676 = vunpack.c.0.s8 %v675
      %v677 = vlaneseq
      %v678 = vshrl.u32 %v677, 7
      %v679 = vsub.s32 %v676, %v678
      %v680 = vrot.slane %v672, %v679
      %681 = vrot.lane.b32.xlu0 %v680, 90
      %v682 = vpop.permute.xlu0 %681
      %v683 = vrot.slane %v682, 4
      %vm684 = vcmask 736256
      %v685 = vsel %vm684, %v682, %v683
      %687 = vst [vmem:[%s653 + $0x8] sm:$0x3] %v685
      %v688 = vld [vmem:[#allocation4] sm:$0xf]
      %v690 = vcombine.low %v688, %v688
      %v692 = vunpack.c.l.s4 1983009808
      %v693 = vunpack.c.0.s8 %v692
      %v694 = vlaneseq
      %v695 = vshrl.u32 %v694, 7
      %v696 = vsub.s32 %v693, %v695
      %v697 = vrot.slane %v690, %v696
      %698 = vrot.lane.b32.xlu0 %v697, 62
      %v699 = vpop.permute.xlu0 %698
      %v700 = vrot.slane %v699, 4
      %vm701 = vcmask 506880
      %v702 = vsel %vm701, %v699, %v700
      %704 = vst [vmem:[%s653 + $0x8] sm:$0xc] %v702
      %v705 = vld [vmem:[#allocation4] sm:$0xf]
      %v708 = vunpack.c.l.s4 1983009808
      %v709 = vunpack.c.0.s8 %v708
      %v710 = vlaneseq
      %v711 = vshrl.u32 %v710, 7
      %v712 = vsub.s32 %v709, %v711
      %v713 = vrot.slane %v705, %v712
      %714 = vrot.lane.b32.xlu0 %v713, 60
      %v715 = vpop.permute.xlu0 %714
      %v716 = vrot.slane %v715, 4
      %v717 = vsel %vm328, %v715, %v716
      %719 = vst [vmem:[%s653 + $0x10] sm:$0x3] %v717
      %v720 = vld [vmem:[#allocation4] sm:$0xf]
      %v722 = vcombine.low %v720, %v720
      %v724 = vunpack.c.l.s4 1983009808
      %v725 = vunpack.c.0.s8 %v724
      %v726 = vlaneseq
      %v727 = vshrl.u32 %v726, 7
      %v728 = vsub.s32 %v725, %v727
      %v729 = vrot.slane %v722, %v728
      %730 = vrot.lane.b32.xlu0 %v729, 58
      %v731 = vpop.permute.xlu0 %730
      %v732 = vrot.slane %v731, 4
      %vm733 = vcmask 474112
      %v734 = vsel %vm733, %v731, %v732
      %736 = vst [vmem:[%s653 + $0x10] sm:$0xc] %v734
      %v737 = vld [vmem:[#allocation4] sm:$0xf]
      %v740 = vunpack.c.l.s4 1983009808
      %v741 = vunpack.c.0.s8 %v740
      %v742 = vlaneseq
      %v743 = vshrl.u32 %v742, 7
      %v744 = vsub.s32 %v741, %v743
      %v745 = vrot.slane %v737, %v744
      %746 = vrot.lane.b32.xlu0 %v745, 30
      %v747 = vpop.permute.xlu0 %746
      %v748 = vrot.slane %v747, 4
      %vm749 = vcmask 244736
      %v750 = vsel %vm749, %v747, %v748
      %752 = vst [vmem:[%s653 + $0x18] sm:$0x3] %v750
      %v753 = vld [vmem:[#allocation4] sm:$0xf]
      %v755 = vcombine.low %v753, %v753
      %v757 = vunpack.c.l.s4 1983009808
      %v758 = vunpack.c.0.s8 %v757
      %v759 = vlaneseq
      %v760 = vshrl.u32 %v759, 7
      %v761 = vsub.s32 %v758, %v760
      %v762 = vrot.slane %v755, %v761
      %763 = vrot.lane.b32.xlu0 %v762, 28
      %v764 = vpop.permute.xlu0 %763
      %v765 = vrot.slane %v764, 4
      %vm766 = vcmask 228352
      %v767 = vsel %vm766, %v764, %v765
      %769 = vst [vmem:[%s653 + $0x18] sm:$0xc] %v767
      %v770 = vld [vmem:[#allocation4] sm:$0xf]
      %v773 = vunpack.c.l.s4 1983009808
      %v774 = vunpack.c.0.s8 %v773
      %v775 = vlaneseq
      %v776 = vshrl.u32 %v775, 7
      %v777 = vsub.s32 %v774, %v776
      %v778 = vrot.slane %v770, %v777
      %779 = vrot.lane.b32.xlu0 %v778, 26
      %v780 = vpop.permute.xlu0 %779
      %v781 = vrot.slane %v780, 4
      %vm782 = vcmask 211968
      %v783 = vsel %vm782, %v780, %v781
      %785 = vst [vmem:[%s653 + $0x20] sm:$0x3] %v783
      %786 = vrot.lane.b32.xlu0 %v603, 16
      %v787 = vpop.permute.xlu0 %786
      %788 = vrot.lane.b32.xlu0 %v604, 16
      %v789 = vpop.permute.xlu0 %788
      %v790 = vrot.slane %v787, 4
      %vm791 = vcmask 130048
      %v792 = vsel %vm791, %v790, %v787
      %v793 = vsel %vm791, %v790, %v789
      %796 = vst.msk [vmem:[#allocation2] sm:$0xff] %vm343, %v792
      %797 = vst.msk [vmem:[#allocation2 + $0x8] sm:$0xf] %vm308, %v793
      %v798 = vld [vmem:[#allocation2] sm:$0xff]
      %v799 = vld [vmem:[#allocation2 + $0x8] sm:$0xf]
      %802 = vrot.lane.b32.xlu0 %v798, 112
      %v803 = vpop.permute.xlu0 %802
      %804 = vrot.lane.b32.xlu0 %v799, 112
      %v805 = vpop.permute.xlu0 %804
      %v806 = vrot.slane %v803, 4
      %v807 = vrot.slane %v805, 4
      %v808 = vsel %vm521, %v806, %v807
      %v809 = vsel %vm523, %v803, %v808
      %v812 = vmax.f32 %v798, %v809
      %v813 = vmax.f32 %v799, %v805
      %814 = vrot.lane.b32.xlu0 %v798, 96
      %v815 = vpop.permute.xlu0 %814
      %816 = vrot.lane.b32.xlu0 %v799, 96
      %v817 = vpop.permute.xlu0 %816
      %v818 = vrot.slane %v815, 4
      %v819 = vrot.slane %v817, 4
      %v820 = vsel %vm521, %v818, %v819
      %v821 = vsel %vm536, %v815, %v820
      %v824 = vmax.f32 %v812, %v821
      %v825 = vmax.f32 %v813, %v817
      %826 = vrot.lane.b32.xlu0 %v798, 80
      %v827 = vpop.permute.xlu0 %826
      %828 = vrot.lane.b32.xlu0 %v799, 80
      %v829 = vpop.permute.xlu0 %828
      %v830 = vrot.slane %v827, 4
      %v831 = vrot.slane %v829, 4
      %v832 = vsel %vm521, %v830, %v831
      %vm833 = vcmask 654336
      %v834 = vsel %vm833, %v827, %v832
      %v837 = vmax.f32 %v824, %v834
      %v838 = vmax.f32 %v825, %v829
      %839 = vrot.lane.b32.xlu0 %v798, 64
      %v840 = vpop.permute.xlu0 %839
      %841 = vrot.lane.b32.xlu0 %v799, 64
      %v842 = vpop.permute.xlu0 %841
      %v843 = vrot.slane %v840, 4
      %v844 = vrot.slane %v842, 4
      %v845 = vsel %vm521, %v843, %v844
      %vm846 = vcmask 523264
      %v847 = vsel %vm846, %v840, %v845
      %v850 = vmax.f32 %v837, %v847
      %v851 = vmax.f32 %v838, %v842
      %854 = vrot.lane.b32.xlu0 %v850, 115
      %v855 = vpop.permute.xlu0 %854
      %856 = vrot.lane.b32.xlu0 %v851, 115
      %v857 = vpop.permute.xlu0 %856
      %v858 = vrot.slane %v855, 4
      %v859 = vrot.slane %v857, 4
      %v860 = vsel %vm521, %v858, %v859
      %vm861 = vcmask 941056
      %v862 = vsel %vm861, %v855, %v860
      %865 = vst.msk [vmem:[#allocation3] sm:$0xff] %vm556, %v862
      %866 = vst.msk [vmem:[#allocation3 + $0x8] sm:$0xf] %vm558, %v857
      %v867 = vld [vmem:[#allocation3] sm:$0xff]
      %v868 = vld [vmem:[#allocation3 + $0x8] sm:$0xf]
      %v871 = vcombine.high %v867, %v867
      %872 = vrot.lane.b32.xlu0 %v867, 124
      %v873 = vpop.permute.xlu0 %872
      %874 = vrot.lane.b32.xlu0 %v871, 124
      %v875 = vpop.permute.xlu0 %874
      %876 = vrot.lane.b32.xlu0 %v868, 124
      %v877 = vpop.permute.xlu0 %876
      %v878 = vsel %vm571, %v873, %v875
      %v879 = vsel %vm571, %v875, %v877
      %v882 = vsel %vm270, %v878, -inf
      %v883 = vsel %vm271, %v879, -inf
      %884 = vrot.lane.b32.xlu0 %v867, 126
      %v885 = vpop.permute.xlu0 %884
      %886 = vrot.lane.b32.xlu0 %v871, 126
      %v887 = vpop.permute.xlu0 %886
      %888 = vrot.lane.b32.xlu0 %v868, 126
      %v889 = vpop.permute.xlu0 %888
      %v890 = vsel %vm584, %v885, %v887
      %v891 = vsel %vm584, %v887, %v889
      %v894 = vsel %vm294, %v890, -inf
      %v895 = vsel %vm295, %v891, -inf
      %v896 = vmax.f32 %v882, %v894
      %v897 = vmax.f32 %v883, %v895
      %v900 = vcombine.low %v896, %v897
      %901 = vrot.lane.b32.xlu0 %v900, 16
      %v902 = vpop.permute.xlu0 %901
      %v903 = vrot.slane %v902, 4
      %v904 = vsel %vm791, %v903, %v902
      %v907 = vmax.f32 %v850, %v904
      %v908 = vmax.f32 %v851, %v903
      %909 = vrot.lane.b32.xlu0 %v867, 123
      %v910 = vpop.permute.xlu0 %909
      %911 = vrot.lane.b32.xlu0 %v871, 123
      %v912 = vpop.permute.xlu0 %911
      %913 = vrot.lane.b32.xlu0 %v868, 123
      %v914 = vpop.permute.xlu0 %913
      %vm915 = vcmask 1006592
      %v916 = vsel %vm915, %v910, %v912
      %v917 = vsel %vm915, %v912, %v914
      %v920 = vsel %vm282, %v916, -inf
      %v921 = vsel %vm283, %v917, -inf
      %922 = vrot.lane.b32.xlu0 %v867, 127
      %v923 = vpop.permute.xlu0 %922
      %924 = vrot.lane.b32.xlu0 %v871, 127
      %v925 = vpop.permute.xlu0 %924
      %926 = vrot.lane.b32.xlu0 %v868, 127
      %v927 = vpop.permute.xlu0 %926
      %vm928 = vcmask 1039360
      %v929 = vsel %vm928, %v923, %v925
      %v930 = vsel %vm928, %v925, %v927
      %v933 = vsel %vm306, %v929, -inf
      %v934 = vsel %vm307, %v930, -inf
      %v935 = vmax.f32 %v920, %v933
      %v936 = vmax.f32 %v921, %v934
      %v939 = vcombine.low %v935, %v936
      %940 = vrot.lane.b32.xlu0 %v939, 16
      %v941 = vpop.permute.xlu0 %940
      %v942 = vrot.slane %v941, 4
      %v943 = vsel %vm791, %v942, %v941
      %v946 = vmax.f32 %v907, %v943
      %v947 = vmax.f32 %v908, %v942
      %v949 = vcombine.high %v946, %v946
      %v951 = vpack.c.bf16 %v946, %v946
      %v952 = vpack.c.bf16 %v949, %v949
      %v953 = vpack.c.bf16 %v947, %v947
      %v957 = vcombine.low %v951, %v952
      %v959 = vunpack.c.l.s4 1983009808
      %v960 = vunpack.c.0.s8 %v959
      %v961 = vlaneseq
      %v962 = vshrl.u32 %v961, 7
      %v963 = vsub.s32 %v960, %v962
      %v964 = vrot.slane %v957, %v963
      %v966 = vunpack.c.l.s4 1983009808
      %v967 = vunpack.c.0.s8 %v966
      %v968 = vlaneseq
      %v969 = vshrl.u32 %v968, 7
      %v970 = vsub.s32 %v967, %v969
      %v971 = vrot.slane %v953, %v970
      %v972 = vcombine.low %v964, %v971
      %973 = vrot.lane.b32.xlu0 %v972, 112
      %v974 = vpop.permute.xlu0 %973
      %v975 = vrot.slane %v974, 2
      %vm976 = vcmask 916480
      %v977 = vsel %vm976, %v974, %v975
      %979 = vst [vmem:[#allocation4] sm:$0xf] %v977
      %v980 = vld [vmem:[#allocation4] sm:$0x3]
      %s981 = scalar_lea.vmem [#allocation5], 80
      %982 = vst [vmem:[%s981] sm:$0x3] %v980
      %v983 = vld [vmem:[#allocation4] sm:$0xf]
      %v985 = vcombine.low %v983, %v983
      %v987 = vunpack.c.l.s4 1983009808
      %v988 = vunpack.c.0.s8 %v987
      %v989 = vlaneseq
      %v990 = vshrl.u32 %v989, 7
      %v991 = vsub.s32 %v988, %v990
      %v992 = vrot.slane %v985, %v991
      %993 = vrot.lane.b32.xlu0 %v992, 124
      %v994 = vpop.permute.xlu0 %993
      %v995 = vrot.slane %v994, 4
      %vm996 = vcmask 1014784
      %v997 = vsel %vm996, %v994, %v995
      %999 = vst [vmem:[%s981] sm:$0xc] %v997
      %v1000 = vld [vmem:[#allocation4] sm:$0xf]
      %v1003 = vunpack.c.l.s4 1983009808
      %v1004 = vunpack.c.0.s8 %v1003
      %v1005 = vlaneseq
      %v1006 = vshrl.u32 %v1005, 7
      %v1007 = vsub.s32 %v1004, %v1006
      %v1008 = vrot.slane %v1000, %v1007
      %1009 = vrot.lane.b32.xlu0 %v1008, 120
      %v1010 = vpop.permute.xlu0 %1009
      %v1011 = vrot.slane %v1010, 4
      %vm1012 = vcmask 982016
      %v1013 = vsel %vm1012, %v1010, %v1011
      %1015 = vst [vmem:[%s981 + $0x8] sm:$0x3] %v1013
      %v1016 = vld [vmem:[#allocation4] sm:$0xf]
      %v1018 = vcombine.low %v1016, %v1016
      %v1020 = vunpack.c.l.s4 1983009808
      %v1021 = vunpack.c.0.s8 %v1020
      %v1022 = vlaneseq
      %v1023 = vshrl.u32 %v1022, 7
      %v1024 = vsub.s32 %v1021, %v1023
      %v1025 = vrot.slane %v1018, %v1024
      %1026 = vrot.lane.b32.xlu0 %v1025, 64
      %v1027 = vpop.permute.xlu0 %1026
      %v1028 = vrot.slane %v1027, 4
      %vm1029 = vcmask 523264
      %v1030 = vsel %vm1029, %v1027, %v1028
      %1032 = vst [vmem:[%s981 + $0x8] sm:$0xc] %v1030
      %v1033 = vld [vmem:[#allocation4] sm:$0xf]
      %v1036 = vunpack.c.l.s4 1983009808
      %v1037 = vunpack.c.0.s8 %v1036
      %v1038 = vlaneseq
      %v1039 = vshrl.u32 %v1038, 7
      %v1040 = vsub.s32 %v1037, %v1039
      %v1041 = vrot.slane %v1033, %v1040
      %1042 = vrot.lane.b32.xlu0 %v1041, 60
      %v1043 = vpop.permute.xlu0 %1042
      %v1044 = vrot.slane %v1043, 4
      %v1045 = vsel %vm328, %v1043, %v1044
      %1047 = vst [vmem:[%s981 + $0x10] sm:$0x3] %v1045
      %v1048 = vld [vmem:[#allocation4] sm:$0xf]
      %v1050 = vcombine.low %v1048, %v1048
      %v1052 = vunpack.c.l.s4 1983009808
      %v1053 = vunpack.c.0.s8 %v1052
      %v1054 = vlaneseq
      %v1055 = vshrl.u32 %v1054, 7
      %v1056 = vsub.s32 %v1053, %v1055
      %v1057 = vrot.slane %v1050, %v1056
      %1058 = vrot.lane.b32.xlu0 %v1057, 56
      %v1059 = vpop.permute.xlu0 %1058
      %v1060 = vrot.slane %v1059, 4
      %vm1061 = vcmask 457728
      %v1062 = vsel %vm1061, %v1059, %v1060
      %1064 = vst [vmem:[%s981 + $0x10] sm:$0xc] %v1062
      %v1065 = vld [vmem:[#allocation4 + $0x2] sm:$0x3]
      %1066 = vst [vmem:[%s981 + $0x18] sm:$0x3] %v1065
      %v1067 = vld [vmem:[#allocation4 + $0x2] sm:$0xf]
      %v1069 = vcombine.low %v1067, %v1067
      %v1071 = vunpack.c.l.s4 1983009808
      %v1072 = vunpack.c.0.s8 %v1071
      %v1073 = vlaneseq
      %v1074 = vshrl.u32 %v1073, 7
      %v1075 = vsub.s32 %v1072, %v1074
      %v1076 = vrot.slane %v1069, %v1075
      %1077 = vrot.lane.b32.xlu0 %v1076, 124
      %v1078 = vpop.permute.xlu0 %1077
      %v1079 = vrot.slane %v1078, 4
      %v1080 = vsel %vm996, %v1078, %v1079
      %1082 = vst [vmem:[%s981 + $0x18] sm:$0xc] %v1080
      %v1083 = vld [vmem:[#allocation4 + $0x2] sm:$0xf]
      %v1086 = vunpack.c.l.s4 1983009808
      %v1087 = vunpack.c.0.s8 %v1086
      %v1088 = vlaneseq
      %v1089 = vshrl.u32 %v1088, 7
      %v1090 = vsub.s32 %v1087, %v1089
      %v1091 = vrot.slane %v1083, %v1090
      %1092 = vrot.lane.b32.xlu0 %v1091, 120
      %v1093 = vpop.permute.xlu0 %1092
      %v1094 = vrot.slane %v1093, 4
      %v1095 = vsel %vm1012, %v1093, %v1094
      %1097 = vst [vmem:[%s981 + $0x20] sm:$0x3] %v1095
      %s1098 = scalar_lea.vmem %s250, 8
      %v1099 = vld [vmem:[%s1098] sm:$0xff]
      %v1101 = vcombine.high %v1099, %v1099
      %v1103 = vpack.c.bf16 %v1099, %v1099
      %v1104 = vpack.c.bf16 %v1101, %v1101
      %v1107 = vunpack.c.l.b16 %v1103
      %v1108 = vunpack.c.l.b16 %v1104
      %v1109 = vpack.c.b16 %v1108, %v1107
      %1110 = vrot.lane.b32.xlu0 %v1109, 60
      %v1111 = vpop.permute.xlu0 %1110
      %v1112 = vrot.slane %v1111, 4
      %v1113 = vsel %vm328, %v1111, %v1112
      %1115 = vst [vmem:[#allocation6 + $0x1c] sm:$0x3] %v1113
      %v1116 = vld [vmem:[%s1098] sm:$0xff]
      %1118 = vrot.lane.b32.xlu0 %v1116, 48
      %v1119 = vpop.permute.xlu0 %1118
      %v1120 = vrot.slane %v1119, 4
      %v1121 = vsel %vm337, %v1120, %v1119
      %1124 = vst.msk [vmem:[#allocation2] sm:$0xff] %vm343, %v1121
      %1125 = vst.msk [vmem:[#allocation2 + $0x8] sm:$0xf] %vm308, %v1120
      %v1126 = vld [vmem:[%s1098] sm:$0xff]
      %v1128 = vcombine.high %v1126, %v1126
      %v1130 = vpack.c.bf16 %v1126, %v1126
      %v1131 = vpack.c.bf16 %v1128, %v1128
      %v1134 = vunpack.c.l.b16 %v1130
      %v1135 = vunpack.c.l.b16 %v1131
      %v1136 = vpack.c.b16 %v1135, %v1134
      %1137 = vrot.lane.b32.xlu0 %v1136, 77
      %v1138 = vpop.permute.xlu0 %1137
      %v1139 = vrot.slane %v1138, 4
      %v1140 = vsel %vm360, %v1138, %v1139
      %1142 = vst [vmem:[#allocation5 + $0x4] sm:$0x3] %v1140
      %v1143 = vld [vmem:[%s1098] sm:$0xff]
      %v1145 = vcombine.high %v1143, %v1143
      %v1147 = vpack.c.bf16 %v1143, %v1143
      %v1148 = vpack.c.bf16 %v1145, %v1145
      %v1151 = vunpack.c.l.b16 %v1147
      %v1152 = vunpack.c.l.b16 %v1148
      %v1153 = vpack.c.b16 %v1152, %v1151
      %v1154 = vrot.slane %v1153, 6
      %1155 = vrot.lane.b32.xlu0 %v1154, 76
      %v1156 = vpop.permute.xlu0 %1155
      %v1157 = vrot.slane %v1156, 4
      %v1158 = vsel %vm379, %v1156, %v1157
      %1160 = vst [vmem:[#allocation5 + $0x4] sm:$0xc] %v1158
      %v1161 = vld [vmem:[%s1098] sm:$0xff]
      %v1163 = vcombine.high %v1161, %v1161
      %v1165 = vpack.c.bf16 %v1161, %v1161
      %v1166 = vpack.c.bf16 %v1163, %v1163
      %v1169 = vunpack.c.l.b16 %v1165
      %v1170 = vunpack.c.l.b16 %v1166
      %v1171 = vpack.c.b16 %v1170, %v1169
      %1172 = vrot.lane.b32.xlu0 %v1171, 75
      %v1173 = vpop.permute.xlu0 %1172
      %v1174 = vrot.slane %v1173, 4
      %v1175 = vsel %vm397, %v1173, %v1174
      %1177 = vst [vmem:[#allocation5 + $0xc] sm:$0x3] %v1175
      %v1178 = vld [vmem:[%s1098] sm:$0xff]
      %v1180 = vcombine.high %v1178, %v1178
      %v1182 = vpack.c.bf16 %v1178, %v1178
      %v1183 = vpack.c.bf16 %v1180, %v1180
      %v1186 = vunpack.c.l.b16 %v1182
      %v1187 = vunpack.c.l.b16 %v1183
      %v1188 = vpack.c.b16 %v1187, %v1186
      %v1189 = vrot.slane %v1188, 6
      %1190 = vrot.lane.b32.xlu0 %v1189, 61
      %v1191 = vpop.permute.xlu0 %1190
      %v1192 = vrot.slane %v1191, 4
      %v1193 = vsel %vm416, %v1191, %v1192
      %1195 = vst [vmem:[#allocation5 + $0xc] sm:$0xc] %v1193
      %v1196 = vld [vmem:[%s1098] sm:$0xff]
      %v1198 = vcombine.high %v1196, %v1196
      %v1200 = vpack.c.bf16 %v1196, %v1196
      %v1201 = vpack.c.bf16 %v1198, %v1198
      %v1204 = vunpack.c.l.b16 %v1200
      %v1205 = vunpack.c.l.b16 %v1201
      %v1206 = vpack.c.b16 %v1205, %v1204
      %1207 = vrot.lane.b32.xlu0 %v1206, 60
      %v1208 = vpop.permute.xlu0 %1207
      %v1209 = vrot.slane %v1208, 4
      %v1210 = vsel %vm328, %v1208, %v1209
      %1212 = vst [vmem:[#allocation5 + $0x14] sm:$0x3] %v1210
      %v1213 = vld [vmem:[%s1098] sm:$0xff]
      %v1215 = vcombine.high %v1213, %v1213
      %v1217 = vpack.c.bf16 %v1213, %v1213
      %v1218 = vpack.c.bf16 %v1215, %v1215
      %v1221 = vunpack.c.l.b16 %v1217
      %v1222 = vunpack.c.l.b16 %v1218
      %v1223 = vpack.c.b16 %v1222, %v1221
      %v1224 = vrot.slane %v1223, 6
      %1225 = vrot.lane.b32.xlu0 %v1224, 59
      %v1226 = vpop.permute.xlu0 %1225
      %v1227 = vrot.slane %v1226, 4
      %v1228 = vsel %vm452, %v1226, %v1227
      %1230 = vst [vmem:[#allocation5 + $0x14] sm:$0xc] %v1228
      %v1231 = vld [vmem:[%s1098] sm:$0xff]
      %v1233 = vcombine.high %v1231, %v1231
      %v1235 = vpack.c.bf16 %v1231, %v1231
      %v1236 = vpack.c.bf16 %v1233, %v1233
      %v1239 = vunpack.c.l.b16 %v1235
      %v1240 = vunpack.c.l.b16 %v1236
      %v1241 = vpack.c.b16 %v1240, %v1239
      %1242 = vrot.lane.b32.xlu0 %v1241, 45
      %v1243 = vpop.permute.xlu0 %1242
      %v1244 = vrot.slane %v1243, 4
      %v1245 = vsel %vm470, %v1243, %v1244
      %1247 = vst [vmem:[#allocation5 + $0x1c] sm:$0x3] %v1245
      %v1248 = vld [vmem:[%s1098] sm:$0xff]
      %v1250 = vcombine.high %v1248, %v1248
      %v1252 = vpack.c.bf16 %v1248, %v1248
      %v1253 = vpack.c.bf16 %v1250, %v1250
      %v1256 = vunpack.c.l.b16 %v1252
      %v1257 = vunpack.c.l.b16 %v1253
      %v1258 = vpack.c.b16 %v1257, %v1256
      %v1259 = vrot.slane %v1258, 6
      %1260 = vrot.lane.b32.xlu0 %v1259, 44
      %v1261 = vpop.permute.xlu0 %1260
      %v1262 = vrot.slane %v1261, 4
      %v1263 = vsel %vm489, %v1261, %v1262
      %1265 = vst [vmem:[#allocation5 + $0x1c] sm:$0xc] %v1263
      %v1266 = vld [vmem:[%s1098] sm:$0xff]
      %v1268 = vcombine.high %v1266, %v1266
      %v1270 = vpack.c.bf16 %v1266, %v1266
      %v1271 = vpack.c.bf16 %v1268, %v1268
      %v1274 = vunpack.c.l.b16 %v1270
      %v1275 = vunpack.c.l.b16 %v1271
      %v1276 = vpack.c.b16 %v1275, %v1274
      %1277 = vrot.lane.b32.xlu0 %v1276, 43
      %v1278 = vpop.permute.xlu0 %1277
      %v1279 = vrot.slane %v1278, 4
      %v1280 = vsel %vm507, %v1278, %v1279
      %1282 = vst [vmem:[#allocation5 + $0x24] sm:$0x3] %v1280
      %v1283 = vld [vmem:[#allocation2] sm:$0xff]
      %v1284 = vld [vmem:[#allocation2 + $0x8] sm:$0xf]
      %1287 = vrot.lane.b32.xlu0 %v1283, 112
      %v1288 = vpop.permute.xlu0 %1287
      %1289 = vrot.lane.b32.xlu0 %v1284, 112
      %v1290 = vpop.permute.xlu0 %1289
      %v1291 = vrot.slane %v1288, 4
      %v1292 = vrot.slane %v1290, 4
      %v1293 = vsel %vm521, %v1291, %v1292
      %v1294 = vsel %vm523, %v1288, %v1293
      %v1297 = vmax.f32 %v1283, %v1294
      %v1298 = vmax.f32 %v1284, %v1290
      %1299 = vrot.lane.b32.xlu0 %v1283, 96
      %v1300 = vpop.permute.xlu0 %1299
      %1301 = vrot.lane.b32.xlu0 %v1284, 96
      %v1302 = vpop.permute.xlu0 %1301
      %v1303 = vrot.slane %v1300, 4
      %v1304 = vrot.slane %v1302, 4
      %v1305 = vsel %vm521, %v1303, %v1304
      %v1306 = vsel %vm536, %v1300, %v1305
      %v1309 = vmax.f32 %v1297, %v1306
      %v1310 = vmax.f32 %v1298, %v1302
      %1313 = vrot.lane.b32.xlu0 %v1309, 99
      %v1314 = vpop.permute.xlu0 %1313
      %1315 = vrot.lane.b32.xlu0 %v1310, 99
      %v1316 = vpop.permute.xlu0 %1315
      %v1317 = vrot.slane %v1314, 4
      %v1318 = vrot.slane %v1316, 4
      %v1319 = vsel %vm521, %v1317, %v1318
      %v1320 = vsel %vm551, %v1314, %v1319
      %1323 = vst.msk [vmem:[#allocation3] sm:$0xff] %vm556, %v1320
      %1324 = vst.msk [vmem:[#allocation3 + $0x8] sm:$0xf] %vm558, %v1316
      %v1325 = vld [vmem:[#allocation3] sm:$0xff]
      %v1326 = vld [vmem:[#allocation3 + $0x8] sm:$0xf]
      %v1329 = vcombine.high %v1325, %v1325
      %1330 = vrot.lane.b32.xlu0 %v1325, 124
      %v1331 = vpop.permute.xlu0 %1330
      %1332 = vrot.lane.b32.xlu0 %v1329, 124
      %v1333 = vpop.permute.xlu0 %1332
      %1334 = vrot.lane.b32.xlu0 %v1326, 124
      %v1335 = vpop.permute.xlu0 %1334
      %v1336 = vsel %vm571, %v1331, %v1333
      %v1337 = vsel %vm571, %v1333, %v1335
      %v1340 = vsel %vm270, %v1336, -inf
      %v1341 = vsel %vm271, %v1337, -inf
      %1342 = vrot.lane.b32.xlu0 %v1325, 126
      %v1343 = vpop.permute.xlu0 %1342
      %1344 = vrot.lane.b32.xlu0 %v1329, 126
      %v1345 = vpop.permute.xlu0 %1344
      %1346 = vrot.lane.b32.xlu0 %v1326, 126
      %v1347 = vpop.permute.xlu0 %1346
      %v1348 = vsel %vm584, %v1343, %v1345
      %v1349 = vsel %vm584, %v1345, %v1347
      %v1352 = vsel %vm294, %v1348, -inf
      %v1353 = vsel %vm295, %v1349, -inf
      %v1354 = vmax.f32 %v1340, %v1352
      %v1355 = vmax.f32 %v1341, %v1353
      %v1358 = vcombine.low %v1354, %v1355
      %1359 = vrot.lane.b32.xlu0 %v1358, 32
      %v1360 = vpop.permute.xlu0 %1359
      %v1361 = vrot.slane %v1360, 4
      %v1362 = vsel %vm599, %v1361, %v1360
      %v1365 = vmax.f32 %v1309, %v1362
      %v1366 = vmax.f32 %v1310, %v1361
      %v1369 = vcombine.high %v1365, %v1365
      %v1371 = vpack.c.bf16 %v1365, %v1365
      %v1372 = vpack.c.bf16 %v1369, %v1369
      %v1373 = vpack.c.bf16 %v1366, %v1366
      %v1377 = vcombine.low %v1371, %v1372
      %v1379 = vunpack.c.l.s4 1983009808
      %v1380 = vunpack.c.0.s8 %v1379
      %v1381 = vlaneseq
      %v1382 = vshrl.u32 %v1381, 7
      %v1383 = vsub.s32 %v1380, %v1382
      %v1384 = vrot.slane %v1377, %v1383
      %v1386 = vunpack.c.l.s4 1983009808
      %v1387 = vunpack.c.0.s8 %v1386
      %v1388 = vlaneseq
      %v1389 = vshrl.u32 %v1388, 7
      %v1390 = vsub.s32 %v1387, %v1389
      %v1391 = vrot.slane %v1373, %v1390
      %v1392 = vcombine.low %v1384, %v1391
      %1393 = vrot.lane.b32.xlu0 %v1392, 96
      %v1394 = vpop.permute.xlu0 %1393
      %v1395 = vrot.slane %v1394, 2
      %v1396 = vsel %vm634, %v1394, %v1395
      %1398 = vst [vmem:[#allocation4] sm:$0xf] %v1396
      %v1399 = vld [vmem:[#allocation4] sm:$0xf]
      %v1402 = vunpack.c.l.s4 1983009808
      %v1403 = vunpack.c.0.s8 %v1402
      %v1404 = vlaneseq
      %v1405 = vshrl.u32 %v1404, 7
      %v1406 = vsub.s32 %v1403, %v1405
      %v1407 = vrot.slane %v1399, %v1406
      %1408 = vrot.lane.b32.xlu0 %v1407, 94
      %v1409 = vpop.permute.xlu0 %1408
      %v1410 = vrot.slane %v1409, 4
      %v1411 = vsel %vm650, %v1409, %v1410
      %1413 = vst [vmem:[%s653 + $0x4] sm:$0x3] %v1411
      %v1414 = vld [vmem:[#allocation4] sm:$0xf]
      %v1416 = vcombine.low %v1414, %v1414
      %v1418 = vunpack.c.l.s4 1983009808
      %v1419 = vunpack.c.0.s8 %v1418
      %v1420 = vlaneseq
      %v1421 = vshrl.u32 %v1420, 7
      %v1422 = vsub.s32 %v1419, %v1421
      %v1423 = vrot.slane %v1416, %v1422
      %1424 = vrot.lane.b32.xlu0 %v1423, 92
      %v1425 = vpop.permute.xlu0 %1424
      %v1426 = vrot.slane %v1425, 4
      %v1427 = vsel %vm668, %v1425, %v1426
      %1429 = vst [vmem:[%s653 + $0x4] sm:$0xc] %v1427
      %v1430 = vld [vmem:[#allocation4] sm:$0xf]
      %v1433 = vunpack.c.l.s4 1983009808
      %v1434 = vunpack.c.0.s8 %v1433
      %v1435 = vlaneseq
      %v1436 = vshrl.u32 %v1435, 7
      %v1437 = vsub.s32 %v1434, %v1436
      %v1438 = vrot.slane %v1430, %v1437
      %1439 = vrot.lane.b32.xlu0 %v1438, 90
      %v1440 = vpop.permute.xlu0 %1439
      %v1441 = vrot.slane %v1440, 4
      %v1442 = vsel %vm684, %v1440, %v1441
      %1444 = vst [vmem:[%s653 + $0xc] sm:$0x3] %v1442
      %v1445 = vld [vmem:[#allocation4] sm:$0xf]
      %v1447 = vcombine.low %v1445, %v1445
      %v1449 = vunpack.c.l.s4 1983009808
      %v1450 = vunpack.c.0.s8 %v1449
      %v1451 = vlaneseq
      %v1452 = vshrl.u32 %v1451, 7
      %v1453 = vsub.s32 %v1450, %v1452
      %v1454 = vrot.slane %v1447, %v1453
      %1455 = vrot.lane.b32.xlu0 %v1454, 62
      %v1456 = vpop.permute.xlu0 %1455
      %v1457 = vrot.slane %v1456, 4
      %v1458 = vsel %vm701, %v1456, %v1457
      %1460 = vst [vmem:[%s653 + $0xc] sm:$0xc] %v1458
      %v1461 = vld [vmem:[#allocation4] sm:$0xf]
      %v1464 = vunpack.c.l.s4 1983009808
      %v1465 = vunpack.c.0.s8 %v1464
      %v1466 = vlaneseq
      %v1467 = vshrl.u32 %v1466, 7
      %v1468 = vsub.s32 %v1465, %v1467
      %v1469 = vrot.slane %v1461, %v1468
      %1470 = vrot.lane.b32.xlu0 %v1469, 60
      %v1471 = vpop.permute.xlu0 %1470
      %v1472 = vrot.slane %v1471, 4
      %v1473 = vsel %vm328, %v1471, %v1472
      %1475 = vst [vmem:[%s653 + $0x14] sm:$0x3] %v1473
      %v1476 = vld [vmem:[#allocation4] sm:$0xf]
      %v1478 = vcombine.low %v1476, %v1476
      %v1480 = vunpack.c.l.s4 1983009808
      %v1481 = vunpack.c.0.s8 %v1480
      %v1482 = vlaneseq
      %v1483 = vshrl.u32 %v1482, 7
      %v1484 = vsub.s32 %v1481, %v1483
      %v1485 = vrot.slane %v1478, %v1484
      %1486 = vrot.lane.b32.xlu0 %v1485, 58
      %v1487 = vpop.permute.xlu0 %1486
      %v1488 = vrot.slane %v1487, 4
      %v1489 = vsel %vm733, %v1487, %v1488
      %1491 = vst [vmem:[%s653 + $0x14] sm:$0xc] %v1489
      %v1492 = vld [vmem:[#allocation4] sm:$0xf]
      %v1495 = vunpack.c.l.s4 1983009808
      %v1496 = vunpack.c.0.s8 %v1495
      %v1497 = vlaneseq
      %v1498 = vshrl.u32 %v1497, 7
      %v1499 = vsub.s32 %v1496, %v1498
      %v1500 = vrot.slane %v1492, %v1499
      %1501 = vrot.lane.b32.xlu0 %v1500, 30
      %v1502 = vpop.permute.xlu0 %1501
      %v1503 = vrot.slane %v1502, 4
      %v1504 = vsel %vm749, %v1502, %v1503
      %1506 = vst [vmem:[%s653 + $0x1c] sm:$0x3] %v1504
      %v1507 = vld [vmem:[#allocation4] sm:$0xf]
      %v1509 = vcombine.low %v1507, %v1507
      %v1511 = vunpack.c.l.s4 1983009808
      %v1512 = vunpack.c.0.s8 %v1511
      %v1513 = vlaneseq
      %v1514 = vshrl.u32 %v1513, 7
      %v1515 = vsub.s32 %v1512, %v1514
      %v1516 = vrot.slane %v1509, %v1515
      %1517 = vrot.lane.b32.xlu0 %v1516, 28
      %v1518 = vpop.permute.xlu0 %1517
      %v1519 = vrot.slane %v1518, 4
      %v1520 = vsel %vm766, %v1518, %v1519
      %1522 = vst [vmem:[%s653 + $0x1c] sm:$0xc] %v1520
      %v1523 = vld [vmem:[#allocation4] sm:$0xf]
      %v1526 = vunpack.c.l.s4 1983009808
      %v1527 = vunpack.c.0.s8 %v1526
      %v1528 = vlaneseq
      %v1529 = vshrl.u32 %v1528, 7
      %v1530 = vsub.s32 %v1527, %v1529
      %v1531 = vrot.slane %v1523, %v1530
      %1532 = vrot.lane.b32.xlu0 %v1531, 26
      %v1533 = vpop.permute.xlu0 %1532
      %v1534 = vrot.slane %v1533, 4
      %v1535 = vsel %vm782, %v1533, %v1534
      %1537 = vst [vmem:[%s653 + $0x24] sm:$0x3] %v1535
      %1538 = vrot.lane.b32.xlu0 %v1365, 16
      %v1539 = vpop.permute.xlu0 %1538
      %1540 = vrot.lane.b32.xlu0 %v1366, 16
      %v1541 = vpop.permute.xlu0 %1540
      %v1542 = vrot.slane %v1539, 4
      %v1543 = vsel %vm791, %v1542, %v1539
      %v1544 = vsel %vm791, %v1542, %v1541
      %1547 = vst.msk [vmem:[#allocation2] sm:$0xff] %vm343, %v1543
      %1548 = vst.msk [vmem:[#allocation2 + $0x8] sm:$0xf] %vm308, %v1544
      %v1549 = vld [vmem:[#allocation2] sm:$0xff]
      %v1550 = vld [vmem:[#allocation2 + $0x8] sm:$0xf]
      %1553 = vrot.lane.b32.xlu0 %v1549, 112
      %v1554 = vpop.permute.xlu0 %1553
      %1555 = vrot.lane.b32.xlu0 %v1550, 112
      %v1556 = vpop.permute.xlu0 %1555
      %v1557 = vrot.slane %v1554, 4
      %v1558 = vrot.slane %v1556, 4
      %v1559 = vsel %vm521, %v1557, %v1558
      %v1560 = vsel %vm523, %v1554, %v1559
      %v1563 = vmax.f32 %v1549, %v1560
      %v1564 = vmax.f32 %v1550, %v1556
      %1565 = vrot.lane.b32.xlu0 %v1549, 96
      %v1566 = vpop.permute.xlu0 %1565
      %1567 = vrot.lane.b32.xlu0 %v1550, 96
      %v1568 = vpop.permute.xlu0 %1567
      %v1569 = vrot.slane %v1566, 4
      %v1570 = vrot.slane %v1568, 4
      %v1571 = vsel %vm521, %v1569, %v1570
      %v1572 = vsel %vm536, %v1566, %v1571
      %v1575 = vmax.f32 %v1563, %v1572
      %v1576 = vmax.f32 %v1564, %v1568
      %1577 = vrot.lane.b32.xlu0 %v1549, 80
      %v1578 = vpop.permute.xlu0 %1577
      %1579 = vrot.lane.b32.xlu0 %v1550, 80
      %v1580 = vpop.permute.xlu0 %1579
      %v1581 = vrot.slane %v1578, 4
      %v1582 = vrot.slane %v1580, 4
      %v1583 = vsel %vm521, %v1581, %v1582
      %v1584 = vsel %vm833, %v1578, %v1583
      %v1587 = vmax.f32 %v1575, %v1584
      %v1588 = vmax.f32 %v1576, %v1580
      %1589 = vrot.lane.b32.xlu0 %v1549, 64
      %v1590 = vpop.permute.xlu0 %1589
      %1591 = vrot.lane.b32.xlu0 %v1550, 64
      %v1592 = vpop.permute.xlu0 %1591
      %v1593 = vrot.slane %v1590, 4
      %v1594 = vrot.slane %v1592, 4
      %v1595 = vsel %vm521, %v1593, %v1594
      %v1596 = vsel %vm846, %v1590, %v1595
      %v1599 = vmax.f32 %v1587, %v1596
      %v1600 = vmax.f32 %v1588, %v1592
      %1603 = vrot.lane.b32.xlu0 %v1599, 115
      %v1604 = vpop.permute.xlu0 %1603
      %1605 = vrot.lane.b32.xlu0 %v1600, 115
      %v1606 = vpop.permute.xlu0 %1605
      %v1607 = vrot.slane %v1604, 4
      %v1608 = vrot.slane %v1606, 4
      %v1609 = vsel %vm521, %v1607, %v1608
      %v1610 = vsel %vm861, %v1604, %v1609
      %1613 = vst.msk [vmem:[#allocation3] sm:$0xff] %vm556, %v1610
      %1614 = vst.msk [vmem:[#allocation3 + $0x8] sm:$0xf] %vm558, %v1606
      %v1615 = vld [vmem:[#allocation3] sm:$0xff]
      %v1616 = vld [vmem:[#allocation3 + $0x8] sm:$0xf]
      %v1619 = vcombine.high %v1615, %v1615
      %1620 = vrot.lane.b32.xlu0 %v1615, 124
      %v1621 = vpop.permute.xlu0 %1620
      %1622 = vrot.lane.b32.xlu0 %v1619, 124
      %v1623 = vpop.permute.xlu0 %1622
      %1624 = vrot.lane.b32.xlu0 %v1616, 124
      %v1625 = vpop.permute.xlu0 %1624
      %v1626 = vsel %vm571, %v1621, %v1623
      %v1627 = vsel %vm571, %v1623, %v1625
      %v1630 = vsel %vm270, %v1626, -inf
      %v1631 = vsel %vm271, %v1627, -inf
      %1632 = vrot.lane.b32.xlu0 %v1615, 126
      %v1633 = vpop.permute.xlu0 %1632
      %1634 = vrot.lane.b32.xlu0 %v1619, 126
      %v1635 = vpop.permute.xlu0 %1634
      %1636 = vrot.lane.b32.xlu0 %v1616, 126
      %v1637 = vpop.permute.xlu0 %1636
      %v1638 = vsel %vm584, %v1633, %v1635
      %v1639 = vsel %vm584, %v1635, %v1637
      %v1642 = vsel %vm294, %v1638, -inf
      %v1643 = vsel %vm295, %v1639, -inf
      %v1644 = vmax.f32 %v1630, %v1642
      %v1645 = vmax.f32 %v1631, %v1643
      %v1648 = vcombine.low %v1644, %v1645
      %1649 = vrot.lane.b32.xlu0 %v1648, 16
      %v1650 = vpop.permute.xlu0 %1649
      %v1651 = vrot.slane %v1650, 4
      %v1652 = vsel %vm791, %v1651, %v1650
      %v1655 = vmax.f32 %v1599, %v1652
      %v1656 = vmax.f32 %v1600, %v1651
      %1657 = vrot.lane.b32.xlu0 %v1615, 123
      %v1658 = vpop.permute.xlu0 %1657
      %1659 = vrot.lane.b32.xlu0 %v1619, 123
      %v1660 = vpop.permute.xlu0 %1659
      %1661 = vrot.lane.b32.xlu0 %v1616, 123
      %v1662 = vpop.permute.xlu0 %1661
      %v1663 = vsel %vm915, %v1658, %v1660
      %v1664 = vsel %vm915, %v1660, %v1662
      %v1667 = vsel %vm282, %v1663, -inf
      %v1668 = vsel %vm283, %v1664, -inf
      %1669 = vrot.lane.b32.xlu0 %v1615, 127
      %v1670 = vpop.permute.xlu0 %1669
      %1671 = vrot.lane.b32.xlu0 %v1619, 127
      %v1672 = vpop.permute.xlu0 %1671
      %1673 = vrot.lane.b32.xlu0 %v1616, 127
      %v1674 = vpop.permute.xlu0 %1673
      %v1675 = vsel %vm928, %v1670, %v1672
      %v1676 = vsel %vm928, %v1672, %v1674
      %v1679 = vsel %vm306, %v1675, -inf
      %v1680 = vsel %vm307, %v1676, -inf
      %v1681 = vmax.f32 %v1667, %v1679
      %v1682 = vmax.f32 %v1668, %v1680
      %v1685 = vcombine.low %v1681, %v1682
      %1686 = vrot.lane.b32.xlu0 %v1685, 16
      %v1687 = vpop.permute.xlu0 %1686
      %v1688 = vrot.slane %v1687, 4
      %v1689 = vsel %vm791, %v1688, %v1687
      %v1692 = vmax.f32 %v1655, %v1689
      %v1693 = vmax.f32 %v1656, %v1688
      %v1695 = vcombine.high %v1692, %v1692
      %v1697 = vpack.c.bf16 %v1692, %v1692
      %v1698 = vpack.c.bf16 %v1695, %v1695
      %v1699 = vpack.c.bf16 %v1693, %v1693
      %v1703 = vcombine.low %v1697, %v1698
      %v1705 = vunpack.c.l.s4 1983009808
      %v1706 = vunpack.c.0.s8 %v1705
      %v1707 = vlaneseq
      %v1708 = vshrl.u32 %v1707, 7
      %v1709 = vsub.s32 %v1706, %v1708
      %v1710 = vrot.slane %v1703, %v1709
      %v1712 = vunpack.c.l.s4 1983009808
      %v1713 = vunpack.c.0.s8 %v1712
      %v1714 = vlaneseq
      %v1715 = vshrl.u32 %v1714, 7
      %v1716 = vsub.s32 %v1713, %v1715
      %v1717 = vrot.slane %v1699, %v1716
      %v1718 = vcombine.low %v1710, %v1717
      %1719 = vrot.lane.b32.xlu0 %v1718, 112
      %v1720 = vpop.permute.xlu0 %1719
      %v1721 = vrot.slane %v1720, 2
      %v1722 = vsel %vm976, %v1720, %v1721
      %1724 = vst [vmem:[#allocation4] sm:$0xf] %v1722
      %v1725 = vld [vmem:[#allocation4] sm:$0x3]
      %1726 = vst [vmem:[%s981 + $0x4] sm:$0x3] %v1725
      %v1727 = vld [vmem:[#allocation4] sm:$0xf]
      %v1729 = vcombine.low %v1727, %v1727
      %v1731 = vunpack.c.l.s4 1983009808
      %v1732 = vunpack.c.0.s8 %v1731
      %v1733 = vlaneseq
      %v1734 = vshrl.u32 %v1733, 7
      %v1735 = vsub.s32 %v1732, %v1734
      %v1736 = vrot.slane %v1729, %v1735
      %1737 = vrot.lane.b32.xlu0 %v1736, 124
      %v1738 = vpop.permute.xlu0 %1737
      %v1739 = vrot.slane %v1738, 4
      %v1740 = vsel %vm996, %v1738, %v1739
      %1742 = vst [vmem:[%s981 + $0x4] sm:$0xc] %v1740
      %v1743 = vld [vmem:[#allocation4] sm:$0xf]
      %v1746 = vunpack.c.l.s4 1983009808
      %v1747 = vunpack.c.0.s8 %v1746
      %v1748 = vlaneseq
      %v1749 = vshrl.u32 %v1748, 7
      %v1750 = vsub.s32 %v1747, %v1749
      %v1751 = vrot.slane %v1743, %v1750
      %1752 = vrot.lane.b32.xlu0 %v1751, 120
      %v1753 = vpop.permute.xlu0 %1752
      %v1754 = vrot.slane %v1753, 4
      %v1755 = vsel %vm1012, %v1753, %v1754
      %1757 = vst [vmem:[%s981 + $0xc] sm:$0x3] %v1755
      %v1758 = vld [vmem:[#allocation4] sm:$0xf]
      %v1760 = vcombine.low %v1758, %v1758
      %v1762 = vunpack.c.l.s4 1983009808
      %v1763 = vunpack.c.0.s8 %v1762
      %v1764 = vlaneseq
      %v1765 = vshrl.u32 %v1764, 7
      %v1766 = vsub.s32 %v1763, %v1765
      %v1767 = vrot.slane %v1760, %v1766
      %1768 = vrot.lane.b32.xlu0 %v1767, 64
      %v1769 = vpop.permute.xlu0 %1768
      %v1770 = vrot.slane %v1769, 4
      %v1771 = vsel %vm1029, %v1769, %v1770
      %1773 = vst [vmem:[%s981 + $0xc] sm:$0xc] %v1771
      %v1774 = vld [vmem:[#allocation4] sm:$0xf]
      %v1777 = vunpack.c.l.s4 1983009808
      %v1778 = vunpack.c.0.s8 %v1777
      %v1779 = vlaneseq
      %v1780 = vshrl.u32 %v1779, 7
      %v1781 = vsub.s32 %v1778, %v1780
      %v1782 = vrot.slane %v1774, %v1781
      %1783 = vrot.lane.b32.xlu0 %v1782, 60
      %v1784 = vpop.permute.xlu0 %1783
      %v1785 = vrot.slane %v1784, 4
      %v1786 = vsel %vm328, %v1784, %v1785
      %1788 = vst [vmem:[%s981 + $0x14] sm:$0x3] %v1786
      %v1789 = vld [vmem:[#allocation4] sm:$0xf]
      %v1791 = vcombine.low %v1789, %v1789
      %v1793 = vunpack.c.l.s4 1983009808
      %v1794 = vunpack.c.0.s8 %v1793
      %v1795 = vlaneseq
      %v1796 = vshrl.u32 %v1795, 7
      %v1797 = vsub.s32 %v1794, %v1796
      %v1798 = vrot.slane %v1791, %v1797
      %1799 = vrot.lane.b32.xlu0 %v1798, 56
      %v1800 = vpop.permute.xlu0 %1799
      %v1801 = vrot.slane %v1800, 4
      %v1802 = vsel %vm1061, %v1800, %v1801
      %1804 = vst [vmem:[%s981 + $0x14] sm:$0xc] %v1802
      %v1805 = vld [vmem:[#allocation4 + $0x2] sm:$0x3]
      %1806 = vst [vmem:[%s981 + $0x1c] sm:$0x3] %v1805
      %v1807 = vld [vmem:[#allocation4 + $0x2] sm:$0xf]
      %v1809 = vcombine.low %v1807, %v1807
      %v1811 = vunpack.c.l.s4 1983009808
      %v1812 = vunpack.c.0.s8 %v1811
      %v1813 = vlaneseq
      %v1814 = vshrl.u32 %v1813, 7
      %v1815 = vsub.s32 %v1812, %v1814
      %v1816 = vrot.slane %v1809, %v1815
      %1817 = vrot.lane.b32.xlu0 %v1816, 124
      %v1818 = vpop.permute.xlu0 %1817
      %v1819 = vrot.slane %v1818, 4
      %v1820 = vsel %vm996, %v1818, %v1819
      %1822 = vst [vmem:[%s981 + $0x1c] sm:$0xc] %v1820
      %v1823 = vld [vmem:[#allocation4 + $0x2] sm:$0xf]
      %v1826 = vunpack.c.l.s4 1983009808
      %v1827 = vunpack.c.0.s8 %v1826
      %v1828 = vlaneseq
      %v1829 = vshrl.u32 %v1828, 7
      %v1830 = vsub.s32 %v1827, %v1829
      %v1831 = vrot.slane %v1823, %v1830
      %1832 = vrot.lane.b32.xlu0 %v1831, 120
      %v1833 = vpop.permute.xlu0 %1832
      %v1834 = vrot.slane %v1833, 4
      %v1835 = vsel %vm1012, %v1833, %v1834
      %1837 = vst [vmem:[%s981 + $0x24] sm:$0x3] %v1835
      %v1838 = vld [vmem:[%s2] sm:$0xf]
      %v1839 = vld [vmem:[#allocation5] sm:$0xff]
      %v1840 = vld [vmem:[#allocation5 + $0x8] sm:$0xff]
      %v1841 = vld [vmem:[#allocation5 + $0x10] sm:$0xff]
      %v1842 = vld [vmem:[#allocation5 + $0x18] sm:$0xff]
      %v1843 = vld [vmem:[#allocation5 + $0x20] sm:$0x33]
      %v1844 = vld [vmem:[%s3] sm:$0xff]
      %1846 = vset.pattern.permute.xlu0 0
      %1847 = vperm.xlu0 %1846, %v1844
      %v1848 = vpop.permute.xlu0 %1847
      %v1855 = vunpack.c.l.b16 %v1839
      %v1856 = vunpack.c.h.b16 %v1839
      %v1857 = vunpack.c.l.b16 %v1840
      %v1858 = vunpack.c.h.b16 %v1840
      %v1859 = vunpack.c.l.b16 %v1841
      %v1860 = vunpack.c.h.b16 %v1841
      %v1861 = vunpack.c.l.b16 %v1842
      %v1862 = vunpack.c.h.b16 %v1842
      %v1863 = vunpack.c.l.b16 %v1843
      %v1864 = vunpack.c.h.b16 %v1843
      %v1865 = vpack.c.b16 %v1857, %v1855
      %v1866 = vpack.c.b16 %v1858, %v1856
      %v1867 = vpack.c.b16 %v1861, %v1859
      %v1868 = vpack.c.b16 %v1862, %v1860
      %v1869 = vpack.c.b16 %v1863, %v1863
      %v1870 = vpack.c.b16 %v1864, %v1864
      %vm1875 = vcmask 293888
      %v1877 = vsel %vm1875, %v1838, 0
      %vm1879 = vcmask 1041408
      %v1881 = vsel %vm1879, %v1869, 0
      %v1884 = vsel %vm1879, %v1870, 0
      %1886 = vmatprep.subr.bf16.mxu0 %v1866
      %1887 = vmatpush1.bf16.msra.mxu0 %v1865
      %1888 = vmatprep.subr.bf16.mxu0 %v1868
      %1889 = vmatpush1.bf16.msra.mxu0 %v1867
      %1890 = vmatprep.subr.bf16.mxu0 %v1884
      %1891 = vmatpush1.bf16.msra.mxu0 %v1881
      %1892 = vmatprep.subr.bf16.mxu0 0
      %1893 = vmatpush1.bf16.msra.mxu0 0
      %1894 = vmatprep.subr.bf16.mxu0 0
      %1895 = vmatpush1.bf16.msra.mxu0 0
      %1896 = vmatprep.subr.bf16.mxu0 0
      %1897 = vmatpush1.bf16.msra.mxu0 0
      %1898 = vmatprep.subr.bf16.mxu0 0
      %1899 = vmatpush1.bf16.msra.mxu0 0
      %1900 = vmatprep.subr.bf16.mxu0 0
      %1901 = vmatpush1.bf16.msra.mxu0 0
      %1902 = vmatprep.subr.bf16.mxu0 0
      %1903 = vmatpush1.bf16.msra.mxu0 0
      %1904 = vmatprep.subr.bf16.mxu0 0
      %1905 = vmatpush1.bf16.msra.mxu0 0
      %1906 = vmatprep.subr.bf16.mxu0 0
      %1907 = vmatpush1.bf16.msra.mxu0 0
      %1908 = vmatprep.subr.bf16.mxu0 0
      %1909 = vmatpush1.bf16.msra.mxu0 0
      %1910 = vmatprep.subr.bf16.mxu0 0
      %1911 = vmatpush1.bf16.msra.mxu0 0
      %1912 = vmatprep.subr.bf16.mxu0 0
      %1913 = vmatpush1.bf16.msra.mxu0 0
      %1914 = vmatprep.subr.bf16.mxu0 0
      %1915 = vmatpush1.bf16.msra.mxu0 0
      %1916 = vmatprep.subr.bf16.mxu0 0
      %1917 = vmatpush1.bf16.msra.mxu0 0
      %1918 = vmatprep.mubr.bf16.mxu0 0
      %1919 = vmatmul.mubr.bf16.gmra.mrb[0].mxu0 %v1877
      %v1920 = vpop.f32.mrb[0].mxu0
      %v1921 = vadd.f32 %v1848, %v1920
      %v1922 = vpop.f32.mrb[0].mxu0
      %v1923 = vadd.f32 %v1848, %v1922
      %v1924 = vpop.f32.mrb[0].mxu0
      %v1925 = vpop.f32.mrb[0].mxu0
      %1926 = vdwg.mxu0
      %v1927 = vmax.f32 %v1921, 0.0
      %v1928 = vmax.f32 %v1923, 0.0
      %v1929 = vpack.c.bf16 %v1927, %v1927
      %v1930 = vpack.c.bf16 %v1928, %v1928
      %v1933 = vunpack.c.l.b16 %v1929
      %v1934 = vunpack.c.l.b16 %v1930
      %v1935 = vpack.c.b16 %v1934, %v1933
      %1937 = vst [vmem:[#allocation6] sm:$0xff] %v1935
      %s1938 = scalar_lea.vmem %s2, 4
      %v1939 = vld [vmem:[%s1938] sm:$0xf]
      %v1940 = vld [vmem:[%s653] sm:$0xff]
      %v1941 = vld [vmem:[%s653 + $0x8] sm:$0xff]
      %v1942 = vld [vmem:[%s653 + $0x10] sm:$0xff]
      %v1943 = vld [vmem:[%s653 + $0x18] sm:$0xff]
      %v1944 = vld [vmem:[%s653 + $0x20] sm:$0x33]
      %s1945 = scalar_lea.vmem %s3, 8
      %v1946 = vld [vmem:[%s1945] sm:$0xff]
      %1948 = vset.pattern.permute.xlu0 0
      %1949 = vperm.xlu0 %1948, %v1946
      %v1950 = vpop.permute.xlu0 %1949
      %v1957 = vunpack.c.l.b16 %v1940
      %v1958 = vunpack.c.h.b16 %v1940
      %v1959 = vunpack.c.l.b16 %v1941
      %v1960 = vunpack.c.h.b16 %v1941
      %v1961 = vunpack.c.l.b16 %v1942
      %v1962 = vunpack.c.h.b16 %v1942
      %v1963 = vunpack.c.l.b16 %v1943
      %v1964 = vunpack.c.h.b16 %v1943
      %v1965 = vunpack.c.l.b16 %v1944
      %v1966 = vunpack.c.h.b16 %v1944
      %v1967 = vpack.c.b16 %v1959, %v1957
      %v1968 = vpack.c.b16 %v1960, %v1958
      %v1969 = vpack.c.b16 %v1963, %v1961
      %v1970 = vpack.c.b16 %v1964, %v1962
      %v1971 = vpack.c.b16 %v1965, %v1965
      %v1972 = vpack.c.b16 %v1966, %v1966
      %v1978 = vsel %vm1875, %v1939, 0
      %v1981 = vsel %vm1879, %v1971, 0
      %v1984 = vsel %vm1879, %v1972, 0
      %1986 = vmatprep.subr.bf16.mxu0 %v1968
      %1987 = vmatpush1.bf16.msra.mxu0 %v1967
      %1988 = vmatprep.subr.bf16.mxu0 %v1970
      %1989 = vmatpush1.bf16.msra.mxu0 %v1969
      %1990 = vmatprep.subr.bf16.mxu0 %v1984
      %1991 = vmatpush1.bf16.msra.mxu0 %v1981
      %1992 = vmatprep.subr.bf16.mxu0 0
      %1993 = vmatpush1.bf16.msra.mxu0 0
      %1994 = vmatprep.subr.bf16.mxu0 0
      %1995 = vmatpush1.bf16.msra.mxu0 0
      %1996 = vmatprep.subr.bf16.mxu0 0
      %1997 = vmatpush1.bf16.msra.mxu0 0
      %1998 = vmatprep.subr.bf16.mxu0 0
      %1999 = vmatpush1.bf16.msra.mxu0 0
      %2000 = vmatprep.subr.bf16.mxu0 0
      %2001 = vmatpush1.bf16.msra.mxu0 0
      %2002 = vmatprep.subr.bf16.mxu0 0
      %2003 = vmatpush1.bf16.msra.mxu0 0
      %2004 = vmatprep.subr.bf16.mxu0 0
      %2005 = vmatpush1.bf16.msra.mxu0 0
      %2006 = vmatprep.subr.bf16.mxu0 0
      %2007 = vmatpush1.bf16.msra.mxu0 0
      %2008 = vmatprep.subr.bf16.mxu0 0
      %2009 = vmatpush1.bf16.msra.mxu0 0
      %2010 = vmatprep.subr.bf16.mxu0 0
      %2011 = vmatpush1.bf16.msra.mxu0 0
      %2012 = vmatprep.subr.bf16.mxu0 0
      %2013 = vmatpush1.bf16.msra.mxu0 0
      %2014 = vmatprep.subr.bf16.mxu0 0
      %2015 = vmatpush1.bf16.msra.mxu0 0
      %2016 = vmatprep.subr.bf16.mxu0 0
      %2017 = vmatpush1.bf16.msra.mxu0 0
      %2018 = vmatprep.mubr.bf16.mxu0 0
      %2019 = vmatmul.mubr.bf16.gmra.mrb[0].mxu0 %v1978
      %v2020 = vpop.f32.mrb[0].mxu0
      %v2021 = vadd.f32 %v1950, %v2020
      %v2022 = vpop.f32.mrb[0].mxu0
      %v2023 = vadd.f32 %v1950, %v2022
      %v2024 = vpop.f32.mrb[0].mxu0
      %v2025 = vpop.f32.mrb[0].mxu0
      %2026 = vdwg.mxu0
      %v2027 = vmax.f32 %v2021, 0.0
      %v2028 = vmax.f32 %v2023, 0.0
      %v2029 = vpack.c.bf16 %v2027, %v2027
      %v2030 = vpack.c.bf16 %v2028, %v2028
      %v2033 = vunpack.c.l.b16 %v2029
      %v2034 = vunpack.c.l.b16 %v2030
      %v2035 = vpack.c.b16 %v2034, %v2033
      %2037 = vst [vmem:[#allocation6 + $0x8] sm:$0xff] %v2035
      %s2038 = scalar_lea.vmem %s2, 8
      %v2039 = vld [vmem:[%s2038] sm:$0xf]
      %v2040 = vld [vmem:[%s981] sm:$0xff]
      %v2041 = vld [vmem:[%s981 + $0x8] sm:$0xff]
      %v2042 = vld [vmem:[%s981 + $0x10] sm:$0xff]
      %v2043 = vld [vmem:[%s981 + $0x18] sm:$0xff]
      %v2044 = vld [vmem:[%s981 + $0x20] sm:$0x33]
      %s2045 = scalar_lea.vmem %s3, 16
      %v2046 = vld [vmem:[%s2045] sm:$0xff]
      %2048 = vset.pattern.permute.xlu0 0
      %2049 = vperm.xlu0 %2048, %v2046
      %v2050 = vpop.permute.xlu0 %2049
      %v2057 = vunpack.c.l.b16 %v2040
      %v2058 = vunpack.c.h.b16 %v2040
      %v2059 = vunpack.c.l.b16 %v2041
      %v2060 = vunpack.c.h.b16 %v2041
      %v2061 = vunpack.c.l.b16 %v2042
      %v2062 = vunpack.c.h.b16 %v2042
      %v2063 = vunpack.c.l.b16 %v2043
      %v2064 = vunpack.c.h.b16 %v2043
      %v2065 = vunpack.c.l.b16 %v2044
      %v2066 = vunpack.c.h.b16 %v2044
      %v2067 = vpack.c.b16 %v2059, %v2057
      %v2068 = vpack.c.b16 %v2060, %v2058
      %v2069 = vpack.c.b16 %v2063, %v2061
      %v2070 = vpack.c.b16 %v2064, %v2062
      %v2071 = vpack.c.b16 %v2065, %v2065
      %v2072 = vpack.c.b16 %v2066, %v2066
      %v2078 = vsel %vm1875, %v2039, 0
      %v2081 = vsel %vm1879, %v2071, 0
      %v2084 = vsel %vm1879, %v2072, 0
      %2086 = vmatprep.subr.bf16.mxu0 %v2068
      %2087 = vmatpush1.bf16.msra.mxu0 %v2067
      %2088 = vmatprep.subr.bf16.mxu0 %v2070
      %2089 = vmatpush1.bf16.msra.mxu0 %v2069
      %2090 = vmatprep.subr.bf16.mxu0 %v2084
      %2091 = vmatpush1.bf16.msra.mxu0 %v2081
      %2092 = vmatprep.subr.bf16.mxu0 0
      %2093 = vmatpush1.bf16.msra.mxu0 0
      %2094 = vmatprep.subr.bf16.mxu0 0
      %2095 = vmatpush1.bf16.msra.mxu0 0
      %2096 = vmatprep.subr.bf16.mxu0 0
      %2097 = vmatpush1.bf16.msra.mxu0 0
      %2098 = vmatprep.subr.bf16.mxu0 0
      %2099 = vmatpush1.bf16.msra.mxu0 0
      %2100 = vmatprep.subr.bf16.mxu0 0
      %2101 = vmatpush1.bf16.msra.mxu0 0
      %2102 = vmatprep.subr.bf16.mxu0 0
      %2103 = vmatpush1.bf16.msra.mxu0 0
      %2104 = vmatprep.subr.bf16.mxu0 0
      %2105 = vmatpush1.bf16.msra.mxu0 0
      %2106 = vmatprep.subr.bf16.mxu0 0
      %2107 = vmatpush1.bf16.msra.mxu0 0
      %2108 = vmatprep.subr.bf16.mxu0 0
      %2109 = vmatpush1.bf16.msra.mxu0 0
      %2110 = vmatprep.subr.bf16.mxu0 0
      %2111 = vmatpush1.bf16.msra.mxu0 0
      %2112 = vmatprep.subr.bf16.mxu0 0
      %2113 = vmatpush1.bf16.msra.mxu0 0
      %2114 = vmatprep.subr.bf16.mxu0 0
      %2115 = vmatpush1.bf16.msra.mxu0 0
      %2116 = vmatprep.subr.bf16.mxu0 0
      %2117 = vmatpush1.bf16.msra.mxu0 0
      %2118 = vmatprep.mubr.bf16.mxu0 0
      %2119 = vmatmul.mubr.bf16.gmra.mrb[0].mxu0 %v2078
      %v2120 = vpop.f32.mrb[0].mxu0
      %v2121 = vadd.f32 %v2050, %v2120
      %v2122 = vpop.f32.mrb[0].mxu0
      %v2123 = vadd.f32 %v2050, %v2122
      %v2124 = vpop.f32.mrb[0].mxu0
      %v2125 = vpop.f32.mrb[0].mxu0
      %2126 = vdwg.mxu0
      %v2127 = vmax.f32 %v2121, 0.0
      %v2128 = vmax.f32 %v2123, 0.0
      %v2129 = vpack.c.bf16 %v2127, %v2127
      %v2130 = vpack.c.bf16 %v2128, %v2128
      %v2133 = vunpack.c.l.b16 %v2129
      %v2134 = vunpack.c.l.b16 %v2130
      %v2135 = vpack.c.b16 %v2134, %v2133
      %2137 = vst [vmem:[#allocation6 + $0x10] sm:$0xff] %v2135
      %v2138 = vld [vmem:[%s4] sm:$0xf]
      %v2139 = vld [vmem:[#allocation6] sm:$0xff]
      %v2140 = vld [vmem:[#allocation6 + $0x8] sm:$0xff]
      %v2141 = vld [vmem:[#allocation6 + $0x10] sm:$0xff]
      %v2142 = vld [vmem:[#allocation6 + $0x18] sm:$0x33]
      %v2143 = vld [vmem:[%s5] sm:$0xff]
      %2145 = vset.pattern.permute.xlu0 0
      %2146 = vperm.xlu0 %2145, %v2143
      %v2147 = vpop.permute.xlu0 %2146
      %v2153 = vunpack.c.l.b16 %v2139
      %v2154 = vunpack.c.h.b16 %v2139
      %v2155 = vunpack.c.l.b16 %v2140
      %v2156 = vunpack.c.h.b16 %v2140
      %v2157 = vunpack.c.l.b16 %v2141
      %v2158 = vunpack.c.h.b16 %v2141
      %v2159 = vunpack.c.l.b16 %v2142
      %v2160 = vunpack.c.h.b16 %v2142
      %v2161 = vpack.c.b16 %v2155, %v2153
      %v2162 = vpack.c.b16 %v2156, %v2154
      %v2163 = vpack.c.b16 %v2159, %v2157
      %v2164 = vpack.c.b16 %v2160, %v2158
      %vm2167 = vcmask 228352
      %v2169 = vsel %vm2167, %v2138, 0
      %vm2171 = vcmask 1045504
      %v2173 = vsel %vm2171, %v2163, 0
      %v2176 = vsel %vm2171, %v2164, 0
      %2178 = vmatprep.subr.bf16.mxu0 %v2162
      %2179 = vmatpush1.bf16.msra.mxu0 %v2161
      %2180 = vmatprep.subr.bf16.mxu0 %v2176
      %2181 = vmatpush1.bf16.msra.mxu0 %v2173
      %2182 = vmatprep.subr.bf16.mxu0 0
      %2183 = vmatpush1.bf16.msra.mxu0 0
      %2184 = vmatprep.subr.bf16.mxu0 0
      %2185 = vmatpush1.bf16.msra.mxu0 0
      %2186 = vmatprep.subr.bf16.mxu0 0
      %2187 = vmatpush1.bf16.msra.mxu0 0
      %2188 = vmatprep.subr.bf16.mxu0 0
      %2189 = vmatpush1.bf16.msra.mxu0 0
      %2190 = vmatprep.subr.bf16.mxu0 0
      %2191 = vmatpush1.bf16.msra.mxu0 0
      %2192 = vmatprep.subr.bf16.mxu0 0
      %2193 = vmatpush1.bf16.msra.mxu0 0
      %2194 = vmatprep.subr.bf16.mxu0 0
      %2195 = vmatpush1.bf16.msra.mxu0 0
      %2196 = vmatprep.subr.bf16.mxu0 0
      %2197 = vmatpush1.bf16.msra.mxu0 0
      %2198 = vmatprep.subr.bf16.mxu0 0
      %2199 = vmatpush1.bf16.msra.mxu0 0
      %2200 = vmatprep.subr.bf16.mxu0 0
      %2201 = vmatpush1.bf16.msra.mxu0 0
      %2202 = vmatprep.subr.bf16.mxu0 0
      %2203 = vmatpush1.bf16.msra.mxu0 0
      %2204 = vmatprep.subr.bf16.mxu0 0
      %2205 = vmatpush1.bf16.msra.mxu0 0
      %2206 = vmatprep.subr.bf16.mxu0 0
      %2207 = vmatpush1.bf16.msra.mxu0 0
      %2208 = vmatprep.subr.bf16.mxu0 0
      %2209 = vmatpush1.bf16.msra.mxu0 0
      %2210 = vmatprep.mubr.bf16.mxu0 0
      %2211 = vmatmul.mubr.bf16.gmra.mrb[0].mxu0 %v2169
      %v2212 = vpop.f32.mrb[0].mxu0
      %v2213 = vadd.f32 %v2147, %v2212
      %v2214 = vpop.f32.mrb[0].mxu0
      %v2215 = vadd.f32 %v2147, %v2214
      %v2216 = vpop.f32.mrb[0].mxu0
      %v2217 = vpop.f32.mrb[0].mxu0
      %2218 = vdwg.mxu0
      %v2219 = vmax.f32 %v2213, 0.0
      %2220 = vst [vmem:[%s256] sm:$0xff] %v2219
      %v2221 = vmax.f32 %v2215, 0.0
      %s2222 = scalar_lea.vmem %s256, 8
      %2223 = vst [vmem:[%s2222] sm:$0xff] %v2221
      %s2224 = smul.u32 2, %s17
      %p2225 = scmp.lt.s32.totalorder %s2224, 3
      %s2226 = scalar_select %p2225, %s2224, 3
      %s2227 = smul.addr %s2226, 8
      %s2228 = scalar_lea.vmem %s6, %s2227
      // Predicated region
      $region45: #{resid_multiscale_block.1} parent=43 // pred_check
        %p2229 = pneg %p166
      $region46: #{resid_multiscale_block.1} parent=43 // pred_check_branch
        %2231 = sbr.rel (%p2229) target = $region48
      $region47: #{resid_multiscale_block.1} parent=43 // pred_region
        %s2232 = smul.u32 2, %s17
      $region48: #{resid_multiscale_block.1} parent=43 // pred_fallthru
        _
    $region44: #{resid_multiscale_block.1} parent=5 // pred_fallthru
      _
    %p2233 = scmp.le.s32.totalorder 2, %s12
    // Predicated region
    $region49: #{resid_multiscale_block.1} parent=5 // pred_check
      %p2234 = pneg %p2233
    $region50: #{resid_multiscale_block.1} parent=5 // pred_check_branch
      %2236 = sbr.rel (%p2234) target = $region52
    $region51: #{resid_multiscale_block.1} parent=5 // pred_region
      %s2237 = ssub.s32 %s12, 2
      // Predicated region
      $region53: #{resid_multiscale_block.1} parent=51 // pred_check
        %p2238 = pneg %p172
      $region54: #{resid_multiscale_block.1} parent=51 // pred_check_branch
        %2240 = sbr.rel (%p2238) target = $region56
      $region55: #{resid_multiscale_block.1} parent=51 // pred_region
        %s2241 = smul.u32 2, %s18
        %p2242 = scmp.lt.s32.totalorder %s2241, 3
        %s2243 = scalar_select %p2242, %s2241, 3
        %s2244 = smul.addr %s2243, 8
        %s2245 = scalar_lea.vmem %s6, %s2244
      $region56: #{resid_multiscale_block.1} parent=51 // pred_fallthru
        _
    $region52: #{resid_multiscale_block.1} parent=5 // pred_fallthru
      _
  $region6: #{resid_multiscale_block.1} parent=0 // loop_footer
    %s16 = sadd.s32 1, %s12
  $region7: #{resid_multiscale_block.1} parent=0 // loop_footer_branch
    %11 = sbr.rel target = $region3
  $region8: #{resid_multiscale_block.1} parent=0 // loop_exit
    _

</llo_original>
